<compile_context>
chip_gen: v7x
topology: tpu7x:2x2x1
jax: 0.10.0
libtpu: 0.0.40
codegen_flags: <defaults>
</compile_context>

<pallas_src>
import numpy as np
import jax
import jax.numpy as jnp
from jax import lax
from jax.experimental import pallas as pl
from jax.experimental.pallas import tpu as pltpu

H = W = 16           # slice spatial size
D = 8                # number of slices / frames
HW = H * W           # 256  (lane-dense row per frame)
TOK = W              # row-token width (one token = one image row)
NTOK = D * H         # 128  tokens across all frames -> full-M MXU matmul
E = 128              # hidden / prompt embedding dim
DECAY = 0.9          # memory decay for video propagation
INV_SQRT_E = 1.0 / float(np.sqrt(E))


# ------------------------------ fused Pallas kernel ---------------------------------

def _sam2_fused_kernel(prompted_ref,   # SMEM (D,) int32  (scalar prefetch)
                       tok_ref,        # (D*H, W)  = (128, 16)  f32   row tokens
                       vol_ref,        # (D, H*W)  = (8, 256)   f32   lane-dense volume
                       q_ref,          # (D, E)    = (8, 128)   f32   prompt embeddings
                       wenc_ref,       # (W, E)    = (16, 128)  bf16
                       wdec_ref,       # (E, H*W)  = (128, 256) bf16
                       out_ref):       # (D, H*W)  = (8, 256)   f32   0/1 mask
    # ---- in-kernel volume normalization ----
    vol = vol_ref[...]
    mean = jnp.mean(vol)
    var = jnp.mean((vol - mean) * (vol - mean))
    inv_std = lax.rsqrt(var + 1e-6)
    imgn = (vol - mean) * inv_std                                   # (8, 256)
    tokn = (tok_ref[...] - mean) * inv_std                          # (128, 16)

    # ---- encoder: one M=128 MXU matmul (bf16 operands, f32 accumulation) ----
    feats = jnp.maximum(
        jnp.dot(tokn.astype(jnp.bfloat16), wenc_ref[...],
                preferred_element_type=jnp.float32), 0.0)           # (128, 128)
    feats3 = feats.reshape(D, H, E)                                  # (8, 16, 128)

    # ---- per-frame token self-attention (batched einsum, single grid step) ----
    fb = feats3.astype(jnp.bfloat16)
    scores = jnp.einsum('dne,dme->dnm', fb, fb,
                        preferred_element_type=jnp.float32) * INV_SQRT_E   # (8,16,16)
    smax = jnp.max(scores, axis=-1, keepdims=True)
    sexp = jnp.exp(scores - smax)
    attn = sexp * pl.reciprocal(jnp.sum(sexp, axis=-1, keepdims=True), approx=True)
    mixed = feats3 + jnp.einsum('dnm,dme->dne', attn.astype(jnp.bfloat16), fb,
                                preferred_element_type=jnp.float32)  # (8,16,128)

    # ---- prompt-conditioned token gating: VPU multiply + lane reduce (no MXU) ----
    g = jnp.sum(mixed * q_ref[...][:, None, :], axis=-1,
                keepdims=True) * INV_SQRT_E                          # (8, 16, 1)
    gmax = jnp.max(g, axis=1, keepdims=True)                          # (8, 1, 1)
    gexp = jnp.exp(g - gmax)                                          # (8, 16, 1)
    wtok = gexp * pl.reciprocal(jnp.sum(gexp, axis=1, keepdims=True), approx=True)
    pooled = jnp.sum(wtok * mixed, axis=1)                            # (8, 128) memory feats
    frame_gate = jnp.tanh(jnp.mean(g, axis=1))                        # (8, 1)

    # ---- mask decoder: lane-dense (8, 256) logits in one matmul + image skip ----
    dec = jnp.dot(pooled.astype(jnp.bfloat16), wdec_ref[...],
                  preferred_element_type=jnp.float32)                 # (8, 256)
    logits = frame_gate * (dec + imgn)                                # (8, 256)

    one = jnp.float32(1.0)
    zero = jnp.float32(0.0)

    # ---- forward memory propagation + click masks (unrolled, register carries) ----
    fwd_click = [None] * D
    carry_vec = jnp.zeros((1, E), jnp.float32)
    carry_s = jnp.float32(0.0)
    for d in range(D):
        p = prompted_ref[d].astype(jnp.float32)
        mem_d = pooled[d:d + 1, :]
        log_d = logits[d:d + 1, :]
        carry_s = jnp.maximum(carry_s * DECAY, p)
        carry_vec = carry_vec * DECAY + p * mem_d
        aff = jnp.sum(carry_vec * mem_d) * (1.0 / E)
        prop = log_d * carry_s + aff * carry_s
        fwd = jnp.where(jnp.logical_and(prop > 0.0, carry_s > 0.0), one, zero)
        click = jnp.where(log_d > 0.0, one, zero) * p
        fwd_click[d] = jnp.maximum(click, fwd)

    # ---- backward propagation (reversed in-kernel, no host flips) + OR-fuse + store ----
    carry_vec = jnp.zeros((1, E), jnp.float32)
    carry_s = jnp.float32(0.0)
    for i in range(D):
        d = D - 1 - i
        p = prompted_ref[d].astype(jnp.float32)
        mem_d = pooled[d:d + 1, :]
        log_d = logits[d:d + 1, :]
        carry_s = jnp.maximum(carry_s * DECAY, p)
        carry_vec = carry_vec * DECAY + p * mem_d
        aff = jnp.sum(carry_vec * mem_d) * (1.0 / E)
        prop = log_d * carry_s + aff * carry_s
        bwd = jnp.where(jnp.logical_and(prop > 0.0, carry_s > 0.0), one, zero)
        out_ref[pl.ds(d, 1), :] = jnp.maximum(fwd_click[d], bwd)


# ------------------------------ pallas_call wrapper ----------------------------------

def sam2_fused(prompted, tokens, vol, q, w_enc, w_dec):
    grid_spec = pltpu.PrefetchScalarGridSpec(
        num_scalar_prefetch=1,
        grid=(1,),
        in_specs=[
            pl.BlockSpec((NTOK, TOK), lambda i, p: (0, 0)),   # tokens (128, 16)
            pl.BlockSpec((D, HW), lambda i, p: (0, 0)),       # volume (8, 256)
            pl.BlockSpec((D, E), lambda i, p: (0, 0)),        # prompts (8, 128)
            pl.BlockSpec((TOK, E), lambda i, p: (0, 0)),      # w_enc (16, 128)
            pl.BlockSpec((E, HW), lambda i, p: (0, 0)),       # w_dec (128, 256)
        ],
        out_specs=pl.BlockSpec((D, HW), lambda i, p: (0, 0)),
    )
    return pl.pallas_call(
        _sam2_fused_kernel,
        out_shape=jax.ShapeDtypeStruct((D, HW), jnp.float32),
        grid_spec=grid_spec,
        compiler_params=pltpu.CompilerParams(dimension_semantics=("arbitrary",)),
    )(prompted, tokens, vol, q, w_enc, w_dec)


@jax.jit
def _run_volume(image_hwd, q, prompted, w_enc, w_dec):
    vol = jnp.transpose(image_hwd, (2, 0, 1)).astype(jnp.float32)   # (D, H, W)
    tokens = vol.reshape(NTOK, TOK)          # free reshape: row tokens (128, 16)
    vol_flat = vol.reshape(D, HW)            # free reshape: lane-dense slab (8, 256)
    pred = sam2_fused(prompted, tokens, vol_flat, q, w_enc, w_dec)   # (D, 256)
    return jnp.transpose(pred.reshape(D, H, W), (1, 2, 0))           # (H, W, D)


# ------------------------------ host-side glue ---------------------------------------

def _pos_enc(row, col):
    half = E // 2
    k = np.arange(half // 2, dtype=np.float32)
    freq = 1.0 / (30.0 ** (2.0 * k / half))
    pe_r = np.concatenate([np.sin(row * freq), np.cos(row * freq)])
    pe_c = np.concatenate([np.sin(col * freq), np.cos(col * freq)])
    return np.concatenate([pe_r, pe_c]).astype(np.float32)           # (E,)


class SAM2NetworkPallas:
    """Synthetic SAM2Network: deterministic weights, single fused Pallas TPU kernel."""

    def __init__(self, seed=0):
        key = jax.random.PRNGKey(seed)
        k1, k2 = jax.random.split(key)
        self.w_enc = (jax.random.normal(k1, (TOK, E), jnp.float32)
                      / np.sqrt(TOK)).astype(jnp.bfloat16)
        self.w_dec = (jax.random.normal(k2, (E, HW), jnp.float32)
                      / np.sqrt(E)).astype(jnp.bfloat16)
        self.inference_state = None  # kept for API parity
        # TODO(synk): the real module loads a pretrained SAM2 video predictor from disk
        # (Hydra config + checkpoint) and JPEG-caches slices; no Pallas equivalent —
        # replaced by synthetic deterministic weights.

    def _build_prompts(self, guidance):
        q = np.zeros((D, E), dtype=np.float32)
        prompted = np.zeros((D,), dtype=np.int32)
        for key in ('lesion', 'background'):
            pts = guidance.get(key)
            pts = np.asarray(pts) if pts is not None else np.zeros((1, 0, 4))
            if pts.size == 0:
                continue
            sign = 1.0 if key == 'lesion' else -1.0
            for pid in range(pts.shape[1]):
                point = pts[:, pid, :][0][1:]          # [row, col, slice_id]
                r, c, sid = float(point[0]), float(point[1]), int(point[2])
                q[sid, :] += sign * _pos_enc(r, c)
                prompted[sid] = 1
        return jnp.asarray(q), jnp.asarray(prompted)

    def run_3d(self, reset_state, image_hwd, guidance, case_name):
        del reset_state, case_name
        q, prompted = self._build_prompts(guidance)
        return _run_volume(image_hwd, q, prompted, self.w_enc, self.w_dec)  # (H, W, D)

    def forward(self, x):
        image = jnp.squeeze(x['image'])[0]          # channel 0 of squeezed tensor -> (H, W, D)
        output = self.run_3d(x['reset_state'], image, x['guidance'], x['case_name'])
        return output[None, None, ...].astype(jnp.float32)                 # (1, 1, H, W, D)

    __call__ = forward


if __name__ == "__main__":
    key = jax.random.PRNGKey(0)
    img = jax.random.normal(key, (1, 2, H, W, D), jnp.float32) * 50.0 + 100.0

    guidance = {
        # points are [_, row, col, slice_id], shape (1, n_points, 4)
        'lesion': np.array([[[0, 5, 7, 2], [0, 9, 4, 2], [0, 6, 6, 5]]], dtype=np.int32),
        'background': np.array([[[0, 2, 12, 2]]], dtype=np.int32),
    }

    net = SAM2NetworkPallas(seed=0)
    x = {'image': img, 'guidance': guidance, 'case_name': 'case_000', 'reset_state': True}

    out = jax.block_until_ready(net(x))
    assert out.shape == (1, 1, H, W, D), out.shape
    assert out.dtype == jnp.float32
    assert bool(jnp.all((out == 0.0) | (out == 1.0)))
    print("KERNEL_OK")
</pallas_src>

<mosaic_0001>
module attributes {stable_mosaic.version = 11 : i64} {
  func.func @_sam2_fused_kernel(%arg0: i32, %arg1: memref<8xi32, #tpu.memory_space<smem>>, %arg2: memref<128x16xf32, #tpu.memory_space<vmem>>, %arg3: memref<8x256xf32, #tpu.memory_space<vmem>>, %arg4: memref<8x128xf32, #tpu.memory_space<vmem>>, %arg5: memref<16x128xbf16, #tpu.memory_space<vmem>>, %arg6: memref<128x256xbf16, #tpu.memory_space<vmem>>, %arg7: memref<8x256xf32, #tpu.memory_space<vmem>>) attributes {dimension_semantics = [#tpu.dimension_semantics<arbitrary>], iteration_bounds = array<i64: 1>, scalar_prefetch = 1 : i64, scratch_operands = 0 : i64, tpu.core_type = #tpu.core_type<tc>, window_params = [{pipeline_mode = #tpu.pipeline_mode<synchronous>, transform_indices = @transform_0, window_bounds = array<i64: 128, 16>}, {pipeline_mode = #tpu.pipeline_mode<synchronous>, transform_indices = @transform_1, window_bounds = array<i64: 8, 256>}, {pipeline_mode = #tpu.pipeline_mode<synchronous>, transform_indices = @transform_2, window_bounds = array<i64: 8, 128>}, {pipeline_mode = #tpu.pipeline_mode<synchronous>, transform_indices = @transform_3, window_bounds = array<i64: 16, 128>}, {pipeline_mode = #tpu.pipeline_mode<synchronous>, transform_indices = @transform_4, window_bounds = array<i64: 128, 256>}, {pipeline_mode = #tpu.pipeline_mode<synchronous>, transform_indices = @transform_5, window_bounds = array<i64: 8, 256>}]} {
    %c0 = arith.constant 0 : index
    %c0_0 = arith.constant 0 : index
    %0 = vector.load %arg3[%c0, %c0_0] : memref<8x256xf32, #tpu.memory_space<vmem>>, vector<8x256xf32>
    %1 = vector.shape_cast %0 : vector<8x256xf32> to vector<1x8x256xf32>
    %cst = arith.constant dense<0.000000e+00> : vector<1xf32>
    %2 = vector.multi_reduction <add>, %1, %cst [1, 2] : vector<1x8x256xf32> to vector<1xf32>
    %3 = vector.shape_cast %2 : vector<1xf32> to vector<1x1x1xf32>
    %4 = vector.extract %3[0, 0, 0] : f32 from vector<1x1x1xf32>
    %cst_1 = arith.constant 2.048000e+03 : f32
    %5 = arith.divf %4, %cst_1 : f32
    %6 = vector.broadcast %5 : f32 to vector<8x256xf32>
    %7 = arith.subf %0, %6 : vector<8x256xf32>
    %8 = vector.broadcast %5 : f32 to vector<8x256xf32>
    %9 = arith.subf %0, %8 : vector<8x256xf32>
    %10 = arith.mulf %7, %9 : vector<8x256xf32>
    %11 = vector.shape_cast %10 : vector<8x256xf32> to vector<1x8x256xf32>
    %cst_2 = arith.constant dense<0.000000e+00> : vector<1xf32>
    %12 = vector.multi_reduction <add>, %11, %cst_2 [1, 2] : vector<1x8x256xf32> to vector<1xf32>
    %13 = vector.shape_cast %12 : vector<1xf32> to vector<1x1x1xf32>
    %14 = vector.extract %13[0, 0, 0] : f32 from vector<1x1x1xf32>
    %cst_3 = arith.constant 2.048000e+03 : f32
    %15 = arith.divf %14, %cst_3 : f32
    %cst_4 = arith.constant 9.99999997E-7 : f32
    %16 = arith.addf %15, %cst_4 : f32
    %17 = math.rsqrt %16 : f32
    %18 = vector.broadcast %5 : f32 to vector<8x256xf32>
    %19 = arith.subf %0, %18 : vector<8x256xf32>
    %20 = vector.broadcast %17 : f32 to vector<8x256xf32>
    %21 = arith.mulf %19, %20 : vector<8x256xf32>
    %c0_5 = arith.constant 0 : index
    %c0_6 = arith.constant 0 : index
    %22 = vector.load %arg2[%c0_5, %c0_6] : memref<128x16xf32, #tpu.memory_space<vmem>>, vector<128x16xf32>
    %23 = vector.broadcast %5 : f32 to vector<128x16xf32>
    %24 = arith.subf %22, %23 : vector<128x16xf32>
    %25 = vector.broadcast %17 : f32 to vector<128x16xf32>
    %26 = arith.mulf %24, %25 : vector<128x16xf32>
    %27 = arith.truncf %26 : vector<128x16xf32> to vector<128x16xbf16>
    %c0_7 = arith.constant 0 : index
    %c0_8 = arith.constant 0 : index
    %28 = vector.load %arg5[%c0_7, %c0_8] : memref<16x128xbf16, #tpu.memory_space<vmem>>, vector<16x128xbf16>
    %cst_9 = arith.constant dense<0.000000e+00> : vector<128x128xf32>
    %29 = tpu.matmul %27, %28, %cst_9 {dimension_numbers = #tpu.dot_dimension_numbers<[1], [0], [0], [1], [0, 0, 1, 1], [], []>} : vector<128x16xbf16>, vector<16x128xbf16>, vector<128x128xf32> -> vector<128x128xf32>
    %cst_10 = arith.constant 0.000000e+00 : f32
    %30 = vector.broadcast %cst_10 : f32 to vector<128x128xf32>
    %31 = arith.maximumf %29, %30 : vector<128x128xf32>
    %32 = vector.shape_cast %31 : vector<128x128xf32> to vector<8x16x128xf32>
    %33 = arith.truncf %32 : vector<8x16x128xf32> to vector<8x16x128xbf16>
    "tpu.trace_start"() <{level = 10 : i32, message = "dne,dme->dnm"}> : () -> ()
    %cst_11 = arith.constant dense<0.000000e+00> : vector<8x16x16xf32>
    %34 = tpu.matmul %33, %33, %cst_11 {dimension_numbers = #tpu.dot_dimension_numbers<[2], [2], [1], [1], [0, 0, 0, 1, 1, 1], [0], [0]>} : vector<8x16x128xbf16>, vector<8x16x128xbf16>, vector<8x16x16xf32> -> vector<8x16x16xf32>
    "tpu.trace_stop"() : () -> ()
    %cst_12 = arith.constant 0.0883883461 : f32
    %35 = vector.broadcast %cst_12 : f32 to vector<8x16x16xf32>
    %36 = arith.mulf %34, %35 : vector<8x16x16xf32>
    %cst_13 = arith.constant dense<0xFF800000> : vector<8x16xf32>
    %37 = vector.multi_reduction <maximumf>, %36, %cst_13 [2] : vector<8x16x16xf32> to vector<8x16xf32>
    %38 = vector.shape_cast %37 : vector<8x16xf32> to vector<8x16x1xf32>
    %39 = vector.broadcast %38 : vector<8x16x1xf32> to vector<8x16x16xf32>
    %40 = arith.subf %36, %39 : vector<8x16x16xf32>
    %41 = math.exp %40 : vector<8x16x16xf32>
    %cst_14 = arith.constant dense<0.000000e+00> : vector<8x16xf32>
    %42 = vector.multi_reduction <add>, %41, %cst_14 [2] : vector<8x16x16xf32> to vector<8x16xf32>
    %43 = vector.shape_cast %42 : vector<8x16xf32> to vector<8x16x1xf32>
    %44 = tpu.reciprocal %43 {approx = true} : vector<8x16x1xf32> -> vector<8x16x1xf32>
    %45 = vector.broadcast %44 : vector<8x16x1xf32> to vector<8x16x16xf32>
    %46 = arith.mulf %41, %45 : vector<8x16x16xf32>
    %47 = arith.truncf %46 : vector<8x16x16xf32> to vector<8x16x16xbf16>
    "tpu.trace_start"() <{level = 10 : i32, message = "dnm,dme->dne"}> : () -> ()
    %cst_15 = arith.constant dense<0.000000e+00> : vector<8x16x128xf32>
    %48 = tpu.matmul %47, %33, %cst_15 {dimension_numbers = #tpu.dot_dimension_numbers<[2], [1], [1], [2], [0, 0, 0, 1, 1, 2], [0], [0]>} : vector<8x16x16xbf16>, vector<8x16x128xbf16>, vector<8x16x128xf32> -> vector<8x16x128xf32>
    "tpu.trace_stop"() : () -> ()
    %49 = arith.addf %32, %48 : vector<8x16x128xf32>
    %c0_16 = arith.constant 0 : index
    %c0_17 = arith.constant 0 : index
    %50 = vector.load %arg4[%c0_16, %c0_17] : memref<8x128xf32, #tpu.memory_space<vmem>>, vector<8x128xf32>
    %51 = vector.shape_cast %50 : vector<8x128xf32> to vector<8x1x128xf32>
    %52 = vector.broadcast %51 : vector<8x1x128xf32> to vector<8x16x128xf32>
    %53 = arith.mulf %49, %52 : vector<8x16x128xf32>
    %cst_18 = arith.constant dense<0.000000e+00> : vector<8x16xf32>
    %54 = vector.multi_reduction <add>, %53, %cst_18 [2] : vector<8x16x128xf32> to vector<8x16xf32>
    %55 = vector.shape_cast %54 : vector<8x16xf32> to vector<8x16x1xf32>
    %cst_19 = arith.constant 0.0883883461 : f32
    %56 = vector.broadcast %cst_19 : f32 to vector<8x16x1xf32>
    %57 = arith.mulf %55, %56 : vector<8x16x1xf32>
    %cst_20 = arith.constant dense<0xFF800000> : vector<8x1xf32>
    %58 = vector.multi_reduction <maximumf>, %57, %cst_20 [1] : vector<8x16x1xf32> to vector<8x1xf32>
    %59 = vector.shape_cast %58 : vector<8x1xf32> to vector<8x1x1xf32>
    %60 = vector.broadcast %59 : vector<8x1x1xf32> to vector<8x16x1xf32>
    %61 = arith.subf %57, %60 : vector<8x16x1xf32>
    %62 = math.exp %61 : vector<8x16x1xf32>
    %cst_21 = arith.constant dense<0.000000e+00> : vector<8x1xf32>
    %63 = vector.multi_reduction <add>, %62, %cst_21 [1] : vector<8x16x1xf32> to vector<8x1xf32>
    %64 = vector.shape_cast %63 : vector<8x1xf32> to vector<8x1x1xf32>
    %65 = tpu.reciprocal %64 {approx = true} : vector<8x1x1xf32> -> vector<8x1x1xf32>
    %66 = vector.broadcast %65 : vector<8x1x1xf32> to vector<8x16x1xf32>
    %67 = arith.mulf %62, %66 : vector<8x16x1xf32>
    %68 = vector.broadcast %67 : vector<8x16x1xf32> to vector<8x16x128xf32>
    %69 = arith.mulf %68, %49 : vector<8x16x128xf32>
    %cst_22 = arith.constant dense<0.000000e+00> : vector<8x128xf32>
    %70 = vector.multi_reduction <add>, %69, %cst_22 [1] : vector<8x16x128xf32> to vector<8x128xf32>
    %cst_23 = arith.constant dense<0.000000e+00> : vector<8x1xf32>
    %71 = vector.multi_reduction <add>, %57, %cst_23 [1] : vector<8x16x1xf32> to vector<8x1xf32>
    %cst_24 = arith.constant 1.600000e+01 : f32
    %72 = vector.broadcast %cst_24 : f32 to vector<8x1xf32>
    %73 = arith.divf %71, %72 : vector<8x1xf32>
    %74 = math.tanh %73 : vector<8x1xf32>
    %75 = arith.truncf %70 : vector<8x128xf32> to vector<8x128xbf16>
    %c0_25 = arith.constant 0 : index
    %c0_26 = arith.constant 0 : index
    %76 = vector.load %arg6[%c0_25, %c0_26] : memref<128x256xbf16, #tpu.memory_space<vmem>>, vector<128x256xbf16>
    %cst_27 = arith.constant dense<0.000000e+00> : vector<8x256xf32>
    %77 = tpu.matmul %75, %76, %cst_27 {dimension_numbers = #tpu.dot_dimension_numbers<[1], [0], [0], [1], [0, 0, 1, 1], [], []>} : vector<8x128xbf16>, vector<128x256xbf16>, vector<8x256xf32> -> vector<8x256xf32>
    %78 = arith.addf %77, %21 : vector<8x256xf32>
    %79 = vector.broadcast %74 : vector<8x1xf32> to vector<8x256xf32>
    %80 = arith.mulf %79, %78 : vector<8x256xf32>
    %cst_28 = arith.constant 0.000000e+00 : f32
    %81 = vector.broadcast %cst_28 : f32 to vector<1x128xf32>
    %c0_29 = arith.constant 0 : index
    %82 = memref.load %arg1[%c0_29] : memref<8xi32, #tpu.memory_space<smem>>
    %83 = arith.sitofp %82 : i32 to f32
    %84 = vector.extract_strided_slice %70 {offsets = [0, 0], sizes = [1, 128], strides = [1, 1]} : vector<8x128xf32> to vector<1x128xf32>
    %85 = vector.extract_strided_slice %80 {offsets = [0, 0], sizes = [1, 256], strides = [1, 1]} : vector<8x256xf32> to vector<1x256xf32>
    %cst_30 = arith.constant 0.000000e+00 : f32
    %cst_31 = arith.constant 0.899999976 : f32
    %86 = arith.mulf %cst_30, %cst_31 : f32
    %87 = arith.maximumf %86, %83 : f32
    %cst_32 = arith.constant 0.899999976 : f32
    %88 = vector.broadcast %cst_32 : f32 to vector<1x128xf32>
    %89 = arith.mulf %81, %88 : vector<1x128xf32>
    %90 = vector.broadcast %83 : f32 to vector<1x128xf32>
    %91 = arith.mulf %90, %84 : vector<1x128xf32>
    %92 = arith.addf %89, %91 : vector<1x128xf32>
    %93 = arith.mulf %92, %84 : vector<1x128xf32>
    %94 = vector.shape_cast %93 : vector<1x128xf32> to vector<1x1x128xf32>
    %cst_33 = arith.constant dense<0.000000e+00> : vector<1xf32>
    %95 = vector.multi_reduction <add>, %94, %cst_33 [1, 2] : vector<1x1x128xf32> to vector<1xf32>
    %96 = vector.shape_cast %95 : vector<1xf32> to vector<1x1x1xf32>
    %97 = vector.extract %96[0, 0, 0] : f32 from vector<1x1x1xf32>
    %cst_34 = arith.constant 7.812500e-03 : f32
    %98 = arith.mulf %97, %cst_34 : f32
    %99 = vector.broadcast %87 : f32 to vector<1x256xf32>
    %100 = arith.mulf %85, %99 : vector<1x256xf32>
    %101 = arith.mulf %98, %87 : f32
    %102 = vector.broadcast %101 : f32 to vector<1x256xf32>
    %103 = arith.addf %100, %102 : vector<1x256xf32>
    %cst_35 = arith.constant 0.000000e+00 : f32
    %104 = vector.broadcast %cst_35 : f32 to vector<1x256xf32>
    %105 = arith.cmpf ogt, %103, %104 : vector<1x256xf32>
    %cst_36 = arith.constant 0.000000e+00 : f32
    %106 = arith.cmpf ogt, %87, %cst_36 : f32
    %107 = vector.broadcast %106 : i1 to vector<1x256xi1>
    %108 = arith.andi %105, %107 : vector<1x256xi1>
    %cst_37 = arith.constant 1.000000e+00 : f32
    %cst_38 = arith.constant 0.000000e+00 : f32
    %109 = vector.broadcast %cst_37 : f32 to vector<1x256xf32>
    %110 = vector.broadcast %cst_38 : f32 to vector<1x256xf32>
    %111 = arith.select %108, %109, %110 : vector<1x256xi1>, vector<1x256xf32>
    %cst_39 = arith.constant 0.000000e+00 : f32
    %112 = vector.broadcast %cst_39 : f32 to vector<1x256xf32>
    %113 = arith.cmpf ogt, %85, %112 : vector<1x256xf32>
    %cst_40 = arith.constant 1.000000e+00 : f32
    %cst_41 = arith.constant 0.000000e+00 : f32
    %114 = vector.broadcast %cst_40 : f32 to vector<1x256xf32>
    %115 = vector.broadcast %cst_41 : f32 to vector<1x256xf32>
    %116 = arith.select %113, %114, %115 : vector<1x256xi1>, vector<1x256xf32>
    %117 = vector.broadcast %83 : f32 to vector<1x256xf32>
    %118 = arith.mulf %116, %117 : vector<1x256xf32>
    %119 = arith.maximumf %118, %111 : vector<1x256xf32>
    %c1 = arith.constant 1 : index
    %120 = memref.load %arg1[%c1] : memref<8xi32, #tpu.memory_space<smem>>
    %121 = arith.sitofp %120 : i32 to f32
    %122 = vector.extract_strided_slice %70 {offsets = [1, 0], sizes = [1, 128], strides = [1, 1]} : vector<8x128xf32> to vector<1x128xf32>
    %123 = vector.extract_strided_slice %80 {offsets = [1, 0], sizes = [1, 256], strides = [1, 1]} : vector<8x256xf32> to vector<1x256xf32>
    %cst_42 = arith.constant 0.899999976 : f32
    %124 = arith.mulf %87, %cst_42 : f32
    %125 = arith.maximumf %124, %121 : f32
    %cst_43 = arith.constant 0.899999976 : f32
    %126 = vector.broadcast %cst_43 : f32 to vector<1x128xf32>
    %127 = arith.mulf %92, %126 : vector<1x128xf32>
    %128 = vector.broadcast %121 : f32 to vector<1x128xf32>
    %129 = arith.mulf %128, %122 : vector<1x128xf32>
    %130 = arith.addf %127, %129 : vector<1x128xf32>
    %131 = arith.mulf %130, %122 : vector<1x128xf32>
    %132 = vector.shape_cast %131 : vector<1x128xf32> to vector<1x1x128xf32>
    %cst_44 = arith.constant dense<0.000000e+00> : vector<1xf32>
    %133 = vector.multi_reduction <add>, %132, %cst_44 [1, 2] : vector<1x1x128xf32> to vector<1xf32>
    %134 = vector.shape_cast %133 : vector<1xf32> to vector<1x1x1xf32>
    %135 = vector.extract %134[0, 0, 0] : f32 from vector<1x1x1xf32>
    %cst_45 = arith.constant 7.812500e-03 : f32
    %136 = arith.mulf %135, %cst_45 : f32
    %137 = vector.broadcast %125 : f32 to vector<1x256xf32>
    %138 = arith.mulf %123, %137 : vector<1x256xf32>
    %139 = arith.mulf %136, %125 : f32
    %140 = vector.broadcast %139 : f32 to vector<1x256xf32>
    %141 = arith.addf %138, %140 : vector<1x256xf32>
    %cst_46 = arith.constant 0.000000e+00 : f32
    %142 = vector.broadcast %cst_46 : f32 to vector<1x256xf32>
    %143 = arith.cmpf ogt, %141, %142 : vector<1x256xf32>
    %cst_47 = arith.constant 0.000000e+00 : f32
    %144 = arith.cmpf ogt, %125, %cst_47 : f32
    %145 = vector.broadcast %144 : i1 to vector<1x256xi1>
    %146 = arith.andi %143, %145 : vector<1x256xi1>
    %cst_48 = arith.constant 1.000000e+00 : f32
    %cst_49 = arith.constant 0.000000e+00 : f32
    %147 = vector.broadcast %cst_48 : f32 to vector<1x256xf32>
    %148 = vector.broadcast %cst_49 : f32 to vector<1x256xf32>
    %149 = arith.select %146, %147, %148 : vector<1x256xi1>, vector<1x256xf32>
    %cst_50 = arith.constant 0.000000e+00 : f32
    %150 = vector.broadcast %cst_50 : f32 to vector<1x256xf32>
    %151 = arith.cmpf ogt, %123, %150 : vector<1x256xf32>
    %cst_51 = arith.constant 1.000000e+00 : f32
    %cst_52 = arith.constant 0.000000e+00 : f32
    %152 = vector.broadcast %cst_51 : f32 to vector<1x256xf32>
    %153 = vector.broadcast %cst_52 : f32 to vector<1x256xf32>
    %154 = arith.select %151, %152, %153 : vector<1x256xi1>, vector<1x256xf32>
    %155 = vector.broadcast %121 : f32 to vector<1x256xf32>
    %156 = arith.mulf %154, %155 : vector<1x256xf32>
    %157 = arith.maximumf %156, %149 : vector<1x256xf32>
    %c2 = arith.constant 2 : index
    %158 = memref.load %arg1[%c2] : memref<8xi32, #tpu.memory_space<smem>>
    %159 = arith.sitofp %158 : i32 to f32
    %160 = vector.extract_strided_slice %70 {offsets = [2, 0], sizes = [1, 128], strides = [1, 1]} : vector<8x128xf32> to vector<1x128xf32>
    %161 = vector.extract_strided_slice %80 {offsets = [2, 0], sizes = [1, 256], strides = [1, 1]} : vector<8x256xf32> to vector<1x256xf32>
    %cst_53 = arith.constant 0.899999976 : f32
    %162 = arith.mulf %125, %cst_53 : f32
    %163 = arith.maximumf %162, %159 : f32
    %cst_54 = arith.constant 0.899999976 : f32
    %164 = vector.broadcast %cst_54 : f32 to vector<1x128xf32>
    %165 = arith.mulf %130, %164 : vector<1x128xf32>
    %166 = vector.broadcast %159 : f32 to vector<1x128xf32>
    %167 = arith.mulf %166, %160 : vector<1x128xf32>
    %168 = arith.addf %165, %167 : vector<1x128xf32>
    %169 = arith.mulf %168, %160 : vector<1x128xf32>
    %170 = vector.shape_cast %169 : vector<1x128xf32> to vector<1x1x128xf32>
    %cst_55 = arith.constant dense<0.000000e+00> : vector<1xf32>
    %171 = vector.multi_reduction <add>, %170, %cst_55 [1, 2] : vector<1x1x128xf32> to vector<1xf32>
    %172 = vector.shape_cast %171 : vector<1xf32> to vector<1x1x1xf32>
    %173 = vector.extract %172[0, 0, 0] : f32 from vector<1x1x1xf32>
    %cst_56 = arith.constant 7.812500e-03 : f32
    %174 = arith.mulf %173, %cst_56 : f32
    %175 = vector.broadcast %163 : f32 to vector<1x256xf32>
    %176 = arith.mulf %161, %175 : vector<1x256xf32>
    %177 = arith.mulf %174, %163 : f32
    %178 = vector.broadcast %177 : f32 to vector<1x256xf32>
    %179 = arith.addf %176, %178 : vector<1x256xf32>
    %cst_57 = arith.constant 0.000000e+00 : f32
    %180 = vector.broadcast %cst_57 : f32 to vector<1x256xf32>
    %181 = arith.cmpf ogt, %179, %180 : vector<1x256xf32>
    %cst_58 = arith.constant 0.000000e+00 : f32
    %182 = arith.cmpf ogt, %163, %cst_58 : f32
    %183 = vector.broadcast %182 : i1 to vector<1x256xi1>
    %184 = arith.andi %181, %183 : vector<1x256xi1>
    %cst_59 = arith.constant 1.000000e+00 : f32
    %cst_60 = arith.constant 0.000000e+00 : f32
    %185 = vector.broadcast %cst_59 : f32 to vector<1x256xf32>
    %186 = vector.broadcast %cst_60 : f32 to vector<1x256xf32>
    %187 = arith.select %184, %185, %186 : vector<1x256xi1>, vector<1x256xf32>
    %cst_61 = arith.constant 0.000000e+00 : f32
    %188 = vector.broadcast %cst_61 : f32 to vector<1x256xf32>
    %189 = arith.cmpf ogt, %161, %188 : vector<1x256xf32>
    %cst_62 = arith.constant 1.000000e+00 : f32
    %cst_63 = arith.constant 0.000000e+00 : f32
    %190 = vector.broadcast %cst_62 : f32 to vector<1x256xf32>
    %191 = vector.broadcast %cst_63 : f32 to vector<1x256xf32>
    %192 = arith.select %189, %190, %191 : vector<1x256xi1>, vector<1x256xf32>
    %193 = vector.broadcast %159 : f32 to vector<1x256xf32>
    %194 = arith.mulf %192, %193 : vector<1x256xf32>
    %195 = arith.maximumf %194, %187 : vector<1x256xf32>
    %c3 = arith.constant 3 : index
    %196 = memref.load %arg1[%c3] : memref<8xi32, #tpu.memory_space<smem>>
    %197 = arith.sitofp %196 : i32 to f32
    %198 = vector.extract_strided_slice %70 {offsets = [3, 0], sizes = [1, 128], strides = [1, 1]} : vector<8x128xf32> to vector<1x128xf32>
    %199 = vector.extract_strided_slice %80 {offsets = [3, 0], sizes = [1, 256], strides = [1, 1]} : vector<8x256xf32> to vector<1x256xf32>
    %cst_64 = arith.constant 0.899999976 : f32
    %200 = arith.mulf %163, %cst_64 : f32
    %201 = arith.maximumf %200, %197 : f32
    %cst_65 = arith.constant 0.899999976 : f32
    %202 = vector.broadcast %cst_65 : f32 to vector<1x128xf32>
    %203 = arith.mulf %168, %202 : vector<1x128xf32>
    %204 = vector.broadcast %197 : f32 to vector<1x128xf32>
    %205 = arith.mulf %204, %198 : vector<1x128xf32>
    %206 = arith.addf %203, %205 : vector<1x128xf32>
    %207 = arith.mulf %206, %198 : vector<1x128xf32>
    %208 = vector.shape_cast %207 : vector<1x128xf32> to vector<1x1x128xf32>
    %cst_66 = arith.constant dense<0.000000e+00> : vector<1xf32>
    %209 = vector.multi_reduction <add>, %208, %cst_66 [1, 2] : vector<1x1x128xf32> to vector<1xf32>
    %210 = vector.shape_cast %209 : vector<1xf32> to vector<1x1x1xf32>
    %211 = vector.extract %210[0, 0, 0] : f32 from vector<1x1x1xf32>
    %cst_67 = arith.constant 7.812500e-03 : f32
    %212 = arith.mulf %211, %cst_67 : f32
    %213 = vector.broadcast %201 : f32 to vector<1x256xf32>
    %214 = arith.mulf %199, %213 : vector<1x256xf32>
    %215 = arith.mulf %212, %201 : f32
    %216 = vector.broadcast %215 : f32 to vector<1x256xf32>
    %217 = arith.addf %214, %216 : vector<1x256xf32>
    %cst_68 = arith.constant 0.000000e+00 : f32
    %218 = vector.broadcast %cst_68 : f32 to vector<1x256xf32>
    %219 = arith.cmpf ogt, %217, %218 : vector<1x256xf32>
    %cst_69 = arith.constant 0.000000e+00 : f32
    %220 = arith.cmpf ogt, %201, %cst_69 : f32
    %221 = vector.broadcast %220 : i1 to vector<1x256xi1>
    %222 = arith.andi %219, %221 : vector<1x256xi1>
    %cst_70 = arith.constant 1.000000e+00 : f32
    %cst_71 = arith.constant 0.000000e+00 : f32
    %223 = vector.broadcast %cst_70 : f32 to vector<1x256xf32>
    %224 = vector.broadcast %cst_71 : f32 to vector<1x256xf32>
    %225 = arith.select %222, %223, %224 : vector<1x256xi1>, vector<1x256xf32>
    %cst_72 = arith.constant 0.000000e+00 : f32
    %226 = vector.broadcast %cst_72 : f32 to vector<1x256xf32>
    %227 = arith.cmpf ogt, %199, %226 : vector<1x256xf32>
    %cst_73 = arith.constant 1.000000e+00 : f32
    %cst_74 = arith.constant 0.000000e+00 : f32
    %228 = vector.broadcast %cst_73 : f32 to vector<1x256xf32>
    %229 = vector.broadcast %cst_74 : f32 to vector<1x256xf32>
    %230 = arith.select %227, %228, %229 : vector<1x256xi1>, vector<1x256xf32>
    %231 = vector.broadcast %197 : f32 to vector<1x256xf32>
    %232 = arith.mulf %230, %231 : vector<1x256xf32>
    %233 = arith.maximumf %232, %225 : vector<1x256xf32>
    %c4 = arith.constant 4 : index
    %234 = memref.load %arg1[%c4] : memref<8xi32, #tpu.memory_space<smem>>
    %235 = arith.sitofp %234 : i32 to f32
    %236 = vector.extract_strided_slice %70 {offsets = [4, 0], sizes = [1, 128], strides = [1, 1]} : vector<8x128xf32> to vector<1x128xf32>
    %237 = vector.extract_strided_slice %80 {offsets = [4, 0], sizes = [1, 256], strides = [1, 1]} : vector<8x256xf32> to vector<1x256xf32>
    %cst_75 = arith.constant 0.899999976 : f32
    %238 = arith.mulf %201, %cst_75 : f32
    %239 = arith.maximumf %238, %235 : f32
    %cst_76 = arith.constant 0.899999976 : f32
    %240 = vector.broadcast %cst_76 : f32 to vector<1x128xf32>
    %241 = arith.mulf %206, %240 : vector<1x128xf32>
    %242 = vector.broadcast %235 : f32 to vector<1x128xf32>
    %243 = arith.mulf %242, %236 : vector<1x128xf32>
    %244 = arith.addf %241, %243 : vector<1x128xf32>
    %245 = arith.mulf %244, %236 : vector<1x128xf32>
    %246 = vector.shape_cast %245 : vector<1x128xf32> to vector<1x1x128xf32>
    %cst_77 = arith.constant dense<0.000000e+00> : vector<1xf32>
    %247 = vector.multi_reduction <add>, %246, %cst_77 [1, 2] : vector<1x1x128xf32> to vector<1xf32>
    %248 = vector.shape_cast %247 : vector<1xf32> to vector<1x1x1xf32>
    %249 = vector.extract %248[0, 0, 0] : f32 from vector<1x1x1xf32>
    %cst_78 = arith.constant 7.812500e-03 : f32
    %250 = arith.mulf %249, %cst_78 : f32
    %251 = vector.broadcast %239 : f32 to vector<1x256xf32>
    %252 = arith.mulf %237, %251 : vector<1x256xf32>
    %253 = arith.mulf %250, %239 : f32
    %254 = vector.broadcast %253 : f32 to vector<1x256xf32>
    %255 = arith.addf %252, %254 : vector<1x256xf32>
    %cst_79 = arith.constant 0.000000e+00 : f32
    %256 = vector.broadcast %cst_79 : f32 to vector<1x256xf32>
    %257 = arith.cmpf ogt, %255, %256 : vector<1x256xf32>
    %cst_80 = arith.constant 0.000000e+00 : f32
    %258 = arith.cmpf ogt, %239, %cst_80 : f32
    %259 = vector.broadcast %258 : i1 to vector<1x256xi1>
    %260 = arith.andi %257, %259 : vector<1x256xi1>
    %cst_81 = arith.constant 1.000000e+00 : f32
    %cst_82 = arith.constant 0.000000e+00 : f32
    %261 = vector.broadcast %cst_81 : f32 to vector<1x256xf32>
    %262 = vector.broadcast %cst_82 : f32 to vector<1x256xf32>
    %263 = arith.select %260, %261, %262 : vector<1x256xi1>, vector<1x256xf32>
    %cst_83 = arith.constant 0.000000e+00 : f32
    %264 = vector.broadcast %cst_83 : f32 to vector<1x256xf32>
    %265 = arith.cmpf ogt, %237, %264 : vector<1x256xf32>
    %cst_84 = arith.constant 1.000000e+00 : f32
    %cst_85 = arith.constant 0.000000e+00 : f32
    %266 = vector.broadcast %cst_84 : f32 to vector<1x256xf32>
    %267 = vector.broadcast %cst_85 : f32 to vector<1x256xf32>
    %268 = arith.select %265, %266, %267 : vector<1x256xi1>, vector<1x256xf32>
    %269 = vector.broadcast %235 : f32 to vector<1x256xf32>
    %270 = arith.mulf %268, %269 : vector<1x256xf32>
    %271 = arith.maximumf %270, %263 : vector<1x256xf32>
    %c5 = arith.constant 5 : index
    %272 = memref.load %arg1[%c5] : memref<8xi32, #tpu.memory_space<smem>>
    %273 = arith.sitofp %272 : i32 to f32
    %274 = vector.extract_strided_slice %70 {offsets = [5, 0], sizes = [1, 128], strides = [1, 1]} : vector<8x128xf32> to vector<1x128xf32>
    %275 = vector.extract_strided_slice %80 {offsets = [5, 0], sizes = [1, 256], strides = [1, 1]} : vector<8x256xf32> to vector<1x256xf32>
    %cst_86 = arith.constant 0.899999976 : f32
    %276 = arith.mulf %239, %cst_86 : f32
    %277 = arith.maximumf %276, %273 : f32
    %cst_87 = arith.constant 0.899999976 : f32
    %278 = vector.broadcast %cst_87 : f32 to vector<1x128xf32>
    %279 = arith.mulf %244, %278 : vector<1x128xf32>
    %280 = vector.broadcast %273 : f32 to vector<1x128xf32>
    %281 = arith.mulf %280, %274 : vector<1x128xf32>
    %282 = arith.addf %279, %281 : vector<1x128xf32>
    %283 = arith.mulf %282, %274 : vector<1x128xf32>
    %284 = vector.shape_cast %283 : vector<1x128xf32> to vector<1x1x128xf32>
    %cst_88 = arith.constant dense<0.000000e+00> : vector<1xf32>
    %285 = vector.multi_reduction <add>, %284, %cst_88 [1, 2] : vector<1x1x128xf32> to vector<1xf32>
    %286 = vector.shape_cast %285 : vector<1xf32> to vector<1x1x1xf32>
    %287 = vector.extract %286[0, 0, 0] : f32 from vector<1x1x1xf32>
    %cst_89 = arith.constant 7.812500e-03 : f32
    %288 = arith.mulf %287, %cst_89 : f32
    %289 = vector.broadcast %277 : f32 to vector<1x256xf32>
    %290 = arith.mulf %275, %289 : vector<1x256xf32>
    %291 = arith.mulf %288, %277 : f32
    %292 = vector.broadcast %291 : f32 to vector<1x256xf32>
    %293 = arith.addf %290, %292 : vector<1x256xf32>
    %cst_90 = arith.constant 0.000000e+00 : f32
    %294 = vector.broadcast %cst_90 : f32 to vector<1x256xf32>
    %295 = arith.cmpf ogt, %293, %294 : vector<1x256xf32>
    %cst_91 = arith.constant 0.000000e+00 : f32
    %296 = arith.cmpf ogt, %277, %cst_91 : f32
    %297 = vector.broadcast %296 : i1 to vector<1x256xi1>
    %298 = arith.andi %295, %297 : vector<1x256xi1>
    %cst_92 = arith.constant 1.000000e+00 : f32
    %cst_93 = arith.constant 0.000000e+00 : f32
    %299 = vector.broadcast %cst_92 : f32 to vector<1x256xf32>
    %300 = vector.broadcast %cst_93 : f32 to vector<1x256xf32>
    %301 = arith.select %298, %299, %300 : vector<1x256xi1>, vector<1x256xf32>
    %cst_94 = arith.constant 0.000000e+00 : f32
    %302 = vector.broadcast %cst_94 : f32 to vector<1x256xf32>
    %303 = arith.cmpf ogt, %275, %302 : vector<1x256xf32>
    %cst_95 = arith.constant 1.000000e+00 : f32
    %cst_96 = arith.constant 0.000000e+00 : f32
    %304 = vector.broadcast %cst_95 : f32 to vector<1x256xf32>
    %305 = vector.broadcast %cst_96 : f32 to vector<1x256xf32>
    %306 = arith.select %303, %304, %305 : vector<1x256xi1>, vector<1x256xf32>
    %307 = vector.broadcast %273 : f32 to vector<1x256xf32>
    %308 = arith.mulf %306, %307 : vector<1x256xf32>
    %309 = arith.maximumf %308, %301 : vector<1x256xf32>
    %c6 = arith.constant 6 : index
    %310 = memref.load %arg1[%c6] : memref<8xi32, #tpu.memory_space<smem>>
    %311 = arith.sitofp %310 : i32 to f32
    %312 = vector.extract_strided_slice %70 {offsets = [6, 0], sizes = [1, 128], strides = [1, 1]} : vector<8x128xf32> to vector<1x128xf32>
    %313 = vector.extract_strided_slice %80 {offsets = [6, 0], sizes = [1, 256], strides = [1, 1]} : vector<8x256xf32> to vector<1x256xf32>
    %cst_97 = arith.constant 0.899999976 : f32
    %314 = arith.mulf %277, %cst_97 : f32
    %315 = arith.maximumf %314, %311 : f32
    %cst_98 = arith.constant 0.899999976 : f32
    %316 = vector.broadcast %cst_98 : f32 to vector<1x128xf32>
    %317 = arith.mulf %282, %316 : vector<1x128xf32>
    %318 = vector.broadcast %311 : f32 to vector<1x128xf32>
    %319 = arith.mulf %318, %312 : vector<1x128xf32>
    %320 = arith.addf %317, %319 : vector<1x128xf32>
    %321 = arith.mulf %320, %312 : vector<1x128xf32>
    %322 = vector.shape_cast %321 : vector<1x128xf32> to vector<1x1x128xf32>
    %cst_99 = arith.constant dense<0.000000e+00> : vector<1xf32>
    %323 = vector.multi_reduction <add>, %322, %cst_99 [1, 2] : vector<1x1x128xf32> to vector<1xf32>
    %324 = vector.shape_cast %323 : vector<1xf32> to vector<1x1x1xf32>
    %325 = vector.extract %324[0, 0, 0] : f32 from vector<1x1x1xf32>
    %cst_100 = arith.constant 7.812500e-03 : f32
    %326 = arith.mulf %325, %cst_100 : f32
    %327 = vector.broadcast %315 : f32 to vector<1x256xf32>
    %328 = arith.mulf %313, %327 : vector<1x256xf32>
    %329 = arith.mulf %326, %315 : f32
    %330 = vector.broadcast %329 : f32 to vector<1x256xf32>
    %331 = arith.addf %328, %330 : vector<1x256xf32>
    %cst_101 = arith.constant 0.000000e+00 : f32
    %332 = vector.broadcast %cst_101 : f32 to vector<1x256xf32>
    %333 = arith.cmpf ogt, %331, %332 : vector<1x256xf32>
    %cst_102 = arith.constant 0.000000e+00 : f32
    %334 = arith.cmpf ogt, %315, %cst_102 : f32
    %335 = vector.broadcast %334 : i1 to vector<1x256xi1>
    %336 = arith.andi %333, %335 : vector<1x256xi1>
    %cst_103 = arith.constant 1.000000e+00 : f32
    %cst_104 = arith.constant 0.000000e+00 : f32
    %337 = vector.broadcast %cst_103 : f32 to vector<1x256xf32>
    %338 = vector.broadcast %cst_104 : f32 to vector<1x256xf32>
    %339 = arith.select %336, %337, %338 : vector<1x256xi1>, vector<1x256xf32>
    %cst_105 = arith.constant 0.000000e+00 : f32
    %340 = vector.broadcast %cst_105 : f32 to vector<1x256xf32>
    %341 = arith.cmpf ogt, %313, %340 : vector<1x256xf32>
    %cst_106 = arith.constant 1.000000e+00 : f32
    %cst_107 = arith.constant 0.000000e+00 : f32
    %342 = vector.broadcast %cst_106 : f32 to vector<1x256xf32>
    %343 = vector.broadcast %cst_107 : f32 to vector<1x256xf32>
    %344 = arith.select %341, %342, %343 : vector<1x256xi1>, vector<1x256xf32>
    %345 = vector.broadcast %311 : f32 to vector<1x256xf32>
    %346 = arith.mulf %344, %345 : vector<1x256xf32>
    %347 = arith.maximumf %346, %339 : vector<1x256xf32>
    %c7 = arith.constant 7 : index
    %348 = memref.load %arg1[%c7] : memref<8xi32, #tpu.memory_space<smem>>
    %349 = arith.sitofp %348 : i32 to f32
    %350 = vector.extract_strided_slice %70 {offsets = [7, 0], sizes = [1, 128], strides = [1, 1]} : vector<8x128xf32> to vector<1x128xf32>
    %351 = vector.extract_strided_slice %80 {offsets = [7, 0], sizes = [1, 256], strides = [1, 1]} : vector<8x256xf32> to vector<1x256xf32>
    %cst_108 = arith.constant 0.899999976 : f32
    %352 = arith.mulf %315, %cst_108 : f32
    %353 = arith.maximumf %352, %349 : f32
    %cst_109 = arith.constant 0.899999976 : f32
    %354 = vector.broadcast %cst_109 : f32 to vector<1x128xf32>
    %355 = arith.mulf %320, %354 : vector<1x128xf32>
    %356 = vector.broadcast %349 : f32 to vector<1x128xf32>
    %357 = arith.mulf %356, %350 : vector<1x128xf32>
    %358 = arith.addf %355, %357 : vector<1x128xf32>
    %359 = arith.mulf %358, %350 : vector<1x128xf32>
    %360 = vector.shape_cast %359 : vector<1x128xf32> to vector<1x1x128xf32>
    %cst_110 = arith.constant dense<0.000000e+00> : vector<1xf32>
    %361 = vector.multi_reduction <add>, %360, %cst_110 [1, 2] : vector<1x1x128xf32> to vector<1xf32>
    %362 = vector.shape_cast %361 : vector<1xf32> to vector<1x1x1xf32>
    %363 = vector.extract %362[0, 0, 0] : f32 from vector<1x1x1xf32>
    %cst_111 = arith.constant 7.812500e-03 : f32
    %364 = arith.mulf %363, %cst_111 : f32
    %365 = vector.broadcast %353 : f32 to vector<1x256xf32>
    %366 = arith.mulf %351, %365 : vector<1x256xf32>
    %367 = arith.mulf %364, %353 : f32
    %368 = vector.broadcast %367 : f32 to vector<1x256xf32>
    %369 = arith.addf %366, %368 : vector<1x256xf32>
    %cst_112 = arith.constant 0.000000e+00 : f32
    %370 = vector.broadcast %cst_112 : f32 to vector<1x256xf32>
    %371 = arith.cmpf ogt, %369, %370 : vector<1x256xf32>
    %cst_113 = arith.constant 0.000000e+00 : f32
    %372 = arith.cmpf ogt, %353, %cst_113 : f32
    %373 = vector.broadcast %372 : i1 to vector<1x256xi1>
    %374 = arith.andi %371, %373 : vector<1x256xi1>
    %cst_114 = arith.constant 1.000000e+00 : f32
    %cst_115 = arith.constant 0.000000e+00 : f32
    %375 = vector.broadcast %cst_114 : f32 to vector<1x256xf32>
    %376 = vector.broadcast %cst_115 : f32 to vector<1x256xf32>
    %377 = arith.select %374, %375, %376 : vector<1x256xi1>, vector<1x256xf32>
    %cst_116 = arith.constant 0.000000e+00 : f32
    %378 = vector.broadcast %cst_116 : f32 to vector<1x256xf32>
    %379 = arith.cmpf ogt, %351, %378 : vector<1x256xf32>
    %cst_117 = arith.constant 1.000000e+00 : f32
    %cst_118 = arith.constant 0.000000e+00 : f32
    %380 = vector.broadcast %cst_117 : f32 to vector<1x256xf32>
    %381 = vector.broadcast %cst_118 : f32 to vector<1x256xf32>
    %382 = arith.select %379, %380, %381 : vector<1x256xi1>, vector<1x256xf32>
    %383 = vector.broadcast %349 : f32 to vector<1x256xf32>
    %384 = arith.mulf %382, %383 : vector<1x256xf32>
    %385 = arith.maximumf %384, %377 : vector<1x256xf32>
    %cst_119 = arith.constant 0.000000e+00 : f32
    %386 = vector.broadcast %cst_119 : f32 to vector<1x128xf32>
    %c7_120 = arith.constant 7 : index
    %387 = memref.load %arg1[%c7_120] : memref<8xi32, #tpu.memory_space<smem>>
    %388 = arith.sitofp %387 : i32 to f32
    %389 = vector.extract_strided_slice %70 {offsets = [7, 0], sizes = [1, 128], strides = [1, 1]} : vector<8x128xf32> to vector<1x128xf32>
    %390 = vector.extract_strided_slice %80 {offsets = [7, 0], sizes = [1, 256], strides = [1, 1]} : vector<8x256xf32> to vector<1x256xf32>
    %cst_121 = arith.constant 0.000000e+00 : f32
    %cst_122 = arith.constant 0.899999976 : f32
    %391 = arith.mulf %cst_121, %cst_122 : f32
    %392 = arith.maximumf %391, %388 : f32
    %cst_123 = arith.constant 0.899999976 : f32
    %393 = vector.broadcast %cst_123 : f32 to vector<1x128xf32>
    %394 = arith.mulf %386, %393 : vector<1x128xf32>
    %395 = vector.broadcast %388 : f32 to vector<1x128xf32>
    %396 = arith.mulf %395, %389 : vector<1x128xf32>
    %397 = arith.addf %394, %396 : vector<1x128xf32>
    %398 = arith.mulf %397, %389 : vector<1x128xf32>
    %399 = vector.shape_cast %398 : vector<1x128xf32> to vector<1x1x128xf32>
    %cst_124 = arith.constant dense<0.000000e+00> : vector<1xf32>
    %400 = vector.multi_reduction <add>, %399, %cst_124 [1, 2] : vector<1x1x128xf32> to vector<1xf32>
    %401 = vector.shape_cast %400 : vector<1xf32> to vector<1x1x1xf32>
    %402 = vector.extract %401[0, 0, 0] : f32 from vector<1x1x1xf32>
    %cst_125 = arith.constant 7.812500e-03 : f32
    %403 = arith.mulf %402, %cst_125 : f32
    %404 = vector.broadcast %392 : f32 to vector<1x256xf32>
    %405 = arith.mulf %390, %404 : vector<1x256xf32>
    %406 = arith.mulf %403, %392 : f32
    %407 = vector.broadcast %406 : f32 to vector<1x256xf32>
    %408 = arith.addf %405, %407 : vector<1x256xf32>
    %cst_126 = arith.constant 0.000000e+00 : f32
    %409 = vector.broadcast %cst_126 : f32 to vector<1x256xf32>
    %410 = arith.cmpf ogt, %408, %409 : vector<1x256xf32>
    %cst_127 = arith.constant 0.000000e+00 : f32
    %411 = arith.cmpf ogt, %392, %cst_127 : f32
    %412 = vector.broadcast %411 : i1 to vector<1x256xi1>
    %413 = arith.andi %410, %412 : vector<1x256xi1>
    %cst_128 = arith.constant 1.000000e+00 : f32
    %cst_129 = arith.constant 0.000000e+00 : f32
    %414 = vector.broadcast %cst_128 : f32 to vector<1x256xf32>
    %415 = vector.broadcast %cst_129 : f32 to vector<1x256xf32>
    %416 = arith.select %413, %414, %415 : vector<1x256xi1>, vector<1x256xf32>
    %417 = arith.maximumf %385, %416 : vector<1x256xf32>
    %c7_130 = arith.constant 7 : index
    %c0_131 = arith.constant 0 : index
    %418 = vector.load %arg7[%c7_130, %c0_131] : memref<8x256xf32, #tpu.memory_space<vmem>>, vector<1x256xf32>
    tpu.vector_store %arg7[%c7_130, %c0_131], %417 {strides = array<i32>} : memref<8x256xf32, #tpu.memory_space<vmem>>, vector<1x256xf32>,
    %c6_132 = arith.constant 6 : index
    %419 = memref.load %arg1[%c6_132] : memref<8xi32, #tpu.memory_space<smem>>
    %420 = arith.sitofp %419 : i32 to f32
    %421 = vector.extract_strided_slice %70 {offsets = [6, 0], sizes = [1, 128], strides = [1, 1]} : vector<8x128xf32> to vector<1x128xf32>
    %422 = vector.extract_strided_slice %80 {offsets = [6, 0], sizes = [1, 256], strides = [1, 1]} : vector<8x256xf32> to vector<1x256xf32>
    %cst_133 = arith.constant 0.899999976 : f32
    %423 = arith.mulf %392, %cst_133 : f32
    %424 = arith.maximumf %423, %420 : f32
    %cst_134 = arith.constant 0.899999976 : f32
    %425 = vector.broadcast %cst_134 : f32 to vector<1x128xf32>
    %426 = arith.mulf %397, %425 : vector<1x128xf32>
    %427 = vector.broadcast %420 : f32 to vector<1x128xf32>
    %428 = arith.mulf %427, %421 : vector<1x128xf32>
    %429 = arith.addf %426, %428 : vector<1x128xf32>
    %430 = arith.mulf %429, %421 : vector<1x128xf32>
    %431 = vector.shape_cast %430 : vector<1x128xf32> to vector<1x1x128xf32>
    %cst_135 = arith.constant dense<0.000000e+00> : vector<1xf32>
    %432 = vector.multi_reduction <add>, %431, %cst_135 [1, 2] : vector<1x1x128xf32> to vector<1xf32>
    %433 = vector.shape_cast %432 : vector<1xf32> to vector<1x1x1xf32>
    %434 = vector.extract %433[0, 0, 0] : f32 from vector<1x1x1xf32>
    %cst_136 = arith.constant 7.812500e-03 : f32
    %435 = arith.mulf %434, %cst_136 : f32
    %436 = vector.broadcast %424 : f32 to vector<1x256xf32>
    %437 = arith.mulf %422, %436 : vector<1x256xf32>
    %438 = arith.mulf %435, %424 : f32
    %439 = vector.broadcast %438 : f32 to vector<1x256xf32>
    %440 = arith.addf %437, %439 : vector<1x256xf32>
    %cst_137 = arith.constant 0.000000e+00 : f32
    %441 = vector.broadcast %cst_137 : f32 to vector<1x256xf32>
    %442 = arith.cmpf ogt, %440, %441 : vector<1x256xf32>
    %cst_138 = arith.constant 0.000000e+00 : f32
    %443 = arith.cmpf ogt, %424, %cst_138 : f32
    %444 = vector.broadcast %443 : i1 to vector<1x256xi1>
    %445 = arith.andi %442, %444 : vector<1x256xi1>
    %cst_139 = arith.constant 1.000000e+00 : f32
    %cst_140 = arith.constant 0.000000e+00 : f32
    %446 = vector.broadcast %cst_139 : f32 to vector<1x256xf32>
    %447 = vector.broadcast %cst_140 : f32 to vector<1x256xf32>
    %448 = arith.select %445, %446, %447 : vector<1x256xi1>, vector<1x256xf32>
    %449 = arith.maximumf %347, %448 : vector<1x256xf32>
    %c6_141 = arith.constant 6 : index
    %c0_142 = arith.constant 0 : index
    %450 = vector.load %arg7[%c6_141, %c0_142] : memref<8x256xf32, #tpu.memory_space<vmem>>, vector<1x256xf32>
    tpu.vector_store %arg7[%c6_141, %c0_142], %449 {strides = array<i32>} : memref<8x256xf32, #tpu.memory_space<vmem>>, vector<1x256xf32>,
    %c5_143 = arith.constant 5 : index
    %451 = memref.load %arg1[%c5_143] : memref<8xi32, #tpu.memory_space<smem>>
    %452 = arith.sitofp %451 : i32 to f32
    %453 = vector.extract_strided_slice %70 {offsets = [5, 0], sizes = [1, 128], strides = [1, 1]} : vector<8x128xf32> to vector<1x128xf32>
    %454 = vector.extract_strided_slice %80 {offsets = [5, 0], sizes = [1, 256], strides = [1, 1]} : vector<8x256xf32> to vector<1x256xf32>
    %cst_144 = arith.constant 0.899999976 : f32
    %455 = arith.mulf %424, %cst_144 : f32
    %456 = arith.maximumf %455, %452 : f32
    %cst_145 = arith.constant 0.899999976 : f32
    %457 = vector.broadcast %cst_145 : f32 to vector<1x128xf32>
    %458 = arith.mulf %429, %457 : vector<1x128xf32>
    %459 = vector.broadcast %452 : f32 to vector<1x128xf32>
    %460 = arith.mulf %459, %453 : vector<1x128xf32>
    %461 = arith.addf %458, %460 : vector<1x128xf32>
    %462 = arith.mulf %461, %453 : vector<1x128xf32>
    %463 = vector.shape_cast %462 : vector<1x128xf32> to vector<1x1x128xf32>
    %cst_146 = arith.constant dense<0.000000e+00> : vector<1xf32>
    %464 = vector.multi_reduction <add>, %463, %cst_146 [1, 2] : vector<1x1x128xf32> to vector<1xf32>
    %465 = vector.shape_cast %464 : vector<1xf32> to vector<1x1x1xf32>
    %466 = vector.extract %465[0, 0, 0] : f32 from vector<1x1x1xf32>
    %cst_147 = arith.constant 7.812500e-03 : f32
    %467 = arith.mulf %466, %cst_147 : f32
    %468 = vector.broadcast %456 : f32 to vector<1x256xf32>
    %469 = arith.mulf %454, %468 : vector<1x256xf32>
    %470 = arith.mulf %467, %456 : f32
    %471 = vector.broadcast %470 : f32 to vector<1x256xf32>
    %472 = arith.addf %469, %471 : vector<1x256xf32>
    %cst_148 = arith.constant 0.000000e+00 : f32
    %473 = vector.broadcast %cst_148 : f32 to vector<1x256xf32>
    %474 = arith.cmpf ogt, %472, %473 : vector<1x256xf32>
    %cst_149 = arith.constant 0.000000e+00 : f32
    %475 = arith.cmpf ogt, %456, %cst_149 : f32
    %476 = vector.broadcast %475 : i1 to vector<1x256xi1>
    %477 = arith.andi %474, %476 : vector<1x256xi1>
    %cst_150 = arith.constant 1.000000e+00 : f32
    %cst_151 = arith.constant 0.000000e+00 : f32
    %478 = vector.broadcast %cst_150 : f32 to vector<1x256xf32>
    %479 = vector.broadcast %cst_151 : f32 to vector<1x256xf32>
    %480 = arith.select %477, %478, %479 : vector<1x256xi1>, vector<1x256xf32>
    %481 = arith.maximumf %309, %480 : vector<1x256xf32>
    %c5_152 = arith.constant 5 : index
    %c0_153 = arith.constant 0 : index
    %482 = vector.load %arg7[%c5_152, %c0_153] : memref<8x256xf32, #tpu.memory_space<vmem>>, vector<1x256xf32>
    tpu.vector_store %arg7[%c5_152, %c0_153], %481 {strides = array<i32>} : memref<8x256xf32, #tpu.memory_space<vmem>>, vector<1x256xf32>,
    %c4_154 = arith.constant 4 : index
    %483 = memref.load %arg1[%c4_154] : memref<8xi32, #tpu.memory_space<smem>>
    %484 = arith.sitofp %483 : i32 to f32
    %485 = vector.extract_strided_slice %70 {offsets = [4, 0], sizes = [1, 128], strides = [1, 1]} : vector<8x128xf32> to vector<1x128xf32>
    %486 = vector.extract_strided_slice %80 {offsets = [4, 0], sizes = [1, 256], strides = [1, 1]} : vector<8x256xf32> to vector<1x256xf32>
    %cst_155 = arith.constant 0.899999976 : f32
    %487 = arith.mulf %456, %cst_155 : f32
    %488 = arith.maximumf %487, %484 : f32
    %cst_156 = arith.constant 0.899999976 : f32
    %489 = vector.broadcast %cst_156 : f32 to vector<1x128xf32>
    %490 = arith.mulf %461, %489 : vector<1x128xf32>
    %491 = vector.broadcast %484 : f32 to vector<1x128xf32>
    %492 = arith.mulf %491, %485 : vector<1x128xf32>
    %493 = arith.addf %490, %492 : vector<1x128xf32>
    %494 = arith.mulf %493, %485 : vector<1x128xf32>
    %495 = vector.shape_cast %494 : vector<1x128xf32> to vector<1x1x128xf32>
    %cst_157 = arith.constant dense<0.000000e+00> : vector<1xf32>
    %496 = vector.multi_reduction <add>, %495, %cst_157 [1, 2] : vector<1x1x128xf32> to vector<1xf32>
    %497 = vector.shape_cast %496 : vector<1xf32> to vector<1x1x1xf32>
    %498 = vector.extract %497[0, 0, 0] : f32 from vector<1x1x1xf32>
    %cst_158 = arith.constant 7.812500e-03 : f32
    %499 = arith.mulf %498, %cst_158 : f32
    %500 = vector.broadcast %488 : f32 to vector<1x256xf32>
    %501 = arith.mulf %486, %500 : vector<1x256xf32>
    %502 = arith.mulf %499, %488 : f32
    %503 = vector.broadcast %502 : f32 to vector<1x256xf32>
    %504 = arith.addf %501, %503 : vector<1x256xf32>
    %cst_159 = arith.constant 0.000000e+00 : f32
    %505 = vector.broadcast %cst_159 : f32 to vector<1x256xf32>
    %506 = arith.cmpf ogt, %504, %505 : vector<1x256xf32>
    %cst_160 = arith.constant 0.000000e+00 : f32
    %507 = arith.cmpf ogt, %488, %cst_160 : f32
    %508 = vector.broadcast %507 : i1 to vector<1x256xi1>
    %509 = arith.andi %506, %508 : vector<1x256xi1>
    %cst_161 = arith.constant 1.000000e+00 : f32
    %cst_162 = arith.constant 0.000000e+00 : f32
    %510 = vector.broadcast %cst_161 : f32 to vector<1x256xf32>
    %511 = vector.broadcast %cst_162 : f32 to vector<1x256xf32>
    %512 = arith.select %509, %510, %511 : vector<1x256xi1>, vector<1x256xf32>
    %513 = arith.maximumf %271, %512 : vector<1x256xf32>
    %c4_163 = arith.constant 4 : index
    %c0_164 = arith.constant 0 : index
    %514 = vector.load %arg7[%c4_163, %c0_164] : memref<8x256xf32, #tpu.memory_space<vmem>>, vector<1x256xf32>
    tpu.vector_store %arg7[%c4_163, %c0_164], %513 {strides = array<i32>} : memref<8x256xf32, #tpu.memory_space<vmem>>, vector<1x256xf32>,
    %c3_165 = arith.constant 3 : index
    %515 = memref.load %arg1[%c3_165] : memref<8xi32, #tpu.memory_space<smem>>
    %516 = arith.sitofp %515 : i32 to f32
    %517 = vector.extract_strided_slice %70 {offsets = [3, 0], sizes = [1, 128], strides = [1, 1]} : vector<8x128xf32> to vector<1x128xf32>
    %518 = vector.extract_strided_slice %80 {offsets = [3, 0], sizes = [1, 256], strides = [1, 1]} : vector<8x256xf32> to vector<1x256xf32>
    %cst_166 = arith.constant 0.899999976 : f32
    %519 = arith.mulf %488, %cst_166 : f32
    %520 = arith.maximumf %519, %516 : f32
    %cst_167 = arith.constant 0.899999976 : f32
    %521 = vector.broadcast %cst_167 : f32 to vector<1x128xf32>
    %522 = arith.mulf %493, %521 : vector<1x128xf32>
    %523 = vector.broadcast %516 : f32 to vector<1x128xf32>
    %524 = arith.mulf %523, %517 : vector<1x128xf32>
    %525 = arith.addf %522, %524 : vector<1x128xf32>
    %526 = arith.mulf %525, %517 : vector<1x128xf32>
    %527 = vector.shape_cast %526 : vector<1x128xf32> to vector<1x1x128xf32>
    %cst_168 = arith.constant dense<0.000000e+00> : vector<1xf32>
    %528 = vector.multi_reduction <add>, %527, %cst_168 [1, 2] : vector<1x1x128xf32> to vector<1xf32>
    %529 = vector.shape_cast %528 : vector<1xf32> to vector<1x1x1xf32>
    %530 = vector.extract %529[0, 0, 0] : f32 from vector<1x1x1xf32>
    %cst_169 = arith.constant 7.812500e-03 : f32
    %531 = arith.mulf %530, %cst_169 : f32
    %532 = vector.broadcast %520 : f32 to vector<1x256xf32>
    %533 = arith.mulf %518, %532 : vector<1x256xf32>
    %534 = arith.mulf %531, %520 : f32
    %535 = vector.broadcast %534 : f32 to vector<1x256xf32>
    %536 = arith.addf %533, %535 : vector<1x256xf32>
    %cst_170 = arith.constant 0.000000e+00 : f32
    %537 = vector.broadcast %cst_170 : f32 to vector<1x256xf32>
    %538 = arith.cmpf ogt, %536, %537 : vector<1x256xf32>
    %cst_171 = arith.constant 0.000000e+00 : f32
    %539 = arith.cmpf ogt, %520, %cst_171 : f32
    %540 = vector.broadcast %539 : i1 to vector<1x256xi1>
    %541 = arith.andi %538, %540 : vector<1x256xi1>
    %cst_172 = arith.constant 1.000000e+00 : f32
    %cst_173 = arith.constant 0.000000e+00 : f32
    %542 = vector.broadcast %cst_172 : f32 to vector<1x256xf32>
    %543 = vector.broadcast %cst_173 : f32 to vector<1x256xf32>
    %544 = arith.select %541, %542, %543 : vector<1x256xi1>, vector<1x256xf32>
    %545 = arith.maximumf %233, %544 : vector<1x256xf32>
    %c3_174 = arith.constant 3 : index
    %c0_175 = arith.constant 0 : index
    %546 = vector.load %arg7[%c3_174, %c0_175] : memref<8x256xf32, #tpu.memory_space<vmem>>, vector<1x256xf32>
    tpu.vector_store %arg7[%c3_174, %c0_175], %545 {strides = array<i32>} : memref<8x256xf32, #tpu.memory_space<vmem>>, vector<1x256xf32>,
    %c2_176 = arith.constant 2 : index
    %547 = memref.load %arg1[%c2_176] : memref<8xi32, #tpu.memory_space<smem>>
    %548 = arith.sitofp %547 : i32 to f32
    %549 = vector.extract_strided_slice %70 {offsets = [2, 0], sizes = [1, 128], strides = [1, 1]} : vector<8x128xf32> to vector<1x128xf32>
    %550 = vector.extract_strided_slice %80 {offsets = [2, 0], sizes = [1, 256], strides = [1, 1]} : vector<8x256xf32> to vector<1x256xf32>
    %cst_177 = arith.constant 0.899999976 : f32
    %551 = arith.mulf %520, %cst_177 : f32
    %552 = arith.maximumf %551, %548 : f32
    %cst_178 = arith.constant 0.899999976 : f32
    %553 = vector.broadcast %cst_178 : f32 to vector<1x128xf32>
    %554 = arith.mulf %525, %553 : vector<1x128xf32>
    %555 = vector.broadcast %548 : f32 to vector<1x128xf32>
    %556 = arith.mulf %555, %549 : vector<1x128xf32>
    %557 = arith.addf %554, %556 : vector<1x128xf32>
    %558 = arith.mulf %557, %549 : vector<1x128xf32>
    %559 = vector.shape_cast %558 : vector<1x128xf32> to vector<1x1x128xf32>
    %cst_179 = arith.constant dense<0.000000e+00> : vector<1xf32>
    %560 = vector.multi_reduction <add>, %559, %cst_179 [1, 2] : vector<1x1x128xf32> to vector<1xf32>
    %561 = vector.shape_cast %560 : vector<1xf32> to vector<1x1x1xf32>
    %562 = vector.extract %561[0, 0, 0] : f32 from vector<1x1x1xf32>
    %cst_180 = arith.constant 7.812500e-03 : f32
    %563 = arith.mulf %562, %cst_180 : f32
    %564 = vector.broadcast %552 : f32 to vector<1x256xf32>
    %565 = arith.mulf %550, %564 : vector<1x256xf32>
    %566 = arith.mulf %563, %552 : f32
    %567 = vector.broadcast %566 : f32 to vector<1x256xf32>
    %568 = arith.addf %565, %567 : vector<1x256xf32>
    %cst_181 = arith.constant 0.000000e+00 : f32
    %569 = vector.broadcast %cst_181 : f32 to vector<1x256xf32>
    %570 = arith.cmpf ogt, %568, %569 : vector<1x256xf32>
    %cst_182 = arith.constant 0.000000e+00 : f32
    %571 = arith.cmpf ogt, %552, %cst_182 : f32
    %572 = vector.broadcast %571 : i1 to vector<1x256xi1>
    %573 = arith.andi %570, %572 : vector<1x256xi1>
    %cst_183 = arith.constant 1.000000e+00 : f32
    %cst_184 = arith.constant 0.000000e+00 : f32
    %574 = vector.broadcast %cst_183 : f32 to vector<1x256xf32>
    %575 = vector.broadcast %cst_184 : f32 to vector<1x256xf32>
    %576 = arith.select %573, %574, %575 : vector<1x256xi1>, vector<1x256xf32>
    %577 = arith.maximumf %195, %576 : vector<1x256xf32>
    %c2_185 = arith.constant 2 : index
    %c0_186 = arith.constant 0 : index
    %578 = vector.load %arg7[%c2_185, %c0_186] : memref<8x256xf32, #tpu.memory_space<vmem>>, vector<1x256xf32>
    tpu.vector_store %arg7[%c2_185, %c0_186], %577 {strides = array<i32>} : memref<8x256xf32, #tpu.memory_space<vmem>>, vector<1x256xf32>,
    %c1_187 = arith.constant 1 : index
    %579 = memref.load %arg1[%c1_187] : memref<8xi32, #tpu.memory_space<smem>>
    %580 = arith.sitofp %579 : i32 to f32
    %581 = vector.extract_strided_slice %70 {offsets = [1, 0], sizes = [1, 128], strides = [1, 1]} : vector<8x128xf32> to vector<1x128xf32>
    %582 = vector.extract_strided_slice %80 {offsets = [1, 0], sizes = [1, 256], strides = [1, 1]} : vector<8x256xf32> to vector<1x256xf32>
    %cst_188 = arith.constant 0.899999976 : f32
    %583 = arith.mulf %552, %cst_188 : f32
    %584 = arith.maximumf %583, %580 : f32
    %cst_189 = arith.constant 0.899999976 : f32
    %585 = vector.broadcast %cst_189 : f32 to vector<1x128xf32>
    %586 = arith.mulf %557, %585 : vector<1x128xf32>
    %587 = vector.broadcast %580 : f32 to vector<1x128xf32>
    %588 = arith.mulf %587, %581 : vector<1x128xf32>
    %589 = arith.addf %586, %588 : vector<1x128xf32>
    %590 = arith.mulf %589, %581 : vector<1x128xf32>
    %591 = vector.shape_cast %590 : vector<1x128xf32> to vector<1x1x128xf32>
    %cst_190 = arith.constant dense<0.000000e+00> : vector<1xf32>
    %592 = vector.multi_reduction <add>, %591, %cst_190 [1, 2] : vector<1x1x128xf32> to vector<1xf32>
    %593 = vector.shape_cast %592 : vector<1xf32> to vector<1x1x1xf32>
    %594 = vector.extract %593[0, 0, 0] : f32 from vector<1x1x1xf32>
    %cst_191 = arith.constant 7.812500e-03 : f32
    %595 = arith.mulf %594, %cst_191 : f32
    %596 = vector.broadcast %584 : f32 to vector<1x256xf32>
    %597 = arith.mulf %582, %596 : vector<1x256xf32>
    %598 = arith.mulf %595, %584 : f32
    %599 = vector.broadcast %598 : f32 to vector<1x256xf32>
    %600 = arith.addf %597, %599 : vector<1x256xf32>
    %cst_192 = arith.constant 0.000000e+00 : f32
    %601 = vector.broadcast %cst_192 : f32 to vector<1x256xf32>
    %602 = arith.cmpf ogt, %600, %601 : vector<1x256xf32>
    %cst_193 = arith.constant 0.000000e+00 : f32
    %603 = arith.cmpf ogt, %584, %cst_193 : f32
    %604 = vector.broadcast %603 : i1 to vector<1x256xi1>
    %605 = arith.andi %602, %604 : vector<1x256xi1>
    %cst_194 = arith.constant 1.000000e+00 : f32
    %cst_195 = arith.constant 0.000000e+00 : f32
    %606 = vector.broadcast %cst_194 : f32 to vector<1x256xf32>
    %607 = vector.broadcast %cst_195 : f32 to vector<1x256xf32>
    %608 = arith.select %605, %606, %607 : vector<1x256xi1>, vector<1x256xf32>
    %609 = arith.maximumf %157, %608 : vector<1x256xf32>
    %c1_196 = arith.constant 1 : index
    %c0_197 = arith.constant 0 : index
    %610 = vector.load %arg7[%c1_196, %c0_197] : memref<8x256xf32, #tpu.memory_space<vmem>>, vector<1x256xf32>
    tpu.vector_store %arg7[%c1_196, %c0_197], %609 {strides = array<i32>} : memref<8x256xf32, #tpu.memory_space<vmem>>, vector<1x256xf32>,
    %c0_198 = arith.constant 0 : index
    %611 = memref.load %arg1[%c0_198] : memref<8xi32, #tpu.memory_space<smem>>
    %612 = arith.sitofp %611 : i32 to f32
    %613 = vector.extract_strided_slice %70 {offsets = [0, 0], sizes = [1, 128], strides = [1, 1]} : vector<8x128xf32> to vector<1x128xf32>
    %614 = vector.extract_strided_slice %80 {offsets = [0, 0], sizes = [1, 256], strides = [1, 1]} : vector<8x256xf32> to vector<1x256xf32>
    %cst_199 = arith.constant 0.899999976 : f32
    %615 = arith.mulf %584, %cst_199 : f32
    %616 = arith.maximumf %615, %612 : f32
    %cst_200 = arith.constant 0.899999976 : f32
    %617 = vector.broadcast %cst_200 : f32 to vector<1x128xf32>
    %618 = arith.mulf %589, %617 : vector<1x128xf32>
    %619 = vector.broadcast %612 : f32 to vector<1x128xf32>
    %620 = arith.mulf %619, %613 : vector<1x128xf32>
    %621 = arith.addf %618, %620 : vector<1x128xf32>
    %622 = arith.mulf %621, %613 : vector<1x128xf32>
    %623 = vector.shape_cast %622 : vector<1x128xf32> to vector<1x1x128xf32>
    %cst_201 = arith.constant dense<0.000000e+00> : vector<1xf32>
    %624 = vector.multi_reduction <add>, %623, %cst_201 [1, 2] : vector<1x1x128xf32> to vector<1xf32>
    %625 = vector.shape_cast %624 : vector<1xf32> to vector<1x1x1xf32>
    %626 = vector.extract %625[0, 0, 0] : f32 from vector<1x1x1xf32>
    %cst_202 = arith.constant 7.812500e-03 : f32
    %627 = arith.mulf %626, %cst_202 : f32
    %628 = vector.broadcast %616 : f32 to vector<1x256xf32>
    %629 = arith.mulf %614, %628 : vector<1x256xf32>
    %630 = arith.mulf %627, %616 : f32
    %631 = vector.broadcast %630 : f32 to vector<1x256xf32>
    %632 = arith.addf %629, %631 : vector<1x256xf32>
    %cst_203 = arith.constant 0.000000e+00 : f32
    %633 = vector.broadcast %cst_203 : f32 to vector<1x256xf32>
    %634 = arith.cmpf ogt, %632, %633 : vector<1x256xf32>
    %cst_204 = arith.constant 0.000000e+00 : f32
    %635 = arith.cmpf ogt, %616, %cst_204 : f32
    %636 = vector.broadcast %635 : i1 to vector<1x256xi1>
    %637 = arith.andi %634, %636 : vector<1x256xi1>
    %cst_205 = arith.constant 1.000000e+00 : f32
    %cst_206 = arith.constant 0.000000e+00 : f32
    %638 = vector.broadcast %cst_205 : f32 to vector<1x256xf32>
    %639 = vector.broadcast %cst_206 : f32 to vector<1x256xf32>
    %640 = arith.select %637, %638, %639 : vector<1x256xi1>, vector<1x256xf32>
    %641 = arith.maximumf %119, %640 : vector<1x256xf32>
    %c0_207 = arith.constant 0 : index
    %c0_208 = arith.constant 0 : index
    %642 = vector.load %arg7[%c0_207, %c0_208] : memref<8x256xf32, #tpu.memory_space<vmem>>, vector<1x256xf32>
    tpu.vector_store %arg7[%c0_207, %c0_208], %641 {strides = array<i32>} : memref<8x256xf32, #tpu.memory_space<vmem>>, vector<1x256xf32>,
    return
  }
  func.func @transform_0(%arg0: i32, %arg1: memref<8xi32, #tpu.memory_space<smem>>) -> (i32, i32) {
    %c0_i32 = arith.constant 0 : i32
    %c0_i32_0 = arith.constant 0 : i32
    %c0_i32_1 = arith.constant 0 : i32
    return %c0_i32, %c0_i32_0 : i32, i32
  }
  func.func @transform_1(%arg0: i32, %arg1: memref<8xi32, #tpu.memory_space<smem>>) -> (i32, i32) {
    %c0_i32 = arith.constant 0 : i32
    %c0_i32_0 = arith.constant 0 : i32
    %c0_i32_1 = arith.constant 0 : i32
    return %c0_i32, %c0_i32_0 : i32, i32
  }
  func.func @transform_2(%arg0: i32, %arg1: memref<8xi32, #tpu.memory_space<smem>>) -> (i32, i32) {
    %c0_i32 = arith.constant 0 : i32
    %c0_i32_0 = arith.constant 0 : i32
    %c0_i32_1 = arith.constant 0 : i32
    return %c0_i32, %c0_i32_0 : i32, i32
  }
  func.func @transform_3(%arg0: i32, %arg1: memref<8xi32, #tpu.memory_space<smem>>) -> (i32, i32) {
    %c0_i32 = arith.constant 0 : i32
    %c0_i32_0 = arith.constant 0 : i32
    %c0_i32_1 = arith.constant 0 : i32
    return %c0_i32, %c0_i32_0 : i32, i32
  }
  func.func @transform_4(%arg0: i32, %arg1: memref<8xi32, #tpu.memory_space<smem>>) -> (i32, i32) {
    %c0_i32 = arith.constant 0 : i32
    %c0_i32_0 = arith.constant 0 : i32
    %c0_i32_1 = arith.constant 0 : i32
    return %c0_i32, %c0_i32_0 : i32, i32
  }
  func.func @transform_5(%arg0: i32, %arg1: memref<8xi32, #tpu.memory_space<smem>>) -> (i32, i32) {
    %c0_i32 = arith.constant 0 : i32
    %c0_i32_0 = arith.constant 0 : i32
    %c0_i32_1 = arith.constant 0 : i32
    return %c0_i32, %c0_i32_0 : i32, i32
  }
}

</mosaic_0001>

<llo_original>
// kernel: _run_volume.1
$region0: #{_run_volume.1}
  #allocation0 [shape = 'u32[]', space=smem, size = 0x4, offset = 0x4, fixed_abs, tag = 'smem constant byte address 0x4 - core index']
  #allocation1 [shape = 'u32[144,128]{1,0:T(1,128)}', space=vmem, size = 0x12000, scoped, tag = 'internal scratch']
  #allocation2 [shape = 's32[1]{0}', space=sflag, size = 0x4, scoped, tag = 'scoped memory for _run_volume.1']
  #allocation3 [shape = 'u8[512]{0}', space=smem, size = 0x200, scoped, tag = 'prefetched SMEM operand 0']
  %s0 = inlined_call_operand.vmem [shape: s32[8], index: 0, kind: input, shape index: {}]
  %s1 = inlined_call_operand.vmem [shape: f32[128,16], index: 1, kind: input, shape index: {}]
  %s2 = inlined_call_operand.vmem [shape: f32[8,256], index: 2, kind: input, shape index: {}]
  %s3 = inlined_call_operand.vmem [shape: f32[8,128], index: 3, kind: input, shape index: {}]
  %s4 = inlined_call_operand.vmem [shape: bf16[16,128], index: 4, kind: input, shape index: {}]
  %s5 = inlined_call_operand.vmem [shape: bf16[128,256], index: 5, kind: input, shape index: {}]
  %s6 = inlined_call_operand.vmem [shape: f32[8,256], index: 6, kind: output, shape index: {}]
  %s7 = sld [smem:[#allocation0]]
  $region30: #{_run_volume.1} parent=0
    _
  %s9 = ssub.s32 1, %s7
  %s10 = scalar_select 0, %s9, %s7
  %s11 = sshll.u32 %s0, 4
  %s12 = int_to_ptr.vmem [resolvable:$true] %s11
  %14 = dma.vmem_to_smem %s12, 16, [#allocation3], [#allocation2]
  %15 = dma.done [#allocation2], 16
  %16 = sfence
  // Predicated region
  $region2: #{_run_volume.1} parent=0 // pred_check
    _
  $region3: #{_run_volume.1} parent=0 // pred_check_branch
    %18 = sbr.rel (0) target = $region5
  $region4: #{_run_volume.1} parent=0 // pred_region
    _
  $region5: #{_run_volume.1} parent=0 // pred_fallthru
    _
  // Predicated region
  $region6: #{_run_volume.1} parent=0 // pred_check
    _
  $region7: #{_run_volume.1} parent=0 // pred_check_branch
    %20 = sbr.rel (0) target = $region9
  $region8: #{_run_volume.1} parent=0 // pred_region
    _
  $region9: #{_run_volume.1} parent=0 // pred_fallthru
    _
  // Predicated region
  $region10: #{_run_volume.1} parent=0 // pred_check
    _
  $region11: #{_run_volume.1} parent=0 // pred_check_branch
    %22 = sbr.rel (0) target = $region13
  $region12: #{_run_volume.1} parent=0 // pred_region
    _
  $region13: #{_run_volume.1} parent=0 // pred_fallthru
    _
  // Predicated region
  $region14: #{_run_volume.1} parent=0 // pred_check
    _
  $region15: #{_run_volume.1} parent=0 // pred_check_branch
    %24 = sbr.rel (0) target = $region17
  $region16: #{_run_volume.1} parent=0 // pred_region
    _
  $region17: #{_run_volume.1} parent=0 // pred_fallthru
    _
  // Predicated region
  $region18: #{_run_volume.1} parent=0 // pred_check
    _
  $region19: #{_run_volume.1} parent=0 // pred_check_branch
    %26 = sbr.rel (0) target = $region21
  $region20: #{_run_volume.1} parent=0 // pred_region
    _
  $region21: #{_run_volume.1} parent=0 // pred_fallthru
    _
  %v28 = vld [vmem:[%s2] sm:$0xff]
  %v29 = vld [vmem:[%s2 + $0x8] sm:$0xff]
  %v30 = vadd.f32 %v28, %v29
  %31 = vadd.xlane.f32.xlu0 %v30
  %v32 = vpop.xlane.xlu0 %31
  %v33 = vrot.slane %v32, 4
  %v34 = vadd.f32 %v32, %v33
  %v35 = vrot.slane %v34, 2
  %v36 = vadd.f32 %v34, %v35
  %v37 = vrot.slane %v36, 1
  %v38 = vadd.f32 %v36, %v37
  %s39 = vtos %v38
  %v40 = vrcp.pop 2048.0
  %s41 = vtos %v40
  %s42 = smul.f32 %s39, %s41
  %v43 = vstv %s42
  %v44 = vsub.f32 %v28, %v43
  %v45 = vsub.f32 %v29, %v43
  %v46 = vmul.f32 %v44, %v44
  %v47 = vmul.f32 %v45, %v45
  %v48 = vadd.f32 %v46, %v47
  %49 = vadd.xlane.f32.xlu0 %v48
  %v50 = vpop.xlane.xlu0 %49
  %v51 = vrot.slane %v50, 4
  %v52 = vadd.f32 %v50, %v51
  %v53 = vrot.slane %v52, 2
  %v54 = vadd.f32 %v52, %v53
  %v55 = vrot.slane %v54, 1
  %v56 = vadd.f32 %v54, %v55
  %s57 = vtos %v56
  %v58 = vrcp.pop 2048.0
  %s59 = vtos %v58
  %s60 = smul.f32 %s57, %s59
  %s61 = sadd.f32 %s60, 1e-06
  %v62 = vstv %s61
  %v63 = vrsqrt.pop %v62
  %s64 = vtos %v63
  %v65 = vstv %s64
  %v66 = vmul.f32 %v44, %v65
  %v67 = vmul.f32 %v45, %v65
  %v68 = vld [vmem:[%s1] sm:$0xff]
  %v69 = vld [vmem:[%s1 + $0x8] sm:$0xff]
  %v70 = vld [vmem:[%s1 + $0x10] sm:$0xff]
  %v71 = vld [vmem:[%s1 + $0x18] sm:$0xff]
  %v72 = vld [vmem:[%s1 + $0x20] sm:$0xff]
  %v73 = vld [vmem:[%s1 + $0x28] sm:$0xff]
  %v74 = vld [vmem:[%s1 + $0x30] sm:$0xff]
  %v75 = vld [vmem:[%s1 + $0x38] sm:$0xff]
  %v76 = vld [vmem:[%s1 + $0x40] sm:$0xff]
  %v77 = vld [vmem:[%s1 + $0x48] sm:$0xff]
  %v78 = vld [vmem:[%s1 + $0x50] sm:$0xff]
  %v79 = vld [vmem:[%s1 + $0x58] sm:$0xff]
  %v80 = vld [vmem:[%s1 + $0x60] sm:$0xff]
  %v81 = vld [vmem:[%s1 + $0x68] sm:$0xff]
  %v82 = vld [vmem:[%s1 + $0x70] sm:$0xff]
  %v83 = vld [vmem:[%s1 + $0x78] sm:$0xff]
  %v84 = vsub.f32 %v68, %v43
  %v85 = vsub.f32 %v69, %v43
  %v86 = vsub.f32 %v70, %v43
  %v87 = vsub.f32 %v71, %v43
  %v88 = vsub.f32 %v72, %v43
  %v89 = vsub.f32 %v73, %v43
  %v90 = vsub.f32 %v74, %v43
  %v91 = vsub.f32 %v75, %v43
  %v92 = vsub.f32 %v76, %v43
  %v93 = vsub.f32 %v77, %v43
  %v94 = vsub.f32 %v78, %v43
  %v95 = vsub.f32 %v79, %v43
  %v96 = vsub.f32 %v80, %v43
  %v97 = vsub.f32 %v81, %v43
  %v98 = vsub.f32 %v82, %v43
  %v99 = vsub.f32 %v83, %v43
  %v100 = vmul.f32 %v84, %v65
  %v101 = vmul.f32 %v85, %v65
  %v102 = vmul.f32 %v86, %v65
  %v103 = vmul.f32 %v87, %v65
  %v104 = vmul.f32 %v88, %v65
  %v105 = vmul.f32 %v89, %v65
  %v106 = vmul.f32 %v90, %v65
  %v107 = vmul.f32 %v91, %v65
  %v108 = vmul.f32 %v92, %v65
  %v109 = vmul.f32 %v93, %v65
  %v110 = vmul.f32 %v94, %v65
  %v111 = vmul.f32 %v95, %v65
  %v112 = vmul.f32 %v96, %v65
  %v113 = vmul.f32 %v97, %v65
  %v114 = vmul.f32 %v98, %v65
  %v115 = vmul.f32 %v99, %v65
  %v116 = vpack.c.bf16 %v101, %v100
  %v117 = vpack.c.bf16 %v103, %v102
  %v118 = vpack.c.bf16 %v105, %v104
  %v119 = vpack.c.bf16 %v107, %v106
  %v120 = vpack.c.bf16 %v109, %v108
  %v121 = vpack.c.bf16 %v111, %v110
  %v122 = vpack.c.bf16 %v113, %v112
  %v123 = vpack.c.bf16 %v115, %v114
  %v124 = vld [vmem:[%s4] sm:$0xf]
  %v125 = vld [vmem:[%s4 + $0x4] sm:$0xf]
  %v128 = vunpack.c.l.b16 %v124
  %v129 = vunpack.c.l.b16 %v125
  %v130 = vpack.c.b16 %v129, %v128
  %vm132 = vcmask 130048
  %v134 = vsel %vm132, %v116, 0
  %v137 = vsel %vm132, %v117, 0
  %v140 = vsel %vm132, %v118, 0
  %v143 = vsel %vm132, %v119, 0
  %v146 = vsel %vm132, %v120, 0
  %v149 = vsel %vm132, %v121, 0
  %v152 = vsel %vm132, %v122, 0
  %v155 = vsel %vm132, %v123, 0
  %157 = vmatprep.subr.bf16.mxu0 0
  %158 = vmatpush1.bf16.msra.mxu0 %v130
  %159 = vmatprep.subr.bf16.mxu0 0
  %160 = vmatpush1.bf16.msra.mxu0 0
  %161 = vmatprep.subr.bf16.mxu0 0
  %162 = vmatpush1.bf16.msra.mxu0 0
  %163 = vmatprep.subr.bf16.mxu0 0
  %164 = vmatpush1.bf16.msra.mxu0 0
  %165 = vmatprep.subr.bf16.mxu0 0
  %166 = vmatpush1.bf16.msra.mxu0 0
  %167 = vmatprep.subr.bf16.mxu0 0
  %168 = vmatpush1.bf16.msra.mxu0 0
  %169 = vmatprep.subr.bf16.mxu0 0
  %170 = vmatpush1.bf16.msra.mxu0 0
  %171 = vmatprep.subr.bf16.mxu0 0
  %172 = vmatpush1.bf16.msra.mxu0 0
  %173 = vmatprep.subr.bf16.mxu0 0
  %174 = vmatpush1.bf16.msra.mxu0 0
  %175 = vmatprep.subr.bf16.mxu0 0
  %176 = vmatpush1.bf16.msra.mxu0 0
  %177 = vmatprep.subr.bf16.mxu0 0
  %178 = vmatpush1.bf16.msra.mxu0 0
  %179 = vmatprep.subr.bf16.mxu0 0
  %180 = vmatpush1.bf16.msra.mxu0 0
  %181 = vmatprep.subr.bf16.mxu0 0
  %182 = vmatpush1.bf16.msra.mxu0 0
  %183 = vmatprep.subr.bf16.mxu0 0
  %184 = vmatpush1.bf16.msra.mxu0 0
  %185 = vmatprep.subr.bf16.mxu0 0
  %186 = vmatpush1.bf16.msra.mxu0 0
  %187 = vmatprep.subr.bf16.mxu0 0
  %188 = vmatpush1.bf16.msra.mxu0 0
  %189 = vmatprep.mubr.bf16.mxu0 0
  %190 = vmatmul.mubr.bf16.gmra.mrb[0].mxu0 %v134
  %v191 = vpop.f32.mrb[0].mxu0
  %v192 = vadd.f32 0.0, %v191
  %v193 = vpop.f32.mrb[0].mxu0
  %v194 = vpop.f32.mrb[0].mxu0
  %v195 = vadd.f32 0.0, %v194
  %v196 = vpop.f32.mrb[0].mxu0
  %197 = vmatprep.mubr.bf16.mxu0 0
  %198 = vmatmul.mubr.bf16.gmra.mrb[0].mxu0 %v137
  %v199 = vpop.f32.mrb[0].mxu0
  %v200 = vadd.f32 0.0, %v199
  %v201 = vpop.f32.mrb[0].mxu0
  %v202 = vpop.f32.mrb[0].mxu0
  %v203 = vadd.f32 0.0, %v202
  %v204 = vpop.f32.mrb[0].mxu0
  %205 = vmatprep.mubr.bf16.mxu0 0
  %206 = vmatmul.mubr.bf16.gmra.mrb[0].mxu0 %v140
  %v207 = vpop.f32.mrb[0].mxu0
  %v208 = vadd.f32 0.0, %v207
  %v209 = vpop.f32.mrb[0].mxu0
  %v210 = vpop.f32.mrb[0].mxu0
  %v211 = vadd.f32 0.0, %v210
  %v212 = vpop.f32.mrb[0].mxu0
  %213 = vmatprep.mubr.bf16.mxu0 0
  %214 = vmatmul.mubr.bf16.gmra.mrb[0].mxu0 %v143
  %v215 = vpop.f32.mrb[0].mxu0
  %v216 = vadd.f32 0.0, %v215
  %v217 = vpop.f32.mrb[0].mxu0
  %v218 = vpop.f32.mrb[0].mxu0
  %v219 = vadd.f32 0.0, %v218
  %v220 = vpop.f32.mrb[0].mxu0
  %221 = vmatprep.mubr.bf16.mxu0 0
  %222 = vmatmul.mubr.bf16.gmra.mrb[0].mxu0 %v146
  %v223 = vpop.f32.mrb[0].mxu0
  %v224 = vadd.f32 0.0, %v223
  %v225 = vpop.f32.mrb[0].mxu0
  %v226 = vpop.f32.mrb[0].mxu0
  %v227 = vadd.f32 0.0, %v226
  %v228 = vpop.f32.mrb[0].mxu0
  %229 = vmatprep.mubr.bf16.mxu0 0
  %230 = vmatmul.mubr.bf16.gmra.mrb[0].mxu0 %v149
  %v231 = vpop.f32.mrb[0].mxu0
  %v232 = vadd.f32 0.0, %v231
  %v233 = vpop.f32.mrb[0].mxu0
  %v234 = vpop.f32.mrb[0].mxu0
  %v235 = vadd.f32 0.0, %v234
  %v236 = vpop.f32.mrb[0].mxu0
  %237 = vmatprep.mubr.bf16.mxu0 0
  %238 = vmatmul.mubr.bf16.gmra.mrb[0].mxu0 %v152
  %v239 = vpop.f32.mrb[0].mxu0
  %v240 = vadd.f32 0.0, %v239
  %v241 = vpop.f32.mrb[0].mxu0
  %v242 = vpop.f32.mrb[0].mxu0
  %v243 = vadd.f32 0.0, %v242
  %v244 = vpop.f32.mrb[0].mxu0
  %245 = vmatprep.mubr.bf16.mxu0 0
  %246 = vmatmul.mubr.bf16.gmra.mrb[0].mxu0 %v155
  %v247 = vpop.f32.mrb[0].mxu0
  %v248 = vadd.f32 0.0, %v247
  %v249 = vpop.f32.mrb[0].mxu0
  %v250 = vpop.f32.mrb[0].mxu0
  %v251 = vadd.f32 0.0, %v250
  %v252 = vpop.f32.mrb[0].mxu0
  %253 = vdwg.mxu0
  %v254 = vmax.f32 %v192, 0.0
  %v255 = vmax.f32 %v195, 0.0
  %v256 = vmax.f32 %v200, 0.0
  %v257 = vmax.f32 %v203, 0.0
  %v258 = vmax.f32 %v208, 0.0
  %v259 = vmax.f32 %v211, 0.0
  %v260 = vmax.f32 %v216, 0.0
  %v261 = vmax.f32 %v219, 0.0
  %v262 = vmax.f32 %v224, 0.0
  %v263 = vmax.f32 %v227, 0.0
  %v264 = vmax.f32 %v232, 0.0
  %v265 = vmax.f32 %v235, 0.0
  %v266 = vmax.f32 %v240, 0.0
  %v267 = vmax.f32 %v243, 0.0
  %v268 = vmax.f32 %v248, 0.0
  %v269 = vmax.f32 %v251, 0.0
  %v270 = vpack.c.bf16 %v255, %v254
  %v271 = vpack.c.bf16 %v257, %v256
  %v272 = vpack.c.bf16 %v259, %v258
  %v273 = vpack.c.bf16 %v261, %v260
  %v274 = vpack.c.bf16 %v263, %v262
  %v275 = vpack.c.bf16 %v265, %v264
  %v276 = vpack.c.bf16 %v267, %v266
  %v277 = vpack.c.bf16 %v269, %v268
  %278 = vmatprep.subr.bf16.mxu0 0
  %279 = vmatpush1.bf16.xpose.msra.mxu0 %v270
  %280 = vmatprep.subr.bf16.mxu0 0
  %281 = vmatpush1.bf16.xpose.msra.mxu0 0
  %282 = vmatprep.subr.bf16.mxu0 0
  %283 = vmatpush1.bf16.xpose.msra.mxu0 0
  %284 = vmatprep.subr.bf16.mxu0 0
  %285 = vmatpush1.bf16.xpose.msra.mxu0 0
  %286 = vmatprep.subr.bf16.mxu0 0
  %287 = vmatpush1.bf16.xpose.msra.mxu0 0
  %288 = vmatprep.subr.bf16.mxu0 0
  %289 = vmatpush1.bf16.xpose.msra.mxu0 0
  %290 = vmatprep.subr.bf16.mxu0 0
  %291 = vmatpush1.bf16.xpose.msra.mxu0 0
  %292 = vmatprep.subr.bf16.mxu0 0
  %293 = vmatpush1.bf16.xpose.msra.mxu0 0
  %294 = vmatprep.subr.bf16.mxu0 0
  %295 = vmatpush1.bf16.xpose.msra.mxu0 0
  %296 = vmatprep.subr.bf16.mxu0 0
  %297 = vmatpush1.bf16.xpose.msra.mxu0 0
  %298 = vmatprep.subr.bf16.mxu0 0
  %299 = vmatpush1.bf16.xpose.msra.mxu0 0
  %300 = vmatprep.subr.bf16.mxu0 0
  %301 = vmatpush1.bf16.xpose.msra.mxu0 0
  %302 = vmatprep.subr.bf16.mxu0 0
  %303 = vmatpush1.bf16.xpose.msra.mxu0 0
  %304 = vmatprep.subr.bf16.mxu0 0
  %305 = vmatpush1.bf16.xpose.msra.mxu0 0
  %306 = vmatprep.subr.bf16.mxu0 0
  %307 = vmatpush1.bf16.xpose.msra.mxu0 0
  %308 = vmatprep.subr.bf16.mxu0 0
  %309 = vmatpush1.bf16.xpose.msra.mxu0 0
  %310 = vmatprep.mubr.bf16.mxu0 0
  %311 = vmatmul.mubr.bf16.gmra.mrb[0].mxu0 %v270
  %v312 = vpop.f32.mrb[0].mxu0
  %v313 = vadd.f32 0.0, %v312
  %v314 = vpop.f32.mrb[0].mxu0
  %v315 = vpop.f32.mrb[0].mxu0
  %v316 = vadd.f32 0.0, %v315
  %v317 = vpop.f32.mrb[0].mxu0
  %318 = vdwg.mxu0
  %319 = vmatprep.subr.bf16.mxu0 0
  %320 = vmatpush1.bf16.xpose.msra.mxu0 %v271
  %321 = vmatprep.subr.bf16.mxu0 0
  %322 = vmatpush1.bf16.xpose.msra.mxu0 0
  %323 = vmatprep.subr.bf16.mxu0 0
  %324 = vmatpush1.bf16.xpose.msra.mxu0 0
  %325 = vmatprep.subr.bf16.mxu0 0
  %326 = vmatpush1.bf16.xpose.msra.mxu0 0
  %327 = vmatprep.subr.bf16.mxu0 0
  %328 = vmatpush1.bf16.xpose.msra.mxu0 0
  %329 = vmatprep.subr.bf16.mxu0 0
  %330 = vmatpush1.bf16.xpose.msra.mxu0 0
  %331 = vmatprep.subr.bf16.mxu0 0
  %332 = vmatpush1.bf16.xpose.msra.mxu0 0
  %333 = vmatprep.subr.bf16.mxu0 0
  %334 = vmatpush1.bf16.xpose.msra.mxu0 0
  %335 = vmatprep.subr.bf16.mxu0 0
  %336 = vmatpush1.bf16.xpose.msra.mxu0 0
  %337 = vmatprep.subr.bf16.mxu0 0
  %338 = vmatpush1.bf16.xpose.msra.mxu0 0
  %339 = vmatprep.subr.bf16.mxu0 0
  %340 = vmatpush1.bf16.xpose.msra.mxu0 0
  %341 = vmatprep.subr.bf16.mxu0 0
  %342 = vmatpush1.bf16.xpose.msra.mxu0 0
  %343 = vmatprep.subr.bf16.mxu0 0
  %344 = vmatpush1.bf16.xpose.msra.mxu0 0
  %345 = vmatprep.subr.bf16.mxu0 0
  %346 = vmatpush1.bf16.xpose.msra.mxu0 0
  %347 = vmatprep.subr.bf16.mxu0 0
  %348 = vmatpush1.bf16.xpose.msra.mxu0 0
  %349 = vmatprep.subr.bf16.mxu0 0
  %350 = vmatpush1.bf16.xpose.msra.mxu0 0
  %351 = vmatprep.mubr.bf16.mxu0 0
  %352 = vmatmul.mubr.bf16.gmra.mrb[0].mxu0 %v271
  %v353 = vpop.f32.mrb[0].mxu0
  %v354 = vadd.f32 0.0, %v353
  %v355 = vpop.f32.mrb[0].mxu0
  %v356 = vpop.f32.mrb[0].mxu0
  %v357 = vadd.f32 0.0, %v356
  %v358 = vpop.f32.mrb[0].mxu0
  %359 = vdwg.mxu0
  %360 = vmatprep.subr.bf16.mxu0 0
  %361 = vmatpush1.bf16.xpose.msra.mxu0 %v272
  %362 = vmatprep.subr.bf16.mxu0 0
  %363 = vmatpush1.bf16.xpose.msra.mxu0 0
  %364 = vmatprep.subr.bf16.mxu0 0
  %365 = vmatpush1.bf16.xpose.msra.mxu0 0
  %366 = vmatprep.subr.bf16.mxu0 0
  %367 = vmatpush1.bf16.xpose.msra.mxu0 0
  %368 = vmatprep.subr.bf16.mxu0 0
  %369 = vmatpush1.bf16.xpose.msra.mxu0 0
  %370 = vmatprep.subr.bf16.mxu0 0
  %371 = vmatpush1.bf16.xpose.msra.mxu0 0
  %372 = vmatprep.subr.bf16.mxu0 0
  %373 = vmatpush1.bf16.xpose.msra.mxu0 0
  %374 = vmatprep.subr.bf16.mxu0 0
  %375 = vmatpush1.bf16.xpose.msra.mxu0 0
  %376 = vmatprep.subr.bf16.mxu0 0
  %377 = vmatpush1.bf16.xpose.msra.mxu0 0
  %378 = vmatprep.subr.bf16.mxu0 0
  %379 = vmatpush1.bf16.xpose.msra.mxu0 0
  %380 = vmatprep.subr.bf16.mxu0 0
  %381 = vmatpush1.bf16.xpose.msra.mxu0 0
  %382 = vmatprep.subr.bf16.mxu0 0
  %383 = vmatpush1.bf16.xpose.msra.mxu0 0
  %384 = vmatprep.subr.bf16.mxu0 0
  %385 = vmatpush1.bf16.xpose.msra.mxu0 0
  %386 = vmatprep.subr.bf16.mxu0 0
  %387 = vmatpush1.bf16.xpose.msra.mxu0 0
  %388 = vmatprep.subr.bf16.mxu0 0
  %389 = vmatpush1.bf16.xpose.msra.mxu0 0
  %390 = vmatprep.subr.bf16.mxu0 0
  %391 = vmatpush1.bf16.xpose.msra.mxu0 0
  %392 = vmatprep.mubr.bf16.mxu0 0
  %393 = vmatmul.mubr.bf16.gmra.mrb[0].mxu0 %v272
  %v394 = vpop.f32.mrb[0].mxu0
  %v395 = vadd.f32 0.0, %v394
  %v396 = vpop.f32.mrb[0].mxu0
  %v397 = vpop.f32.mrb[0].mxu0
  %v398 = vadd.f32 0.0, %v397
  %v399 = vpop.f32.mrb[0].mxu0
  %400 = vdwg.mxu0
  %401 = vmatprep.subr.bf16.mxu0 0
  %402 = vmatpush1.bf16.xpose.msra.mxu0 %v273
  %403 = vmatprep.subr.bf16.mxu0 0
  %404 = vmatpush1.bf16.xpose.msra.mxu0 0
  %405 = vmatprep.subr.bf16.mxu0 0
  %406 = vmatpush1.bf16.xpose.msra.mxu0 0
  %407 = vmatprep.subr.bf16.mxu0 0
  %408 = vmatpush1.bf16.xpose.msra.mxu0 0
  %409 = vmatprep.subr.bf16.mxu0 0
  %410 = vmatpush1.bf16.xpose.msra.mxu0 0
  %411 = vmatprep.subr.bf16.mxu0 0
  %412 = vmatpush1.bf16.xpose.msra.mxu0 0
  %413 = vmatprep.subr.bf16.mxu0 0
  %414 = vmatpush1.bf16.xpose.msra.mxu0 0
  %415 = vmatprep.subr.bf16.mxu0 0
  %416 = vmatpush1.bf16.xpose.msra.mxu0 0
  %417 = vmatprep.subr.bf16.mxu0 0
  %418 = vmatpush1.bf16.xpose.msra.mxu0 0
  %419 = vmatprep.subr.bf16.mxu0 0
  %420 = vmatpush1.bf16.xpose.msra.mxu0 0
  %421 = vmatprep.subr.bf16.mxu0 0
  %422 = vmatpush1.bf16.xpose.msra.mxu0 0
  %423 = vmatprep.subr.bf16.mxu0 0
  %424 = vmatpush1.bf16.xpose.msra.mxu0 0
  %425 = vmatprep.subr.bf16.mxu0 0
  %426 = vmatpush1.bf16.xpose.msra.mxu0 0
  %427 = vmatprep.subr.bf16.mxu0 0
  %428 = vmatpush1.bf16.xpose.msra.mxu0 0
  %429 = vmatprep.subr.bf16.mxu0 0
  %430 = vmatpush1.bf16.xpose.msra.mxu0 0
  %431 = vmatprep.subr.bf16.mxu0 0
  %432 = vmatpush1.bf16.xpose.msra.mxu0 0
  %433 = vmatprep.mubr.bf16.mxu0 0
  %434 = vmatmul.mubr.bf16.gmra.mrb[0].mxu0 %v273
  %v435 = vpop.f32.mrb[0].mxu0
  %v436 = vadd.f32 0.0, %v435
  %v437 = vpop.f32.mrb[0].mxu0
  %v438 = vpop.f32.mrb[0].mxu0
  %v439 = vadd.f32 0.0, %v438
  %v440 = vpop.f32.mrb[0].mxu0
  %441 = vdwg.mxu0
  %442 = vmatprep.subr.bf16.mxu0 0
  %443 = vmatpush1.bf16.xpose.msra.mxu0 %v274
  %444 = vmatprep.subr.bf16.mxu0 0
  %445 = vmatpush1.bf16.xpose.msra.mxu0 0
  %446 = vmatprep.subr.bf16.mxu0 0
  %447 = vmatpush1.bf16.xpose.msra.mxu0 0
  %448 = vmatprep.subr.bf16.mxu0 0
  %449 = vmatpush1.bf16.xpose.msra.mxu0 0
  %450 = vmatprep.subr.bf16.mxu0 0
  %451 = vmatpush1.bf16.xpose.msra.mxu0 0
  %452 = vmatprep.subr.bf16.mxu0 0
  %453 = vmatpush1.bf16.xpose.msra.mxu0 0
  %454 = vmatprep.subr.bf16.mxu0 0
  %455 = vmatpush1.bf16.xpose.msra.mxu0 0
  %456 = vmatprep.subr.bf16.mxu0 0
  %457 = vmatpush1.bf16.xpose.msra.mxu0 0
  %458 = vmatprep.subr.bf16.mxu0 0
  %459 = vmatpush1.bf16.xpose.msra.mxu0 0
  %460 = vmatprep.subr.bf16.mxu0 0
  %461 = vmatpush1.bf16.xpose.msra.mxu0 0
  %462 = vmatprep.subr.bf16.mxu0 0
  %463 = vmatpush1.bf16.xpose.msra.mxu0 0
  %464 = vmatprep.subr.bf16.mxu0 0
  %465 = vmatpush1.bf16.xpose.msra.mxu0 0
  %466 = vmatprep.subr.bf16.mxu0 0
  %467 = vmatpush1.bf16.xpose.msra.mxu0 0
  %468 = vmatprep.subr.bf16.mxu0 0
  %469 = vmatpush1.bf16.xpose.msra.mxu0 0
  %470 = vmatprep.subr.bf16.mxu0 0
  %471 = vmatpush1.bf16.xpose.msra.mxu0 0
  %472 = vmatprep.subr.bf16.mxu0 0
  %473 = vmatpush1.bf16.xpose.msra.mxu0 0
  %474 = vmatprep.mubr.bf16.mxu0 0
  %475 = vmatmul.mubr.bf16.gmra.mrb[0].mxu0 %v274
  %v476 = vpop.f32.mrb[0].mxu0
  %v477 = vadd.f32 0.0, %v476
  %v478 = vpop.f32.mrb[0].mxu0
  %v479 = vpop.f32.mrb[0].mxu0
  %v480 = vadd.f32 0.0, %v479
  %v481 = vpop.f32.mrb[0].mxu0
  %482 = vdwg.mxu0
  %483 = vmatprep.subr.bf16.mxu0 0
  %484 = vmatpush1.bf16.xpose.msra.mxu0 %v275
  %485 = vmatprep.subr.bf16.mxu0 0
  %486 = vmatpush1.bf16.xpose.msra.mxu0 0
  %487 = vmatprep.subr.bf16.mxu0 0
  %488 = vmatpush1.bf16.xpose.msra.mxu0 0
  %489 = vmatprep.subr.bf16.mxu0 0
  %490 = vmatpush1.bf16.xpose.msra.mxu0 0
  %491 = vmatprep.subr.bf16.mxu0 0
  %492 = vmatpush1.bf16.xpose.msra.mxu0 0
  %493 = vmatprep.subr.bf16.mxu0 0
  %494 = vmatpush1.bf16.xpose.msra.mxu0 0
  %495 = vmatprep.subr.bf16.mxu0 0
  %496 = vmatpush1.bf16.xpose.msra.mxu0 0
  %497 = vmatprep.subr.bf16.mxu0 0
  %498 = vmatpush1.bf16.xpose.msra.mxu0 0
  %499 = vmatprep.subr.bf16.mxu0 0
  %500 = vmatpush1.bf16.xpose.msra.mxu0 0
  %501 = vmatprep.subr.bf16.mxu0 0
  %502 = vmatpush1.bf16.xpose.msra.mxu0 0
  %503 = vmatprep.subr.bf16.mxu0 0
  %504 = vmatpush1.bf16.xpose.msra.mxu0 0
  %505 = vmatprep.subr.bf16.mxu0 0
  %506 = vmatpush1.bf16.xpose.msra.mxu0 0
  %507 = vmatprep.subr.bf16.mxu0 0
  %508 = vmatpush1.bf16.xpose.msra.mxu0 0
  %509 = vmatprep.subr.bf16.mxu0 0
  %510 = vmatpush1.bf16.xpose.msra.mxu0 0
  %511 = vmatprep.subr.bf16.mxu0 0
  %512 = vmatpush1.bf16.xpose.msra.mxu0 0
  %513 = vmatprep.subr.bf16.mxu0 0
  %514 = vmatpush1.bf16.xpose.msra.mxu0 0
  %515 = vmatprep.mubr.bf16.mxu0 0
  %516 = vmatmul.mubr.bf16.gmra.mrb[0].mxu0 %v275
  %v517 = vpop.f32.mrb[0].mxu0
  %v518 = vadd.f32 0.0, %v517
  %v519 = vpop.f32.mrb[0].mxu0
  %v520 = vpop.f32.mrb[0].mxu0
  %v521 = vadd.f32 0.0, %v520
  %v522 = vpop.f32.mrb[0].mxu0
  %523 = vdwg.mxu0
  %524 = vmatprep.subr.bf16.mxu0 0
  %525 = vmatpush1.bf16.xpose.msra.mxu0 %v276
  %526 = vmatprep.subr.bf16.mxu0 0
  %527 = vmatpush1.bf16.xpose.msra.mxu0 0
  %528 = vmatprep.subr.bf16.mxu0 0
  %529 = vmatpush1.bf16.xpose.msra.mxu0 0
  %530 = vmatprep.subr.bf16.mxu0 0
  %531 = vmatpush1.bf16.xpose.msra.mxu0 0
  %532 = vmatprep.subr.bf16.mxu0 0
  %533 = vmatpush1.bf16.xpose.msra.mxu0 0
  %534 = vmatprep.subr.bf16.mxu0 0
  %535 = vmatpush1.bf16.xpose.msra.mxu0 0
  %536 = vmatprep.subr.bf16.mxu0 0
  %537 = vmatpush1.bf16.xpose.msra.mxu0 0
  %538 = vmatprep.subr.bf16.mxu0 0
  %539 = vmatpush1.bf16.xpose.msra.mxu0 0
  %540 = vmatprep.subr.bf16.mxu0 0
  %541 = vmatpush1.bf16.xpose.msra.mxu0 0
  %542 = vmatprep.subr.bf16.mxu0 0
  %543 = vmatpush1.bf16.xpose.msra.mxu0 0
  %544 = vmatprep.subr.bf16.mxu0 0
  %545 = vmatpush1.bf16.xpose.msra.mxu0 0
  %546 = vmatprep.subr.bf16.mxu0 0
  %547 = vmatpush1.bf16.xpose.msra.mxu0 0
  %548 = vmatprep.subr.bf16.mxu0 0
  %549 = vmatpush1.bf16.xpose.msra.mxu0 0
  %550 = vmatprep.subr.bf16.mxu0 0
  %551 = vmatpush1.bf16.xpose.msra.mxu0 0
  %552 = vmatprep.subr.bf16.mxu0 0
  %553 = vmatpush1.bf16.xpose.msra.mxu0 0
  %554 = vmatprep.subr.bf16.mxu0 0
  %555 = vmatpush1.bf16.xpose.msra.mxu0 0
  %556 = vmatprep.mubr.bf16.mxu0 0
  %557 = vmatmul.mubr.bf16.gmra.mrb[0].mxu0 %v276
  %v558 = vpop.f32.mrb[0].mxu0
  %v559 = vadd.f32 0.0, %v558
  %v560 = vpop.f32.mrb[0].mxu0
  %v561 = vpop.f32.mrb[0].mxu0
  %v562 = vadd.f32 0.0, %v561
  %v563 = vpop.f32.mrb[0].mxu0
  %564 = vdwg.mxu0
  %565 = vmatprep.subr.bf16.mxu0 0
  %566 = vmatpush1.bf16.xpose.msra.mxu0 %v277
  %567 = vmatprep.subr.bf16.mxu0 0
  %568 = vmatpush1.bf16.xpose.msra.mxu0 0
  %569 = vmatprep.subr.bf16.mxu0 0
  %570 = vmatpush1.bf16.xpose.msra.mxu0 0
  %571 = vmatprep.subr.bf16.mxu0 0
  %572 = vmatpush1.bf16.xpose.msra.mxu0 0
  %573 = vmatprep.subr.bf16.mxu0 0
  %574 = vmatpush1.bf16.xpose.msra.mxu0 0
  %575 = vmatprep.subr.bf16.mxu0 0
  %576 = vmatpush1.bf16.xpose.msra.mxu0 0
  %577 = vmatprep.subr.bf16.mxu0 0
  %578 = vmatpush1.bf16.xpose.msra.mxu0 0
  %579 = vmatprep.subr.bf16.mxu0 0
  %580 = vmatpush1.bf16.xpose.msra.mxu0 0
  %581 = vmatprep.subr.bf16.mxu0 0
  %582 = vmatpush1.bf16.xpose.msra.mxu0 0
  %583 = vmatprep.subr.bf16.mxu0 0
  %584 = vmatpush1.bf16.xpose.msra.mxu0 0
  %585 = vmatprep.subr.bf16.mxu0 0
  %586 = vmatpush1.bf16.xpose.msra.mxu0 0
  %587 = vmatprep.subr.bf16.mxu0 0
  %588 = vmatpush1.bf16.xpose.msra.mxu0 0
  %589 = vmatprep.subr.bf16.mxu0 0
  %590 = vmatpush1.bf16.xpose.msra.mxu0 0
  %591 = vmatprep.subr.bf16.mxu0 0
  %592 = vmatpush1.bf16.xpose.msra.mxu0 0
  %593 = vmatprep.subr.bf16.mxu0 0
  %594 = vmatpush1.bf16.xpose.msra.mxu0 0
  %595 = vmatprep.subr.bf16.mxu0 0
  %596 = vmatpush1.bf16.xpose.msra.mxu0 0
  %597 = vmatprep.mubr.bf16.mxu0 0
  %598 = vmatmul.mubr.bf16.gmra.mrb[0].mxu0 %v277
  %v599 = vpop.f32.mrb[0].mxu0
  %v600 = vadd.f32 0.0, %v599
  %v601 = vpop.f32.mrb[0].mxu0
  %v602 = vpop.f32.mrb[0].mxu0
  %v603 = vadd.f32 0.0, %v602
  %v604 = vpop.f32.mrb[0].mxu0
  %605 = vdwg.mxu0
  %v606 = vmul.f32 %v313, 0.088388346
  %v607 = vmul.f32 %v316, 0.088388346
  %v608 = vmul.f32 %v354, 0.088388346
  %v609 = vmul.f32 %v357, 0.088388346
  %v610 = vmul.f32 %v395, 0.088388346
  %v611 = vmul.f32 %v398, 0.088388346
  %v612 = vmul.f32 %v436, 0.088388346
  %v613 = vmul.f32 %v439, 0.088388346
  %v614 = vmul.f32 %v477, 0.088388346
  %v615 = vmul.f32 %v480, 0.088388346
  %v616 = vmul.f32 %v518, 0.088388346
  %v617 = vmul.f32 %v521, 0.088388346
  %v618 = vmul.f32 %v559, 0.088388346
  %v619 = vmul.f32 %v562, 0.088388346
  %v620 = vmul.f32 %v600, 0.088388346
  %v621 = vmul.f32 %v603, 0.088388346
  %v622 = vsel %vm132, %v606, -inf
  %623 = vmax.xlane.f32.xlu0 %v622
  %v624 = vpop.xlane.xlu0 %623
  %v625 = vsel %vm132, %v607, -inf
  %626 = vmax.xlane.f32.xlu0 %v625
  %v627 = vpop.xlane.xlu0 %626
  %v628 = vsel %vm132, %v608, -inf
  %629 = vmax.xlane.f32.xlu0 %v628
  %v630 = vpop.xlane.xlu0 %629
  %v631 = vsel %vm132, %v609, -inf
  %632 = vmax.xlane.f32.xlu0 %v631
  %v633 = vpop.xlane.xlu0 %632
  %v634 = vsel %vm132, %v610, -inf
  %635 = vmax.xlane.f32.xlu0 %v634
  %v636 = vpop.xlane.xlu0 %635
  %v637 = vsel %vm132, %v611, -inf
  %638 = vmax.xlane.f32.xlu0 %v637
  %v639 = vpop.xlane.xlu0 %638
  %v640 = vsel %vm132, %v612, -inf
  %641 = vmax.xlane.f32.xlu0 %v640
  %v642 = vpop.xlane.xlu0 %641
  %v643 = vsel %vm132, %v613, -inf
  %644 = vmax.xlane.f32.xlu0 %v643
  %v645 = vpop.xlane.xlu0 %644
  %v646 = vsel %vm132, %v614, -inf
  %647 = vmax.xlane.f32.xlu0 %v646
  %v648 = vpop.xlane.xlu0 %647
  %v649 = vsel %vm132, %v615, -inf
  %650 = vmax.xlane.f32.xlu0 %v649
  %v651 = vpop.xlane.xlu0 %650
  %v652 = vsel %vm132, %v616, -inf
  %653 = vmax.xlane.f32.xlu0 %v652
  %v654 = vpop.xlane.xlu0 %653
  %v655 = vsel %vm132, %v617, -inf
  %656 = vmax.xlane.f32.xlu0 %v655
  %v657 = vpop.xlane.xlu0 %656
  %v658 = vsel %vm132, %v618, -inf
  %659 = vmax.xlane.f32.xlu0 %v658
  %v660 = vpop.xlane.xlu0 %659
  %v661 = vsel %vm132, %v619, -inf
  %662 = vmax.xlane.f32.xlu0 %v661
  %v663 = vpop.xlane.xlu0 %662
  %v664 = vsel %vm132, %v620, -inf
  %665 = vmax.xlane.f32.xlu0 %v664
  %v666 = vpop.xlane.xlu0 %665
  %v667 = vsel %vm132, %v621, -inf
  %668 = vmax.xlane.f32.xlu0 %v667
  %v669 = vpop.xlane.xlu0 %668
  %v670 = vsub.f32 %v606, %v624
  %v671 = vsub.f32 %v607, %v627
  %v672 = vsub.f32 %v608, %v630
  %v673 = vsub.f32 %v609, %v633
  %v674 = vsub.f32 %v610, %v636
  %v675 = vsub.f32 %v611, %v639
  %v676 = vsub.f32 %v612, %v642
  %v677 = vsub.f32 %v613, %v645
  %v678 = vsub.f32 %v614, %v648
  %v679 = vsub.f32 %v615, %v651
  %v680 = vsub.f32 %v616, %v654
  %v681 = vsub.f32 %v617, %v657
  %v682 = vsub.f32 %v618, %v660
  %v683 = vsub.f32 %v619, %v663
  %v684 = vsub.f32 %v620, %v666
  %v685 = vsub.f32 %v621, %v669
  %v686 = vmul.f32 %v670, 1.442695
  %v687 = vpow.pop %v686
  %v688 = vmul.f32 %v671, 1.442695
  %v689 = vpow.pop %v688
  %v690 = vmul.f32 %v672, 1.442695
  %v691 = vpow.pop %v690
  %v692 = vmul.f32 %v673, 1.442695
  %v693 = vpow.pop %v692
  %v694 = vmul.f32 %v674, 1.442695
  %v695 = vpow.pop %v694
  %v696 = vmul.f32 %v675, 1.442695
  %v697 = vpow.pop %v696
  %v698 = vmul.f32 %v676, 1.442695
  %v699 = vpow.pop %v698
  %v700 = vmul.f32 %v677, 1.442695
  %v701 = vpow.pop %v700
  %v702 = vmul.f32 %v678, 1.442695
  %v703 = vpow.pop %v702
  %v704 = vmul.f32 %v679, 1.442695
  %v705 = vpow.pop %v704
  %v706 = vmul.f32 %v680, 1.442695
  %v707 = vpow.pop %v706
  %v708 = vmul.f32 %v681, 1.442695
  %v709 = vpow.pop %v708
  %v710 = vmul.f32 %v682, 1.442695
  %v711 = vpow.pop %v710
  %v712 = vmul.f32 %v683, 1.442695
  %v713 = vpow.pop %v712
  %v714 = vmul.f32 %v684, 1.442695
  %v715 = vpow.pop %v714
  %v716 = vmul.f32 %v685, 1.442695
  %v717 = vpow.pop %v716
  %v718 = vsel %vm132, %v687, 0.0
  %719 = vadd.xlane.f32.xlu0 %v718
  %v720 = vpop.xlane.xlu0 %719
  %v721 = vsel %vm132, %v689, 0.0
  %722 = vadd.xlane.f32.xlu0 %v721
  %v723 = vpop.xlane.xlu0 %722
  %v724 = vsel %vm132, %v691, 0.0
  %725 = vadd.xlane.f32.xlu0 %v724
  %v726 = vpop.xlane.xlu0 %725
  %v727 = vsel %vm132, %v693, 0.0
  %728 = vadd.xlane.f32.xlu0 %v727
  %v729 = vpop.xlane.xlu0 %728
  %v730 = vsel %vm132, %v695, 0.0
  %731 = vadd.xlane.f32.xlu0 %v730
  %v732 = vpop.xlane.xlu0 %731
  %v733 = vsel %vm132, %v697, 0.0
  %734 = vadd.xlane.f32.xlu0 %v733
  %v735 = vpop.xlane.xlu0 %734
  %v736 = vsel %vm132, %v699, 0.0
  %737 = vadd.xlane.f32.xlu0 %v736
  %v738 = vpop.xlane.xlu0 %737
  %v739 = vsel %vm132, %v701, 0.0
  %740 = vadd.xlane.f32.xlu0 %v739
  %v741 = vpop.xlane.xlu0 %740
  %v742 = vsel %vm132, %v703, 0.0
  %743 = vadd.xlane.f32.xlu0 %v742
  %v744 = vpop.xlane.xlu0 %743
  %v745 = vsel %vm132, %v705, 0.0
  %746 = vadd.xlane.f32.xlu0 %v745
  %v747 = vpop.xlane.xlu0 %746
  %v748 = vsel %vm132, %v707, 0.0
  %749 = vadd.xlane.f32.xlu0 %v748
  %v750 = vpop.xlane.xlu0 %749
  %v751 = vsel %vm132, %v709, 0.0
  %752 = vadd.xlane.f32.xlu0 %v751
  %v753 = vpop.xlane.xlu0 %752
  %v754 = vsel %vm132, %v711, 0.0
  %755 = vadd.xlane.f32.xlu0 %v754
  %v756 = vpop.xlane.xlu0 %755
  %v757 = vsel %vm132, %v713, 0.0
  %758 = vadd.xlane.f32.xlu0 %v757
  %v759 = vpop.xlane.xlu0 %758
  %v760 = vsel %vm132, %v715, 0.0
  %761 = vadd.xlane.f32.xlu0 %v760
  %v762 = vpop.xlane.xlu0 %761
  %v763 = vsel %vm132, %v717, 0.0
  %764 = vadd.xlane.f32.xlu0 %v763
  %v765 = vpop.xlane.xlu0 %764
  %v766 = vrcp.pop %v720
  %v767 = vrcp.pop %v723
  %v768 = vrcp.pop %v726
  %v769 = vrcp.pop %v729
  %v770 = vrcp.pop %v732
  %v771 = vrcp.pop %v735
  %v772 = vrcp.pop %v738
  %v773 = vrcp.pop %v741
  %v774 = vrcp.pop %v744
  %v775 = vrcp.pop %v747
  %v776 = vrcp.pop %v750
  %v777 = vrcp.pop %v753
  %v778 = vrcp.pop %v756
  %v779 = vrcp.pop %v759
  %v780 = vrcp.pop %v762
  %v781 = vrcp.pop %v765
  %v782 = vmul.f32 %v687, %v766
  %v783 = vmul.f32 %v689, %v767
  %v784 = vmul.f32 %v691, %v768
  %v785 = vmul.f32 %v693, %v769
  %v786 = vmul.f32 %v695, %v770
  %v787 = vmul.f32 %v697, %v771
  %v788 = vmul.f32 %v699, %v772
  %v789 = vmul.f32 %v701, %v773
  %v790 = vmul.f32 %v703, %v774
  %v791 = vmul.f32 %v705, %v775
  %v792 = vmul.f32 %v707, %v776
  %v793 = vmul.f32 %v709, %v777
  %v794 = vmul.f32 %v711, %v778
  %v795 = vmul.f32 %v713, %v779
  %v796 = vmul.f32 %v715, %v780
  %v797 = vmul.f32 %v717, %v781
  %v798 = vpack.c.bf16 %v783, %v782
  %v799 = vpack.c.bf16 %v785, %v784
  %v800 = vpack.c.bf16 %v787, %v786
  %v801 = vpack.c.bf16 %v789, %v788
  %v802 = vpack.c.bf16 %v791, %v790
  %v803 = vpack.c.bf16 %v793, %v792
  %v804 = vpack.c.bf16 %v795, %v794
  %v805 = vpack.c.bf16 %v797, %v796
  %v807 = vsel %vm132, %v798, 0
  %809 = vmatprep.subr.bf16.mxu0 0
  %810 = vmatpush1.bf16.msra.mxu0 %v270
  %811 = vmatprep.subr.bf16.mxu0 0
  %812 = vmatpush1.bf16.msra.mxu0 0
  %813 = vmatprep.subr.bf16.mxu0 0
  %814 = vmatpush1.bf16.msra.mxu0 0
  %815 = vmatprep.subr.bf16.mxu0 0
  %816 = vmatpush1.bf16.msra.mxu0 0
  %817 = vmatprep.subr.bf16.mxu0 0
  %818 = vmatpush1.bf16.msra.mxu0 0
  %819 = vmatprep.subr.bf16.mxu0 0
  %820 = vmatpush1.bf16.msra.mxu0 0
  %821 = vmatprep.subr.bf16.mxu0 0
  %822 = vmatpush1.bf16.msra.mxu0 0
  %823 = vmatprep.subr.bf16.mxu0 0
  %824 = vmatpush1.bf16.msra.mxu0 0
  %825 = vmatprep.subr.bf16.mxu0 0
  %826 = vmatpush1.bf16.msra.mxu0 0
  %827 = vmatprep.subr.bf16.mxu0 0
  %828 = vmatpush1.bf16.msra.mxu0 0
  %829 = vmatprep.subr.bf16.mxu0 0
  %830 = vmatpush1.bf16.msra.mxu0 0
  %831 = vmatprep.subr.bf16.mxu0 0
  %832 = vmatpush1.bf16.msra.mxu0 0
  %833 = vmatprep.subr.bf16.mxu0 0
  %834 = vmatpush1.bf16.msra.mxu0 0
  %835 = vmatprep.subr.bf16.mxu0 0
  %836 = vmatpush1.bf16.msra.mxu0 0
  %837 = vmatprep.subr.bf16.mxu0 0
  %838 = vmatpush1.bf16.msra.mxu0 0
  %839 = vmatprep.subr.bf16.mxu0 0
  %840 = vmatpush1.bf16.msra.mxu0 0
  %841 = vmatprep.mubr.bf16.mxu0 0
  %842 = vmatmul.mubr.bf16.gmra.mrb[0].mxu0 %v807
  %v843 = vpop.f32.mrb[0].mxu0
  %v844 = vadd.f32 0.0, %v843
  %v845 = vpop.f32.mrb[0].mxu0
  %v846 = vpop.f32.mrb[0].mxu0
  %v847 = vadd.f32 0.0, %v846
  %v848 = vpop.f32.mrb[0].mxu0
  %849 = vdwg.mxu0
  %v851 = vsel %vm132, %v799, 0
  %853 = vmatprep.subr.bf16.mxu0 0
  %854 = vmatpush1.bf16.msra.mxu0 %v271
  %855 = vmatprep.subr.bf16.mxu0 0
  %856 = vmatpush1.bf16.msra.mxu0 0
  %857 = vmatprep.subr.bf16.mxu0 0
  %858 = vmatpush1.bf16.msra.mxu0 0
  %859 = vmatprep.subr.bf16.mxu0 0
  %860 = vmatpush1.bf16.msra.mxu0 0
  %861 = vmatprep.subr.bf16.mxu0 0
  %862 = vmatpush1.bf16.msra.mxu0 0
  %863 = vmatprep.subr.bf16.mxu0 0
  %864 = vmatpush1.bf16.msra.mxu0 0
  %865 = vmatprep.subr.bf16.mxu0 0
  %866 = vmatpush1.bf16.msra.mxu0 0
  %867 = vmatprep.subr.bf16.mxu0 0
  %868 = vmatpush1.bf16.msra.mxu0 0
  %869 = vmatprep.subr.bf16.mxu0 0
  %870 = vmatpush1.bf16.msra.mxu0 0
  %871 = vmatprep.subr.bf16.mxu0 0
  %872 = vmatpush1.bf16.msra.mxu0 0
  %873 = vmatprep.subr.bf16.mxu0 0
  %874 = vmatpush1.bf16.msra.mxu0 0
  %875 = vmatprep.subr.bf16.mxu0 0
  %876 = vmatpush1.bf16.msra.mxu0 0
  %877 = vmatprep.subr.bf16.mxu0 0
  %878 = vmatpush1.bf16.msra.mxu0 0
  %879 = vmatprep.subr.bf16.mxu0 0
  %880 = vmatpush1.bf16.msra.mxu0 0
  %881 = vmatprep.subr.bf16.mxu0 0
  %882 = vmatpush1.bf16.msra.mxu0 0
  %883 = vmatprep.subr.bf16.mxu0 0
  %884 = vmatpush1.bf16.msra.mxu0 0
  %885 = vmatprep.mubr.bf16.mxu0 0
  %886 = vmatmul.mubr.bf16.gmra.mrb[0].mxu0 %v851
  %v887 = vpop.f32.mrb[0].mxu0
  %v888 = vadd.f32 0.0, %v887
  %v889 = vpop.f32.mrb[0].mxu0
  %v890 = vpop.f32.mrb[0].mxu0
  %v891 = vadd.f32 0.0, %v890
  %v892 = vpop.f32.mrb[0].mxu0
  %893 = vdwg.mxu0
  %v895 = vsel %vm132, %v800, 0
  %897 = vmatprep.subr.bf16.mxu0 0
  %898 = vmatpush1.bf16.msra.mxu0 %v272
  %899 = vmatprep.subr.bf16.mxu0 0
  %900 = vmatpush1.bf16.msra.mxu0 0
  %901 = vmatprep.subr.bf16.mxu0 0
  %902 = vmatpush1.bf16.msra.mxu0 0
  %903 = vmatprep.subr.bf16.mxu0 0
  %904 = vmatpush1.bf16.msra.mxu0 0
  %905 = vmatprep.subr.bf16.mxu0 0
  %906 = vmatpush1.bf16.msra.mxu0 0
  %907 = vmatprep.subr.bf16.mxu0 0
  %908 = vmatpush1.bf16.msra.mxu0 0
  %909 = vmatprep.subr.bf16.mxu0 0
  %910 = vmatpush1.bf16.msra.mxu0 0
  %911 = vmatprep.subr.bf16.mxu0 0
  %912 = vmatpush1.bf16.msra.mxu0 0
  %913 = vmatprep.subr.bf16.mxu0 0
  %914 = vmatpush1.bf16.msra.mxu0 0
  %915 = vmatprep.subr.bf16.mxu0 0
  %916 = vmatpush1.bf16.msra.mxu0 0
  %917 = vmatprep.subr.bf16.mxu0 0
  %918 = vmatpush1.bf16.msra.mxu0 0
  %919 = vmatprep.subr.bf16.mxu0 0
  %920 = vmatpush1.bf16.msra.mxu0 0
  %921 = vmatprep.subr.bf16.mxu0 0
  %922 = vmatpush1.bf16.msra.mxu0 0
  %923 = vmatprep.subr.bf16.mxu0 0
  %924 = vmatpush1.bf16.msra.mxu0 0
  %925 = vmatprep.subr.bf16.mxu0 0
  %926 = vmatpush1.bf16.msra.mxu0 0
  %927 = vmatprep.subr.bf16.mxu0 0
  %928 = vmatpush1.bf16.msra.mxu0 0
  %929 = vmatprep.mubr.bf16.mxu0 0
  %930 = vmatmul.mubr.bf16.gmra.mrb[0].mxu0 %v895
  %v931 = vpop.f32.mrb[0].mxu0
  %v932 = vadd.f32 0.0, %v931
  %v933 = vpop.f32.mrb[0].mxu0
  %v934 = vpop.f32.mrb[0].mxu0
  %v935 = vadd.f32 0.0, %v934
  %v936 = vpop.f32.mrb[0].mxu0
  %937 = vdwg.mxu0
  %v939 = vsel %vm132, %v801, 0
  %941 = vmatprep.subr.bf16.mxu0 0
  %942 = vmatpush1.bf16.msra.mxu0 %v273
  %943 = vmatprep.subr.bf16.mxu0 0
  %944 = vmatpush1.bf16.msra.mxu0 0
  %945 = vmatprep.subr.bf16.mxu0 0
  %946 = vmatpush1.bf16.msra.mxu0 0
  %947 = vmatprep.subr.bf16.mxu0 0
  %948 = vmatpush1.bf16.msra.mxu0 0
  %949 = vmatprep.subr.bf16.mxu0 0
  %950 = vmatpush1.bf16.msra.mxu0 0
  %951 = vmatprep.subr.bf16.mxu0 0
  %952 = vmatpush1.bf16.msra.mxu0 0
  %953 = vmatprep.subr.bf16.mxu0 0
  %954 = vmatpush1.bf16.msra.mxu0 0
  %955 = vmatprep.subr.bf16.mxu0 0
  %956 = vmatpush1.bf16.msra.mxu0 0
  %957 = vmatprep.subr.bf16.mxu0 0
  %958 = vmatpush1.bf16.msra.mxu0 0
  %959 = vmatprep.subr.bf16.mxu0 0
  %960 = vmatpush1.bf16.msra.mxu0 0
  %961 = vmatprep.subr.bf16.mxu0 0
  %962 = vmatpush1.bf16.msra.mxu0 0
  %963 = vmatprep.subr.bf16.mxu0 0
  %964 = vmatpush1.bf16.msra.mxu0 0
  %965 = vmatprep.subr.bf16.mxu0 0
  %966 = vmatpush1.bf16.msra.mxu0 0
  %967 = vmatprep.subr.bf16.mxu0 0
  %968 = vmatpush1.bf16.msra.mxu0 0
  %969 = vmatprep.subr.bf16.mxu0 0
  %970 = vmatpush1.bf16.msra.mxu0 0
  %971 = vmatprep.subr.bf16.mxu0 0
  %972 = vmatpush1.bf16.msra.mxu0 0
  %973 = vmatprep.mubr.bf16.mxu0 0
  %974 = vmatmul.mubr.bf16.gmra.mrb[0].mxu0 %v939
  %v975 = vpop.f32.mrb[0].mxu0
  %v976 = vadd.f32 0.0, %v975
  %v977 = vpop.f32.mrb[0].mxu0
  %v978 = vpop.f32.mrb[0].mxu0
  %v979 = vadd.f32 0.0, %v978
  %v980 = vpop.f32.mrb[0].mxu0
  %981 = vdwg.mxu0
  %v983 = vsel %vm132, %v802, 0
  %985 = vmatprep.subr.bf16.mxu0 0
  %986 = vmatpush1.bf16.msra.mxu0 %v274
  %987 = vmatprep.subr.bf16.mxu0 0
  %988 = vmatpush1.bf16.msra.mxu0 0
  %989 = vmatprep.subr.bf16.mxu0 0
  %990 = vmatpush1.bf16.msra.mxu0 0
  %991 = vmatprep.subr.bf16.mxu0 0
  %992 = vmatpush1.bf16.msra.mxu0 0
  %993 = vmatprep.subr.bf16.mxu0 0
  %994 = vmatpush1.bf16.msra.mxu0 0
  %995 = vmatprep.subr.bf16.mxu0 0
  %996 = vmatpush1.bf16.msra.mxu0 0
  %997 = vmatprep.subr.bf16.mxu0 0
  %998 = vmatpush1.bf16.msra.mxu0 0
  %999 = vmatprep.subr.bf16.mxu0 0
  %1000 = vmatpush1.bf16.msra.mxu0 0
  %1001 = vmatprep.subr.bf16.mxu0 0
  %1002 = vmatpush1.bf16.msra.mxu0 0
  %1003 = vmatprep.subr.bf16.mxu0 0
  %1004 = vmatpush1.bf16.msra.mxu0 0
  %1005 = vmatprep.subr.bf16.mxu0 0
  %1006 = vmatpush1.bf16.msra.mxu0 0
  %1007 = vmatprep.subr.bf16.mxu0 0
  %1008 = vmatpush1.bf16.msra.mxu0 0
  %1009 = vmatprep.subr.bf16.mxu0 0
  %1010 = vmatpush1.bf16.msra.mxu0 0
  %1011 = vmatprep.subr.bf16.mxu0 0
  %1012 = vmatpush1.bf16.msra.mxu0 0
  %1013 = vmatprep.subr.bf16.mxu0 0
  %1014 = vmatpush1.bf16.msra.mxu0 0
  %1015 = vmatprep.subr.bf16.mxu0 0
  %1016 = vmatpush1.bf16.msra.mxu0 0
  %1017 = vmatprep.mubr.bf16.mxu0 0
  %1018 = vmatmul.mubr.bf16.gmra.mrb[0].mxu0 %v983
  %v1019 = vpop.f32.mrb[0].mxu0
  %v1020 = vadd.f32 0.0, %v1019
  %v1021 = vpop.f32.mrb[0].mxu0
  %v1022 = vpop.f32.mrb[0].mxu0
  %v1023 = vadd.f32 0.0, %v1022
  %v1024 = vpop.f32.mrb[0].mxu0
  %1025 = vdwg.mxu0
  %v1027 = vsel %vm132, %v803, 0
  %1029 = vmatprep.subr.bf16.mxu0 0
  %1030 = vmatpush1.bf16.msra.mxu0 %v275
  %1031 = vmatprep.subr.bf16.mxu0 0
  %1032 = vmatpush1.bf16.msra.mxu0 0
  %1033 = vmatprep.subr.bf16.mxu0 0
  %1034 = vmatpush1.bf16.msra.mxu0 0
  %1035 = vmatprep.subr.bf16.mxu0 0
  %1036 = vmatpush1.bf16.msra.mxu0 0
  %1037 = vmatprep.subr.bf16.mxu0 0
  %1038 = vmatpush1.bf16.msra.mxu0 0
  %1039 = vmatprep.subr.bf16.mxu0 0
  %1040 = vmatpush1.bf16.msra.mxu0 0
  %1041 = vmatprep.subr.bf16.mxu0 0
  %1042 = vmatpush1.bf16.msra.mxu0 0
  %1043 = vmatprep.subr.bf16.mxu0 0
  %1044 = vmatpush1.bf16.msra.mxu0 0
  %1045 = vmatprep.subr.bf16.mxu0 0
  %1046 = vmatpush1.bf16.msra.mxu0 0
  %1047 = vmatprep.subr.bf16.mxu0 0
  %1048 = vmatpush1.bf16.msra.mxu0 0
  %1049 = vmatprep.subr.bf16.mxu0 0
  %1050 = vmatpush1.bf16.msra.mxu0 0
  %1051 = vmatprep.subr.bf16.mxu0 0
  %1052 = vmatpush1.bf16.msra.mxu0 0
  %1053 = vmatprep.subr.bf16.mxu0 0
  %1054 = vmatpush1.bf16.msra.mxu0 0
  %1055 = vmatprep.subr.bf16.mxu0 0
  %1056 = vmatpush1.bf16.msra.mxu0 0
  %1057 = vmatprep.subr.bf16.mxu0 0
  %1058 = vmatpush1.bf16.msra.mxu0 0
  %1059 = vmatprep.subr.bf16.mxu0 0
  %1060 = vmatpush1.bf16.msra.mxu0 0
  %1061 = vmatprep.mubr.bf16.mxu0 0
  %1062 = vmatmul.mubr.bf16.gmra.mrb[0].mxu0 %v1027
  %v1063 = vpop.f32.mrb[0].mxu0
  %v1064 = vadd.f32 0.0, %v1063
  %v1065 = vpop.f32.mrb[0].mxu0
  %v1066 = vpop.f32.mrb[0].mxu0
  %v1067 = vadd.f32 0.0, %v1066
  %v1068 = vpop.f32.mrb[0].mxu0
  %1069 = vdwg.mxu0
  %v1071 = vsel %vm132, %v804, 0
  %1073 = vmatprep.subr.bf16.mxu0 0
  %1074 = vmatpush1.bf16.msra.mxu0 %v276
  %1075 = vmatprep.subr.bf16.mxu0 0
  %1076 = vmatpush1.bf16.msra.mxu0 0
  %1077 = vmatprep.subr.bf16.mxu0 0
  %1078 = vmatpush1.bf16.msra.mxu0 0
  %1079 = vmatprep.subr.bf16.mxu0 0
  %1080 = vmatpush1.bf16.msra.mxu0 0
  %1081 = vmatprep.subr.bf16.mxu0 0
  %1082 = vmatpush1.bf16.msra.mxu0 0
  %1083 = vmatprep.subr.bf16.mxu0 0
  %1084 = vmatpush1.bf16.msra.mxu0 0
  %1085 = vmatprep.subr.bf16.mxu0 0
  %1086 = vmatpush1.bf16.msra.mxu0 0
  %1087 = vmatprep.subr.bf16.mxu0 0
  %1088 = vmatpush1.bf16.msra.mxu0 0
  %1089 = vmatprep.subr.bf16.mxu0 0
  %1090 = vmatpush1.bf16.msra.mxu0 0
  %1091 = vmatprep.subr.bf16.mxu0 0
  %1092 = vmatpush1.bf16.msra.mxu0 0
  %1093 = vmatprep.subr.bf16.mxu0 0
  %1094 = vmatpush1.bf16.msra.mxu0 0
  %1095 = vmatprep.subr.bf16.mxu0 0
  %1096 = vmatpush1.bf16.msra.mxu0 0
  %1097 = vmatprep.subr.bf16.mxu0 0
  %1098 = vmatpush1.bf16.msra.mxu0 0
  %1099 = vmatprep.subr.bf16.mxu0 0
  %1100 = vmatpush1.bf16.msra.mxu0 0
  %1101 = vmatprep.subr.bf16.mxu0 0
  %1102 = vmatpush1.bf16.msra.mxu0 0
  %1103 = vmatprep.subr.bf16.mxu0 0
  %1104 = vmatpush1.bf16.msra.mxu0 0
  %1105 = vmatprep.mubr.bf16.mxu0 0
  %1106 = vmatmul.mubr.bf16.gmra.mrb[0].mxu0 %v1071
  %v1107 = vpop.f32.mrb[0].mxu0
  %v1108 = vadd.f32 0.0, %v1107
  %v1109 = vpop.f32.mrb[0].mxu0
  %v1110 = vpop.f32.mrb[0].mxu0
  %v1111 = vadd.f32 0.0, %v1110
  %v1112 = vpop.f32.mrb[0].mxu0
  %1113 = vdwg.mxu0
  %v1115 = vsel %vm132, %v805, 0
  %1117 = vmatprep.subr.bf16.mxu0 0
  %1118 = vmatpush1.bf16.msra.mxu0 %v277
  %1119 = vmatprep.subr.bf16.mxu0 0
  %1120 = vmatpush1.bf16.msra.mxu0 0
  %1121 = vmatprep.subr.bf16.mxu0 0
  %1122 = vmatpush1.bf16.msra.mxu0 0
  %1123 = vmatprep.subr.bf16.mxu0 0
  %1124 = vmatpush1.bf16.msra.mxu0 0
  %1125 = vmatprep.subr.bf16.mxu0 0
  %1126 = vmatpush1.bf16.msra.mxu0 0
  %1127 = vmatprep.subr.bf16.mxu0 0
  %1128 = vmatpush1.bf16.msra.mxu0 0
  %1129 = vmatprep.subr.bf16.mxu0 0
  %1130 = vmatpush1.bf16.msra.mxu0 0
  %1131 = vmatprep.subr.bf16.mxu0 0
  %1132 = vmatpush1.bf16.msra.mxu0 0
  %1133 = vmatprep.subr.bf16.mxu0 0
  %1134 = vmatpush1.bf16.msra.mxu0 0
  %1135 = vmatprep.subr.bf16.mxu0 0
  %1136 = vmatpush1.bf16.msra.mxu0 0
  %1137 = vmatprep.subr.bf16.mxu0 0
  %1138 = vmatpush1.bf16.msra.mxu0 0
  %1139 = vmatprep.subr.bf16.mxu0 0
  %1140 = vmatpush1.bf16.msra.mxu0 0
  %1141 = vmatprep.subr.bf16.mxu0 0
  %1142 = vmatpush1.bf16.msra.mxu0 0
  %1143 = vmatprep.subr.bf16.mxu0 0
  %1144 = vmatpush1.bf16.msra.mxu0 0
  %1145 = vmatprep.subr.bf16.mxu0 0
  %1146 = vmatpush1.bf16.msra.mxu0 0
  %1147 = vmatprep.subr.bf16.mxu0 0
  %1148 = vmatpush1.bf16.msra.mxu0 0
  %1149 = vmatprep.mubr.bf16.mxu0 0
  %1150 = vmatmul.mubr.bf16.gmra.mrb[0].mxu0 %v1115
  %v1151 = vpop.f32.mrb[0].mxu0
  %v1152 = vadd.f32 0.0, %v1151
  %v1153 = vpop.f32.mrb[0].mxu0
  %v1154 = vpop.f32.mrb[0].mxu0
  %v1155 = vadd.f32 0.0, %v1154
  %v1156 = vpop.f32.mrb[0].mxu0
  %1157 = vdwg.mxu0
  %v1158 = vadd.f32 %v254, %v844
  %v1159 = vadd.f32 %v255, %v847
  %v1160 = vadd.f32 %v256, %v888
  %v1161 = vadd.f32 %v257, %v891
  %v1162 = vadd.f32 %v258, %v932
  %v1163 = vadd.f32 %v259, %v935
  %v1164 = vadd.f32 %v260, %v976
  %v1165 = vadd.f32 %v261, %v979
  %v1166 = vadd.f32 %v262, %v1020
  %v1167 = vadd.f32 %v263, %v1023
  %v1168 = vadd.f32 %v264, %v1064
  %v1169 = vadd.f32 %v265, %v1067
  %v1170 = vadd.f32 %v266, %v1108
  %v1171 = vadd.f32 %v267, %v1111
  %v1172 = vadd.f32 %v268, %v1152
  %v1173 = vadd.f32 %v269, %v1155
  %v1174 = vld [vmem:[%s3] sm:$0xff]
  %v1176 = vcombine.high %v1174, %v1174
  %v1178 = vunpack.c.l.s4 1966171168
  %v1179 = vunpack.c.0.s8 %v1178
  %v1180 = vlaneseq
  %v1181 = vshrl.u32 %v1180, 7
  %v1182 = vsub.s32 %v1179, %v1181
  %v1183 = vrot.slane %v1174, %v1182
  %v1185 = vunpack.c.l.s4 1966171168
  %v1186 = vunpack.c.0.s8 %v1185
  %v1187 = vlaneseq
  %v1188 = vshrl.u32 %v1187, 7
  %v1189 = vsub.s32 %v1186, %v1188
  %v1190 = vrot.slane %v1176, %v1189
  %v1191 = vcombine.high %v1183, %v1183
  %v1192 = vcombine.high %v1190, %v1190
  %v1194 = vunpack.c.l.s4 1966171168
  %v1195 = vunpack.c.0.s8 %v1194
  %v1196 = vlaneseq
  %v1197 = vshrl.u32 %v1196, 7
  %v1198 = vsub.s32 %v1195, %v1197
  %v1199 = vrot.slane %v1183, %v1198
  %v1201 = vunpack.c.l.s4 1966171168
  %v1202 = vunpack.c.0.s8 %v1201
  %v1203 = vlaneseq
  %v1204 = vshrl.u32 %v1203, 7
  %v1205 = vsub.s32 %v1202, %v1204
  %v1206 = vrot.slane %v1190, %v1205
  %v1208 = vunpack.c.l.s4 1966171168
  %v1209 = vunpack.c.0.s8 %v1208
  %v1210 = vlaneseq
  %v1211 = vshrl.u32 %v1210, 7
  %v1212 = vsub.s32 %v1209, %v1211
  %v1213 = vrot.slane %v1191, %v1212
  %v1215 = vunpack.c.l.s4 1966171168
  %v1216 = vunpack.c.0.s8 %v1215
  %v1217 = vlaneseq
  %v1218 = vshrl.u32 %v1217, 7
  %v1219 = vsub.s32 %v1216, %v1218
  %v1220 = vrot.slane %v1192, %v1219
  %v1221 = vcombine.high %v1199, %v1199
  %v1222 = vcombine.high %v1206, %v1206
  %v1223 = vcombine.high %v1213, %v1213
  %v1224 = vcombine.high %v1220, %v1220
  %v1225 = vlaneseq
  %v1226 = vshrl.u32 %v1225, 7
  %v1227 = vsub.s32 0, %v1226
  %v1228 = vrot.slane %v1199, %v1227
  %v1229 = vlaneseq
  %v1230 = vshrl.u32 %v1229, 7
  %v1231 = vsub.s32 0, %v1230
  %v1232 = vrot.slane %v1213, %v1231
  %v1233 = vlaneseq
  %v1234 = vshrl.u32 %v1233, 7
  %v1235 = vsub.s32 0, %v1234
  %v1236 = vrot.slane %v1221, %v1235
  %v1237 = vlaneseq
  %v1238 = vshrl.u32 %v1237, 7
  %v1239 = vsub.s32 0, %v1238
  %v1240 = vrot.slane %v1223, %v1239
  %v1241 = vlaneseq
  %v1242 = vshrl.u32 %v1241, 7
  %v1243 = vsub.s32 0, %v1242
  %v1244 = vrot.slane %v1206, %v1243
  %v1245 = vlaneseq
  %v1246 = vshrl.u32 %v1245, 7
  %v1247 = vsub.s32 0, %v1246
  %v1248 = vrot.slane %v1220, %v1247
  %v1249 = vlaneseq
  %v1250 = vshrl.u32 %v1249, 7
  %v1251 = vsub.s32 0, %v1250
  %v1252 = vrot.slane %v1222, %v1251
  %v1253 = vlaneseq
  %v1254 = vshrl.u32 %v1253, 7
  %v1255 = vsub.s32 0, %v1254
  %v1256 = vrot.slane %v1224, %v1255
  %v1265 = vmul.f32 %v1158, %v1228
  %v1266 = vmul.f32 %v1159, %v1228
  %v1267 = vmul.f32 %v1160, %v1232
  %v1268 = vmul.f32 %v1161, %v1232
  %v1269 = vmul.f32 %v1162, %v1236
  %v1270 = vmul.f32 %v1163, %v1236
  %v1271 = vmul.f32 %v1164, %v1240
  %v1272 = vmul.f32 %v1165, %v1240
  %v1273 = vmul.f32 %v1166, %v1244
  %v1274 = vmul.f32 %v1167, %v1244
  %v1275 = vmul.f32 %v1168, %v1248
  %v1276 = vmul.f32 %v1169, %v1248
  %v1277 = vmul.f32 %v1170, %v1252
  %v1278 = vmul.f32 %v1171, %v1252
  %v1279 = vmul.f32 %v1172, %v1256
  %v1280 = vmul.f32 %v1173, %v1256
  %1281 = vadd.xlane.f32.xlu0 %v1265
  %v1282 = vpop.xlane.xlu0 %1281
  %1283 = vadd.xlane.f32.xlu0 %v1266
  %v1284 = vpop.xlane.xlu0 %1283
  %1285 = vadd.xlane.f32.xlu0 %v1267
  %v1286 = vpop.xlane.xlu0 %1285
  %1287 = vadd.xlane.f32.xlu0 %v1268
  %v1288 = vpop.xlane.xlu0 %1287
  %1289 = vadd.xlane.f32.xlu0 %v1269
  %v1290 = vpop.xlane.xlu0 %1289
  %1291 = vadd.xlane.f32.xlu0 %v1270
  %v1292 = vpop.xlane.xlu0 %1291
  %1293 = vadd.xlane.f32.xlu0 %v1271
  %v1294 = vpop.xlane.xlu0 %1293
  %1295 = vadd.xlane.f32.xlu0 %v1272
  %v1296 = vpop.xlane.xlu0 %1295
  %1297 = vadd.xlane.f32.xlu0 %v1273
  %v1298 = vpop.xlane.xlu0 %1297
  %1299 = vadd.xlane.f32.xlu0 %v1274
  %v1300 = vpop.xlane.xlu0 %1299
  %1301 = vadd.xlane.f32.xlu0 %v1275
  %v1302 = vpop.xlane.xlu0 %1301
  %1303 = vadd.xlane.f32.xlu0 %v1276
  %v1304 = vpop.xlane.xlu0 %1303
  %1305 = vadd.xlane.f32.xlu0 %v1277
  %v1306 = vpop.xlane.xlu0 %1305
  %1307 = vadd.xlane.f32.xlu0 %v1278
  %v1308 = vpop.xlane.xlu0 %1307
  %1309 = vadd.xlane.f32.xlu0 %v1279
  %v1310 = vpop.xlane.xlu0 %1309
  %1311 = vadd.xlane.f32.xlu0 %v1280
  %v1312 = vpop.xlane.xlu0 %1311
  %v1313 = vmul.f32 %v1282, 0.088388346
  %v1314 = vmul.f32 %v1284, 0.088388346
  %v1315 = vmul.f32 %v1286, 0.088388346
  %v1316 = vmul.f32 %v1288, 0.088388346
  %v1317 = vmul.f32 %v1290, 0.088388346
  %v1318 = vmul.f32 %v1292, 0.088388346
  %v1319 = vmul.f32 %v1294, 0.088388346
  %v1320 = vmul.f32 %v1296, 0.088388346
  %v1321 = vmul.f32 %v1298, 0.088388346
  %v1322 = vmul.f32 %v1300, 0.088388346
  %v1323 = vmul.f32 %v1302, 0.088388346
  %v1324 = vmul.f32 %v1304, 0.088388346
  %v1325 = vmul.f32 %v1306, 0.088388346
  %v1326 = vmul.f32 %v1308, 0.088388346
  %v1327 = vmul.f32 %v1310, 0.088388346
  %v1328 = vmul.f32 %v1312, 0.088388346
  %v1329 = vmax.f32 %v1313, %v1314
  %v1330 = vrot.slane %v1329, 4
  %v1331 = vmax.f32 %v1329, %v1330
  %v1332 = vrot.slane %v1331, 2
  %v1333 = vmax.f32 %v1331, %v1332
  %v1334 = vrot.slane %v1333, 1
  %v1335 = vmax.f32 %v1333, %v1334
  %v1336 = vmax.f32 %v1315, %v1316
  %v1337 = vrot.slane %v1336, 4
  %v1338 = vmax.f32 %v1336, %v1337
  %v1339 = vrot.slane %v1338, 2
  %v1340 = vmax.f32 %v1338, %v1339
  %v1341 = vrot.slane %v1340, 1
  %v1342 = vmax.f32 %v1340, %v1341
  %v1343 = vmax.f32 %v1317, %v1318
  %v1344 = vrot.slane %v1343, 4
  %v1345 = vmax.f32 %v1343, %v1344
  %v1346 = vrot.slane %v1345, 2
  %v1347 = vmax.f32 %v1345, %v1346
  %v1348 = vrot.slane %v1347, 1
  %v1349 = vmax.f32 %v1347, %v1348
  %v1350 = vmax.f32 %v1319, %v1320
  %v1351 = vrot.slane %v1350, 4
  %v1352 = vmax.f32 %v1350, %v1351
  %v1353 = vrot.slane %v1352, 2
  %v1354 = vmax.f32 %v1352, %v1353
  %v1355 = vrot.slane %v1354, 1
  %v1356 = vmax.f32 %v1354, %v1355
  %v1357 = vmax.f32 %v1321, %v1322
  %v1358 = vrot.slane %v1357, 4
  %v1359 = vmax.f32 %v1357, %v1358
  %v1360 = vrot.slane %v1359, 2
  %v1361 = vmax.f32 %v1359, %v1360
  %v1362 = vrot.slane %v1361, 1
  %v1363 = vmax.f32 %v1361, %v1362
  %v1364 = vmax.f32 %v1323, %v1324
  %v1365 = vrot.slane %v1364, 4
  %v1366 = vmax.f32 %v1364, %v1365
  %v1367 = vrot.slane %v1366, 2
  %v1368 = vmax.f32 %v1366, %v1367
  %v1369 = vrot.slane %v1368, 1
  %v1370 = vmax.f32 %v1368, %v1369
  %v1371 = vmax.f32 %v1325, %v1326
  %v1372 = vrot.slane %v1371, 4
  %v1373 = vmax.f32 %v1371, %v1372
  %v1374 = vrot.slane %v1373, 2
  %v1375 = vmax.f32 %v1373, %v1374
  %v1376 = vrot.slane %v1375, 1
  %v1377 = vmax.f32 %v1375, %v1376
  %v1378 = vmax.f32 %v1327, %v1328
  %v1379 = vrot.slane %v1378, 4
  %v1380 = vmax.f32 %v1378, %v1379
  %v1381 = vrot.slane %v1380, 2
  %v1382 = vmax.f32 %v1380, %v1381
  %v1383 = vrot.slane %v1382, 1
  %v1384 = vmax.f32 %v1382, %v1383
  %v1385 = vsub.f32 %v1313, %v1335
  %v1386 = vsub.f32 %v1314, %v1335
  %v1387 = vsub.f32 %v1315, %v1342
  %v1388 = vsub.f32 %v1316, %v1342
  %v1389 = vsub.f32 %v1317, %v1349
  %v1390 = vsub.f32 %v1318, %v1349
  %v1391 = vsub.f32 %v1319, %v1356
  %v1392 = vsub.f32 %v1320, %v1356
  %v1393 = vsub.f32 %v1321, %v1363
  %v1394 = vsub.f32 %v1322, %v1363
  %v1395 = vsub.f32 %v1323, %v1370
  %v1396 = vsub.f32 %v1324, %v1370
  %v1397 = vsub.f32 %v1325, %v1377
  %v1398 = vsub.f32 %v1326, %v1377
  %v1399 = vsub.f32 %v1327, %v1384
  %v1400 = vsub.f32 %v1328, %v1384
  %v1401 = vmul.f32 %v1385, 1.442695
  %v1402 = vpow.pop %v1401
  %v1403 = vmul.f32 %v1386, 1.442695
  %v1404 = vpow.pop %v1403
  %v1405 = vmul.f32 %v1387, 1.442695
  %v1406 = vpow.pop %v1405
  %v1407 = vmul.f32 %v1388, 1.442695
  %v1408 = vpow.pop %v1407
  %v1409 = vmul.f32 %v1389, 1.442695
  %v1410 = vpow.pop %v1409
  %v1411 = vmul.f32 %v1390, 1.442695
  %v1412 = vpow.pop %v1411
  %v1413 = vmul.f32 %v1391, 1.442695
  %v1414 = vpow.pop %v1413
  %v1415 = vmul.f32 %v1392, 1.442695
  %v1416 = vpow.pop %v1415
  %v1417 = vmul.f32 %v1393, 1.442695
  %v1418 = vpow.pop %v1417
  %v1419 = vmul.f32 %v1394, 1.442695
  %v1420 = vpow.pop %v1419
  %v1421 = vmul.f32 %v1395, 1.442695
  %v1422 = vpow.pop %v1421
  %v1423 = vmul.f32 %v1396, 1.442695
  %v1424 = vpow.pop %v1423
  %v1425 = vmul.f32 %v1397, 1.442695
  %v1426 = vpow.pop %v1425
  %v1427 = vmul.f32 %v1398, 1.442695
  %v1428 = vpow.pop %v1427
  %v1429 = vmul.f32 %v1399, 1.442695
  %v1430 = vpow.pop %v1429
  %v1431 = vmul.f32 %v1400, 1.442695
  %v1432 = vpow.pop %v1431
  %v1433 = vadd.f32 %v1402, %v1404
  %v1434 = vrot.slane %v1433, 4
  %v1435 = vadd.f32 %v1433, %v1434
  %v1436 = vrot.slane %v1435, 2
  %v1437 = vadd.f32 %v1435, %v1436
  %v1438 = vrot.slane %v1437, 1
  %v1439 = vadd.f32 %v1437, %v1438
  %v1440 = vadd.f32 %v1406, %v1408
  %v1441 = vrot.slane %v1440, 4
  %v1442 = vadd.f32 %v1440, %v1441
  %v1443 = vrot.slane %v1442, 2
  %v1444 = vadd.f32 %v1442, %v1443
  %v1445 = vrot.slane %v1444, 1
  %v1446 = vadd.f32 %v1444, %v1445
  %v1447 = vadd.f32 %v1410, %v1412
  %v1448 = vrot.slane %v1447, 4
  %v1449 = vadd.f32 %v1447, %v1448
  %v1450 = vrot.slane %v1449, 2
  %v1451 = vadd.f32 %v1449, %v1450
  %v1452 = vrot.slane %v1451, 1
  %v1453 = vadd.f32 %v1451, %v1452
  %v1454 = vadd.f32 %v1414, %v1416
  %v1455 = vrot.slane %v1454, 4
  %v1456 = vadd.f32 %v1454, %v1455
  %v1457 = vrot.slane %v1456, 2
  %v1458 = vadd.f32 %v1456, %v1457
  %v1459 = vrot.slane %v1458, 1
  %v1460 = vadd.f32 %v1458, %v1459
  %v1461 = vadd.f32 %v1418, %v1420
  %v1462 = vrot.slane %v1461, 4
  %v1463 = vadd.f32 %v1461, %v1462
  %v1464 = vrot.slane %v1463, 2
  %v1465 = vadd.f32 %v1463, %v1464
  %v1466 = vrot.slane %v1465, 1
  %v1467 = vadd.f32 %v1465, %v1466
  %v1468 = vadd.f32 %v1422, %v1424
  %v1469 = vrot.slane %v1468, 4
  %v1470 = vadd.f32 %v1468, %v1469
  %v1471 = vrot.slane %v1470, 2
  %v1472 = vadd.f32 %v1470, %v1471
  %v1473 = vrot.slane %v1472, 1
  %v1474 = vadd.f32 %v1472, %v1473
  %v1475 = vadd.f32 %v1426, %v1428
  %v1476 = vrot.slane %v1475, 4
  %v1477 = vadd.f32 %v1475, %v1476
  %v1478 = vrot.slane %v1477, 2
  %v1479 = vadd.f32 %v1477, %v1478
  %v1480 = vrot.slane %v1479, 1
  %v1481 = vadd.f32 %v1479, %v1480
  %v1482 = vadd.f32 %v1430, %v1432
  %v1483 = vrot.slane %v1482, 4
  %v1484 = vadd.f32 %v1482, %v1483
  %v1485 = vrot.slane %v1484, 2
  %v1486 = vadd.f32 %v1484, %v1485
  %v1487 = vrot.slane %v1486, 1
  %v1488 = vadd.f32 %v1486, %v1487
  %v1489 = vrcp.pop %v1439
  %v1490 = vrcp.pop %v1446
  %v1491 = vrcp.pop %v1453
  %v1492 = vrcp.pop %v1460
  %v1493 = vrcp.pop %v1467
  %v1494 = vrcp.pop %v1474
  %v1495 = vrcp.pop %v1481
  %v1496 = vrcp.pop %v1488
  %v1497 = vmul.f32 %v1402, %v1489
  %v1498 = vmul.f32 %v1404, %v1489
  %v1499 = vmul.f32 %v1406, %v1490
  %v1500 = vmul.f32 %v1408, %v1490
  %v1501 = vmul.f32 %v1410, %v1491
  %v1502 = vmul.f32 %v1412, %v1491
  %v1503 = vmul.f32 %v1414, %v1492
  %v1504 = vmul.f32 %v1416, %v1492
  %v1505 = vmul.f32 %v1418, %v1493
  %v1506 = vmul.f32 %v1420, %v1493
  %v1507 = vmul.f32 %v1422, %v1494
  %v1508 = vmul.f32 %v1424, %v1494
  %v1509 = vmul.f32 %v1426, %v1495
  %v1510 = vmul.f32 %v1428, %v1495
  %v1511 = vmul.f32 %v1430, %v1496
  %v1512 = vmul.f32 %v1432, %v1496
  %v1513 = vmul.f32 %v1497, %v1158
  %v1514 = vmul.f32 %v1498, %v1159
  %v1515 = vmul.f32 %v1499, %v1160
  %v1516 = vmul.f32 %v1500, %v1161
  %v1517 = vmul.f32 %v1501, %v1162
  %v1518 = vmul.f32 %v1502, %v1163
  %v1519 = vmul.f32 %v1503, %v1164
  %v1520 = vmul.f32 %v1504, %v1165
  %v1521 = vmul.f32 %v1505, %v1166
  %v1522 = vmul.f32 %v1506, %v1167
  %v1523 = vmul.f32 %v1507, %v1168
  %v1524 = vmul.f32 %v1508, %v1169
  %v1525 = vmul.f32 %v1509, %v1170
  %v1526 = vmul.f32 %v1510, %v1171
  %v1527 = vmul.f32 %v1511, %v1172
  %v1528 = vmul.f32 %v1512, %v1173
  %v1529 = vadd.f32 %v1513, %v1514
  %v1530 = vrot.slane %v1529, 4
  %v1531 = vadd.f32 %v1529, %v1530
  %v1532 = vrot.slane %v1531, 2
  %v1533 = vadd.f32 %v1531, %v1532
  %v1534 = vrot.slane %v1533, 1
  %v1535 = vadd.f32 %v1533, %v1534
  %v1536 = vadd.f32 %v1515, %v1516
  %v1537 = vrot.slane %v1536, 4
  %v1538 = vadd.f32 %v1536, %v1537
  %v1539 = vrot.slane %v1538, 2
  %v1540 = vadd.f32 %v1538, %v1539
  %v1541 = vrot.slane %v1540, 1
  %v1542 = vadd.f32 %v1540, %v1541
  %v1543 = vadd.f32 %v1517, %v1518
  %v1544 = vrot.slane %v1543, 4
  %v1545 = vadd.f32 %v1543, %v1544
  %v1546 = vrot.slane %v1545, 2
  %v1547 = vadd.f32 %v1545, %v1546
  %v1548 = vrot.slane %v1547, 1
  %v1549 = vadd.f32 %v1547, %v1548
  %v1550 = vadd.f32 %v1519, %v1520
  %v1551 = vrot.slane %v1550, 4
  %v1552 = vadd.f32 %v1550, %v1551
  %v1553 = vrot.slane %v1552, 2
  %v1554 = vadd.f32 %v1552, %v1553
  %v1555 = vrot.slane %v1554, 1
  %v1556 = vadd.f32 %v1554, %v1555
  %v1557 = vadd.f32 %v1521, %v1522
  %v1558 = vrot.slane %v1557, 4
  %v1559 = vadd.f32 %v1557, %v1558
  %v1560 = vrot.slane %v1559, 2
  %v1561 = vadd.f32 %v1559, %v1560
  %v1562 = vrot.slane %v1561, 1
  %v1563 = vadd.f32 %v1561, %v1562
  %v1564 = vadd.f32 %v1523, %v1524
  %v1565 = vrot.slane %v1564, 4
  %v1566 = vadd.f32 %v1564, %v1565
  %v1567 = vrot.slane %v1566, 2
  %v1568 = vadd.f32 %v1566, %v1567
  %v1569 = vrot.slane %v1568, 1
  %v1570 = vadd.f32 %v1568, %v1569
  %v1571 = vadd.f32 %v1525, %v1526
  %v1572 = vrot.slane %v1571, 4
  %v1573 = vadd.f32 %v1571, %v1572
  %v1574 = vrot.slane %v1573, 2
  %v1575 = vadd.f32 %v1573, %v1574
  %v1576 = vrot.slane %v1575, 1
  %v1577 = vadd.f32 %v1575, %v1576
  %v1578 = vadd.f32 %v1527, %v1528
  %v1579 = vrot.slane %v1578, 4
  %v1580 = vadd.f32 %v1578, %v1579
  %v1581 = vrot.slane %v1580, 2
  %v1582 = vadd.f32 %v1580, %v1581
  %v1583 = vrot.slane %v1582, 1
  %v1584 = vadd.f32 %v1582, %v1583
  %v1585 = vadd.f32 %v1313, %v1314
  %v1586 = vrot.slane %v1585, 4
  %v1587 = vadd.f32 %v1585, %v1586
  %v1588 = vrot.slane %v1587, 2
  %v1589 = vadd.f32 %v1587, %v1588
  %v1590 = vrot.slane %v1589, 1
  %v1591 = vadd.f32 %v1589, %v1590
  %v1592 = vadd.f32 %v1315, %v1316
  %v1593 = vrot.slane %v1592, 4
  %v1594 = vadd.f32 %v1592, %v1593
  %v1595 = vrot.slane %v1594, 2
  %v1596 = vadd.f32 %v1594, %v1595
  %v1597 = vrot.slane %v1596, 1
  %v1598 = vadd.f32 %v1596, %v1597
  %v1599 = vadd.f32 %v1317, %v1318
  %v1600 = vrot.slane %v1599, 4
  %v1601 = vadd.f32 %v1599, %v1600
  %v1602 = vrot.slane %v1601, 2
  %v1603 = vadd.f32 %v1601, %v1602
  %v1604 = vrot.slane %v1603, 1
  %v1605 = vadd.f32 %v1603, %v1604
  %v1606 = vadd.f32 %v1319, %v1320
  %v1607 = vrot.slane %v1606, 4
  %v1608 = vadd.f32 %v1606, %v1607
  %v1609 = vrot.slane %v1608, 2
  %v1610 = vadd.f32 %v1608, %v1609
  %v1611 = vrot.slane %v1610, 1
  %v1612 = vadd.f32 %v1610, %v1611
  %v1613 = vadd.f32 %v1321, %v1322
  %v1614 = vrot.slane %v1613, 4
  %v1615 = vadd.f32 %v1613, %v1614
  %v1616 = vrot.slane %v1615, 2
  %v1617 = vadd.f32 %v1615, %v1616
  %v1618 = vrot.slane %v1617, 1
  %v1619 = vadd.f32 %v1617, %v1618
  %v1620 = vadd.f32 %v1323, %v1324
  %v1621 = vrot.slane %v1620, 4
  %v1622 = vadd.f32 %v1620, %v1621
  %v1623 = vrot.slane %v1622, 2
  %v1624 = vadd.f32 %v1622, %v1623
  %v1625 = vrot.slane %v1624, 1
  %v1626 = vadd.f32 %v1624, %v1625
  %v1627 = vadd.f32 %v1325, %v1326
  %v1628 = vrot.slane %v1627, 4
  %v1629 = vadd.f32 %v1627, %v1628
  %v1630 = vrot.slane %v1629, 2
  %v1631 = vadd.f32 %v1629, %v1630
  %v1632 = vrot.slane %v1631, 1
  %v1633 = vadd.f32 %v1631, %v1632
  %v1634 = vadd.f32 %v1327, %v1328
  %v1635 = vrot.slane %v1634, 4
  %v1636 = vadd.f32 %v1634, %v1635
  %v1637 = vrot.slane %v1636, 2
  %v1638 = vadd.f32 %v1636, %v1637
  %v1639 = vrot.slane %v1638, 1
  %v1640 = vadd.f32 %v1638, %v1639
  %v1641 = vrcp.pop 16.0
  %v1642 = vmul.f32 %v1591, %v1641
  %v1643 = vmul.f32 %v1598, %v1641
  %v1644 = vmul.f32 %v1605, %v1641
  %v1645 = vmul.f32 %v1612, %v1641
  %v1646 = vmul.f32 %v1619, %v1641
  %v1647 = vmul.f32 %v1626, %v1641
  %v1648 = vmul.f32 %v1633, %v1641
  %v1649 = vmul.f32 %v1640, %v1641
  %v1650 = vtanh.pop %v1642
  %v1651 = vtanh.pop %v1643
  %v1652 = vtanh.pop %v1644
  %v1653 = vtanh.pop %v1645
  %v1654 = vtanh.pop %v1646
  %v1655 = vtanh.pop %v1647
  %v1656 = vtanh.pop %v1648
  %v1657 = vtanh.pop %v1649
  %v1658 = vpack.c.bf16 %v1535, %v1535
  %v1659 = vpack.c.bf16 %v1542, %v1542
  %v1660 = vpack.c.bf16 %v1549, %v1549
  %v1661 = vpack.c.bf16 %v1556, %v1556
  %v1662 = vpack.c.bf16 %v1563, %v1563
  %v1663 = vpack.c.bf16 %v1570, %v1570
  %v1664 = vpack.c.bf16 %v1577, %v1577
  %v1665 = vpack.c.bf16 %v1584, %v1584
  %v1666 = vld [vmem:[%s5] sm:$0xff]
  %v1667 = vld [vmem:[%s5 + $0x8] sm:$0xff]
  %v1668 = vld [vmem:[%s5 + $0x10] sm:$0xff]
  %v1669 = vld [vmem:[%s5 + $0x18] sm:$0xff]
  %v1670 = vld [vmem:[%s5 + $0x20] sm:$0xff]
  %v1671 = vld [vmem:[%s5 + $0x28] sm:$0xff]
  %v1672 = vld [vmem:[%s5 + $0x30] sm:$0xff]
  %v1673 = vld [vmem:[%s5 + $0x38] sm:$0xff]
  %v1674 = vld [vmem:[%s5 + $0x40] sm:$0xff]
  %v1675 = vld [vmem:[%s5 + $0x48] sm:$0xff]
  %v1676 = vld [vmem:[%s5 + $0x50] sm:$0xff]
  %v1677 = vld [vmem:[%s5 + $0x58] sm:$0xff]
  %v1678 = vld [vmem:[%s5 + $0x60] sm:$0xff]
  %v1679 = vld [vmem:[%s5 + $0x68] sm:$0xff]
  %v1680 = vld [vmem:[%s5 + $0x70] sm:$0xff]
  %v1681 = vld [vmem:[%s5 + $0x78] sm:$0xff]
  %v1690 = vunpack.c.l.b16 %v1658
  %v1691 = vunpack.c.l.b16 %v1659
  %v1692 = vunpack.c.l.b16 %v1660
  %v1693 = vunpack.c.l.b16 %v1661
  %v1694 = vunpack.c.l.b16 %v1662
  %v1695 = vunpack.c.l.b16 %v1663
  %v1696 = vunpack.c.l.b16 %v1664
  %v1697 = vunpack.c.l.b16 %v1665
  %vm1698 = vcmask 1041409
  %v1699 = vsel %vm1698, %v1691, %v1690
  %vm1700 = vcmask 1042434
  %v1701 = vsel %vm1700, %v1692, %v1699
  %vm1702 = vcmask 1043459
  %v1703 = vsel %vm1702, %v1693, %v1701
  %vm1704 = vcmask 1044484
  %v1705 = vsel %vm1704, %v1694, %v1703
  %vm1706 = vcmask 1045509
  %v1707 = vsel %vm1706, %v1695, %v1705
  %vm1708 = vcmask 1046534
  %v1709 = vsel %vm1708, %v1696, %v1707
  %vm1710 = vcmask 1047559
  %v1711 = vsel %vm1710, %v1697, %v1709
  %v1712 = vpack.c.b16 %v1711, %v1711
  %v1730 = vunpack.c.l.b16 %v1666
  %v1731 = vunpack.c.h.b16 %v1666
  %v1732 = vunpack.c.l.b16 %v1667
  %v1733 = vunpack.c.h.b16 %v1667
  %v1734 = vunpack.c.l.b16 %v1668
  %v1735 = vunpack.c.h.b16 %v1668
  %v1736 = vunpack.c.l.b16 %v1669
  %v1737 = vunpack.c.h.b16 %v1669
  %v1738 = vunpack.c.l.b16 %v1670
  %v1739 = vunpack.c.h.b16 %v1670
  %v1740 = vunpack.c.l.b16 %v1671
  %v1741 = vunpack.c.h.b16 %v1671
  %v1742 = vunpack.c.l.b16 %v1672
  %v1743 = vunpack.c.h.b16 %v1672
  %v1744 = vunpack.c.l.b16 %v1673
  %v1745 = vunpack.c.h.b16 %v1673
  %v1746 = vunpack.c.l.b16 %v1674
  %v1747 = vunpack.c.h.b16 %v1674
  %v1748 = vunpack.c.l.b16 %v1675
  %v1749 = vunpack.c.h.b16 %v1675
  %v1750 = vunpack.c.l.b16 %v1676
  %v1751 = vunpack.c.h.b16 %v1676
  %v1752 = vunpack.c.l.b16 %v1677
  %v1753 = vunpack.c.h.b16 %v1677
  %v1754 = vunpack.c.l.b16 %v1678
  %v1755 = vunpack.c.h.b16 %v1678
  %v1756 = vunpack.c.l.b16 %v1679
  %v1757 = vunpack.c.h.b16 %v1679
  %v1758 = vunpack.c.l.b16 %v1680
  %v1759 = vunpack.c.h.b16 %v1680
  %v1760 = vunpack.c.l.b16 %v1681
  %v1761 = vunpack.c.h.b16 %v1681
  %v1762 = vpack.c.b16 %v1732, %v1730
  %v1763 = vpack.c.b16 %v1733, %v1731
  %v1764 = vpack.c.b16 %v1736, %v1734
  %v1765 = vpack.c.b16 %v1737, %v1735
  %v1766 = vpack.c.b16 %v1740, %v1738
  %v1767 = vpack.c.b16 %v1741, %v1739
  %v1768 = vpack.c.b16 %v1744, %v1742
  %v1769 = vpack.c.b16 %v1745, %v1743
  %v1770 = vpack.c.b16 %v1748, %v1746
  %v1771 = vpack.c.b16 %v1749, %v1747
  %v1772 = vpack.c.b16 %v1752, %v1750
  %v1773 = vpack.c.b16 %v1753, %v1751
  %v1774 = vpack.c.b16 %v1756, %v1754
  %v1775 = vpack.c.b16 %v1757, %v1755
  %v1776 = vpack.c.b16 %v1760, %v1758
  %v1777 = vpack.c.b16 %v1761, %v1759
  %1794 = vmatprep.subr.bf16.mxu0 %v1763
  %1795 = vmatpush1.bf16.msra.mxu0 %v1762
  %1796 = vmatprep.subr.bf16.mxu0 %v1765
  %1797 = vmatpush1.bf16.msra.mxu0 %v1764
  %1798 = vmatprep.subr.bf16.mxu0 %v1767
  %1799 = vmatpush1.bf16.msra.mxu0 %v1766
  %1800 = vmatprep.subr.bf16.mxu0 %v1769
  %1801 = vmatpush1.bf16.msra.mxu0 %v1768
  %1802 = vmatprep.subr.bf16.mxu0 %v1771
  %1803 = vmatpush1.bf16.msra.mxu0 %v1770
  %1804 = vmatprep.subr.bf16.mxu0 %v1773
  %1805 = vmatpush1.bf16.msra.mxu0 %v1772
  %1806 = vmatprep.subr.bf16.mxu0 %v1775
  %1807 = vmatpush1.bf16.msra.mxu0 %v1774
  %1808 = vmatprep.subr.bf16.mxu0 %v1777
  %1809 = vmatpush1.bf16.msra.mxu0 %v1776
  %1810 = vmatprep.subr.bf16.mxu0 0
  %1811 = vmatpush1.bf16.msra.mxu0 0
  %1812 = vmatprep.subr.bf16.mxu0 0
  %1813 = vmatpush1.bf16.msra.mxu0 0
  %1814 = vmatprep.subr.bf16.mxu0 0
  %1815 = vmatpush1.bf16.msra.mxu0 0
  %1816 = vmatprep.subr.bf16.mxu0 0
  %1817 = vmatpush1.bf16.msra.mxu0 0
  %1818 = vmatprep.subr.bf16.mxu0 0
  %1819 = vmatpush1.bf16.msra.mxu0 0
  %1820 = vmatprep.subr.bf16.mxu0 0
  %1821 = vmatpush1.bf16.msra.mxu0 0
  %1822 = vmatprep.subr.bf16.mxu0 0
  %1823 = vmatpush1.bf16.msra.mxu0 0
  %1824 = vmatprep.subr.bf16.mxu0 0
  %1825 = vmatpush1.bf16.msra.mxu0 0
  %1826 = vmatprep.mubr.bf16.mxu0 0
  %1827 = vmatmul.mubr.bf16.gmra.mrb[0].mxu0 %v1712
  %v1828 = vpop.f32.mrb[0].mxu0
  %v1829 = vadd.f32 %v66, %v1828
  %v1830 = vpop.f32.mrb[0].mxu0
  %v1831 = vadd.f32 %v67, %v1830
  %v1832 = vpop.f32.mrb[0].mxu0
  %v1833 = vpop.f32.mrb[0].mxu0
  %1834 = vdwg.mxu0
  %v1837 = vrot.slane %v1829, 1
  %v1838 = vrot.slane %v1831, 1
  %v1839 = vrot.slane %v1829, 2
  %v1840 = vrot.slane %v1831, 2
  %v1841 = vrot.slane %v1829, 3
  %v1842 = vrot.slane %v1831, 3
  %v1843 = vrot.slane %v1829, 4
  %v1844 = vrot.slane %v1831, 4
  %v1845 = vrot.slane %v1829, 5
  %v1846 = vrot.slane %v1831, 5
  %v1847 = vrot.slane %v1829, 6
  %v1848 = vrot.slane %v1831, 6
  %v1849 = vrot.slane %v1829, 7
  %v1850 = vrot.slane %v1831, 7
  %v1867 = vmul.f32 %v1650, %v1829
  %v1868 = vmul.f32 %v1650, %v1831
  %v1869 = vmul.f32 %v1651, %v1837
  %v1870 = vmul.f32 %v1651, %v1838
  %v1871 = vmul.f32 %v1652, %v1839
  %v1872 = vmul.f32 %v1652, %v1840
  %v1873 = vmul.f32 %v1653, %v1841
  %v1874 = vmul.f32 %v1653, %v1842
  %v1875 = vmul.f32 %v1654, %v1843
  %v1876 = vmul.f32 %v1654, %v1844
  %v1877 = vmul.f32 %v1655, %v1845
  %v1878 = vmul.f32 %v1655, %v1846
  %v1879 = vmul.f32 %v1656, %v1847
  %v1880 = vmul.f32 %v1656, %v1848
  %v1881 = vmul.f32 %v1657, %v1849
  %v1882 = vmul.f32 %v1657, %v1850
  %s1883 = sld [smem:[#allocation3]]
  %s1884 = scvt.s32.f32 %s1883
  %s1885 = smax.f32 %s1884, 0.0
  %v1886 = vstv %s1884
  %v1887 = vmul.f32 %v1886, %v1535
  %v1888 = vadd.f32 %v1887, 0.0
  %v1889 = vmul.f32 %v1888, %v1535
  %vm1890 = vcmask 1040384
  %v1891 = vsel %vm1890, %v1889, 0.0
  %1892 = vadd.xlane.f32.xlu0 %v1891
  %v1893 = vpop.xlane.xlu0 %1892
  %v1894 = vrot.slane %v1893, 4
  %v1895 = vadd.f32 %v1893, %v1894
  %v1896 = vrot.slane %v1895, 2
  %v1897 = vadd.f32 %v1895, %v1896
  %v1898 = vrot.slane %v1897, 1
  %v1899 = vadd.f32 %v1897, %v1898
  %s1900 = vtos %v1899
  %s1901 = smul.f32 %s1900, 0.0078125
  %v1902 = vstv %s1885
  %v1903 = vmul.f32 %v1867, %v1902
  %v1904 = vmul.f32 %v1868, %v1902
  %s1905 = smul.f32 %s1901, %s1885
  %v1906 = vstv %s1905
  %v1907 = vadd.f32 %v1903, %v1906
  %v1908 = vadd.f32 %v1904, %v1906
  %vm1909 = vcmp.gt.f32.partialorder %v1907, 0.0
  %vm1910 = vcmp.gt.f32.partialorder %v1908, 0.0
  %p1911 = scmp.gt.f32.partialorder %s1885, 0.0
  %s1912 = scalar_select %p1911, 1, 0
  %v1913 = vstv %s1912
  %vm1914 = vcmp.eq.s32.totalorder %v1913, 1
  %vm1915 = vmand %vm1909, %vm1914
  %vm1916 = vmand %vm1910, %vm1914
  %v1917 = vsel %vm1915, 1.0, 0.0
  %v1918 = vsel %vm1916, 1.0, 0.0
  %vm1919 = vcmp.gt.f32.partialorder %v1867, 0.0
  %vm1920 = vcmp.gt.f32.partialorder %v1868, 0.0
  %v1921 = vsel %vm1919, 1.0, 0.0
  %v1922 = vsel %vm1920, 1.0, 0.0
  %v1923 = vmul.f32 %v1921, %v1886
  %v1924 = vmul.f32 %v1922, %v1886
  %v1925 = vmax.f32 %v1923, %v1917
  %v1926 = vmax.f32 %v1924, %v1918
  %s1927 = sld [smem:[#allocation3 + $0x1]]
  %s1928 = scvt.s32.f32 %s1927
  %s1929 = smul.f32 %s1885, 0.9
  %s1930 = smax.f32 %s1929, %s1928
  %v1931 = vmul.f32 %v1888, 0.9
  %v1932 = vstv %s1928
  %v1933 = vmul.f32 %v1932, %v1542
  %v1934 = vadd.f32 %v1931, %v1933
  %v1935 = vmul.f32 %v1934, %v1542
  %v1936 = vsel %vm1890, %v1935, 0.0
  %1937 = vadd.xlane.f32.xlu0 %v1936
  %v1938 = vpop.xlane.xlu0 %1937
  %v1939 = vrot.slane %v1938, 4
  %v1940 = vadd.f32 %v1938, %v1939
  %v1941 = vrot.slane %v1940, 2
  %v1942 = vadd.f32 %v1940, %v1941
  %v1943 = vrot.slane %v1942, 1
  %v1944 = vadd.f32 %v1942, %v1943
  %s1945 = vtos %v1944
  %s1946 = smul.f32 %s1945, 0.0078125
  %v1947 = vstv %s1930
  %v1948 = vmul.f32 %v1869, %v1947
  %v1949 = vmul.f32 %v1870, %v1947
  %s1950 = smul.f32 %s1946, %s1930
  %v1951 = vstv %s1950
  %v1952 = vadd.f32 %v1948, %v1951
  %v1953 = vadd.f32 %v1949, %v1951
  %vm1954 = vcmp.gt.f32.partialorder %v1952, 0.0
  %vm1955 = vcmp.gt.f32.partialorder %v1953, 0.0
  %p1956 = scmp.gt.f32.partialorder %s1930, 0.0
  %s1957 = scalar_select %p1956, 1, 0
  %v1958 = vstv %s1957
  %vm1959 = vcmp.eq.s32.totalorder %v1958, 1
  %vm1960 = vmand %vm1954, %vm1959
  %vm1961 = vmand %vm1955, %vm1959
  %v1962 = vsel %vm1960, 1.0, 0.0
  %v1963 = vsel %vm1961, 1.0, 0.0
  %vm1964 = vcmp.gt.f32.partialorder %v1869, 0.0
  %vm1965 = vcmp.gt.f32.partialorder %v1870, 0.0
  %v1966 = vsel %vm1964, 1.0, 0.0
  %v1967 = vsel %vm1965, 1.0, 0.0
  %v1968 = vmul.f32 %v1966, %v1932
  %v1969 = vmul.f32 %v1967, %v1932
  %v1970 = vmax.f32 %v1968, %v1962
  %v1971 = vmax.f32 %v1969, %v1963
  %s1972 = sld [smem:[#allocation3 + $0x2]]
  %s1973 = scvt.s32.f32 %s1972
  %s1974 = smul.f32 %s1930, 0.9
  %s1975 = smax.f32 %s1974, %s1973
  %v1976 = vmul.f32 %v1934, 0.9
  %v1977 = vstv %s1973
  %v1978 = vmul.f32 %v1977, %v1549
  %v1979 = vadd.f32 %v1976, %v1978
  %v1980 = vmul.f32 %v1979, %v1549
  %v1981 = vsel %vm1890, %v1980, 0.0
  %1982 = vadd.xlane.f32.xlu0 %v1981
  %v1983 = vpop.xlane.xlu0 %1982
  %v1984 = vrot.slane %v1983, 4
  %v1985 = vadd.f32 %v1983, %v1984
  %v1986 = vrot.slane %v1985, 2
  %v1987 = vadd.f32 %v1985, %v1986
  %v1988 = vrot.slane %v1987, 1
  %v1989 = vadd.f32 %v1987, %v1988
  %s1990 = vtos %v1989
  %s1991 = smul.f32 %s1990, 0.0078125
  %v1992 = vstv %s1975
  %v1993 = vmul.f32 %v1871, %v1992
  %v1994 = vmul.f32 %v1872, %v1992
  %s1995 = smul.f32 %s1991, %s1975
  %v1996 = vstv %s1995
  %v1997 = vadd.f32 %v1993, %v1996
  %v1998 = vadd.f32 %v1994, %v1996
  %vm1999 = vcmp.gt.f32.partialorder %v1997, 0.0
  %vm2000 = vcmp.gt.f32.partialorder %v1998, 0.0
  %p2001 = scmp.gt.f32.partialorder %s1975, 0.0
  %s2002 = scalar_select %p2001, 1, 0
  %v2003 = vstv %s2002
  %vm2004 = vcmp.eq.s32.totalorder %v2003, 1
  %vm2005 = vmand %vm1999, %vm2004
  %vm2006 = vmand %vm2000, %vm2004
  %v2007 = vsel %vm2005, 1.0, 0.0
  %v2008 = vsel %vm2006, 1.0, 0.0
  %vm2009 = vcmp.gt.f32.partialorder %v1871, 0.0
  %vm2010 = vcmp.gt.f32.partialorder %v1872, 0.0
  %v2011 = vsel %vm2009, 1.0, 0.0
  %v2012 = vsel %vm2010, 1.0, 0.0
  %v2013 = vmul.f32 %v2011, %v1977
  %v2014 = vmul.f32 %v2012, %v1977
  %v2015 = vmax.f32 %v2013, %v2007
  %v2016 = vmax.f32 %v2014, %v2008
  %s2017 = sld [smem:[#allocation3 + $0x3]]
  %s2018 = scvt.s32.f32 %s2017
  %s2019 = smul.f32 %s1975, 0.9
  %s2020 = smax.f32 %s2019, %s2018
  %v2021 = vmul.f32 %v1979, 0.9
  %v2022 = vstv %s2018
  %v2023 = vmul.f32 %v2022, %v1556
  %v2024 = vadd.f32 %v2021, %v2023
  %v2025 = vmul.f32 %v2024, %v1556
  %v2026 = vsel %vm1890, %v2025, 0.0
  %2027 = vadd.xlane.f32.xlu0 %v2026
  %v2028 = vpop.xlane.xlu0 %2027
  %v2029 = vrot.slane %v2028, 4
  %v2030 = vadd.f32 %v2028, %v2029
  %v2031 = vrot.slane %v2030, 2
  %v2032 = vadd.f32 %v2030, %v2031
  %v2033 = vrot.slane %v2032, 1
  %v2034 = vadd.f32 %v2032, %v2033
  %s2035 = vtos %v2034
  %s2036 = smul.f32 %s2035, 0.0078125
  %v2037 = vstv %s2020
  %v2038 = vmul.f32 %v1873, %v2037
  %v2039 = vmul.f32 %v1874, %v2037
  %s2040 = smul.f32 %s2036, %s2020
  %v2041 = vstv %s2040
  %v2042 = vadd.f32 %v2038, %v2041
  %v2043 = vadd.f32 %v2039, %v2041
  %vm2044 = vcmp.gt.f32.partialorder %v2042, 0.0
  %vm2045 = vcmp.gt.f32.partialorder %v2043, 0.0
  %p2046 = scmp.gt.f32.partialorder %s2020, 0.0
  %s2047 = scalar_select %p2046, 1, 0
  %v2048 = vstv %s2047
  %vm2049 = vcmp.eq.s32.totalorder %v2048, 1
  %vm2050 = vmand %vm2044, %vm2049
  %vm2051 = vmand %vm2045, %vm2049
  %v2052 = vsel %vm2050, 1.0, 0.0
  %v2053 = vsel %vm2051, 1.0, 0.0
  %vm2054 = vcmp.gt.f32.partialorder %v1873, 0.0
  %vm2055 = vcmp.gt.f32.partialorder %v1874, 0.0
  %v2056 = vsel %vm2054, 1.0, 0.0
  %v2057 = vsel %vm2055, 1.0, 0.0
  %v2058 = vmul.f32 %v2056, %v2022
  %v2059 = vmul.f32 %v2057, %v2022
  %v2060 = vmax.f32 %v2058, %v2052
  %v2061 = vmax.f32 %v2059, %v2053
  %s2062 = sld [smem:[#allocation3 + $0x4]]
  %s2063 = scvt.s32.f32 %s2062
  %s2064 = smul.f32 %s2020, 0.9
  %s2065 = smax.f32 %s2064, %s2063
  %v2066 = vmul.f32 %v2024, 0.9
  %v2067 = vstv %s2063
  %v2068 = vmul.f32 %v2067, %v1563
  %v2069 = vadd.f32 %v2066, %v2068
  %v2070 = vmul.f32 %v2069, %v1563
  %v2071 = vsel %vm1890, %v2070, 0.0
  %2072 = vadd.xlane.f32.xlu0 %v2071
  %v2073 = vpop.xlane.xlu0 %2072
  %v2074 = vrot.slane %v2073, 4
  %v2075 = vadd.f32 %v2073, %v2074
  %v2076 = vrot.slane %v2075, 2
  %v2077 = vadd.f32 %v2075, %v2076
  %v2078 = vrot.slane %v2077, 1
  %v2079 = vadd.f32 %v2077, %v2078
  %s2080 = vtos %v2079
  %s2081 = smul.f32 %s2080, 0.0078125
  %v2082 = vstv %s2065
  %v2083 = vmul.f32 %v1875, %v2082
  %v2084 = vmul.f32 %v1876, %v2082
  %s2085 = smul.f32 %s2081, %s2065
  %v2086 = vstv %s2085
  %v2087 = vadd.f32 %v2083, %v2086
  %v2088 = vadd.f32 %v2084, %v2086
  %vm2089 = vcmp.gt.f32.partialorder %v2087, 0.0
  %vm2090 = vcmp.gt.f32.partialorder %v2088, 0.0
  %p2091 = scmp.gt.f32.partialorder %s2065, 0.0
  %s2092 = scalar_select %p2091, 1, 0
  %v2093 = vstv %s2092
  %vm2094 = vcmp.eq.s32.totalorder %v2093, 1
  %vm2095 = vmand %vm2089, %vm2094
  %vm2096 = vmand %vm2090, %vm2094
  %v2097 = vsel %vm2095, 1.0, 0.0
  %v2098 = vsel %vm2096, 1.0, 0.0
  %vm2099 = vcmp.gt.f32.partialorder %v1875, 0.0
  %vm2100 = vcmp.gt.f32.partialorder %v1876, 0.0
  %v2101 = vsel %vm2099, 1.0, 0.0
  %v2102 = vsel %vm2100, 1.0, 0.0
  %v2103 = vmul.f32 %v2101, %v2067
  %v2104 = vmul.f32 %v2102, %v2067
  %v2105 = vmax.f32 %v2103, %v2097
  %v2106 = vmax.f32 %v2104, %v2098
  %s2107 = sld [smem:[#allocation3 + $0x5]]
  %s2108 = scvt.s32.f32 %s2107
  %s2109 = smul.f32 %s2065, 0.9
  %s2110 = smax.f32 %s2109, %s2108
  %v2111 = vmul.f32 %v2069, 0.9
  %v2112 = vstv %s2108
  %v2113 = vmul.f32 %v2112, %v1570
  %v2114 = vadd.f32 %v2111, %v2113
  %v2115 = vmul.f32 %v2114, %v1570
  %v2116 = vsel %vm1890, %v2115, 0.0
  %2117 = vadd.xlane.f32.xlu0 %v2116
  %v2118 = vpop.xlane.xlu0 %2117
  %v2119 = vrot.slane %v2118, 4
  %v2120 = vadd.f32 %v2118, %v2119
  %v2121 = vrot.slane %v2120, 2
  %v2122 = vadd.f32 %v2120, %v2121
  %v2123 = vrot.slane %v2122, 1
  %v2124 = vadd.f32 %v2122, %v2123
  %s2125 = vtos %v2124
  %s2126 = smul.f32 %s2125, 0.0078125
  %v2127 = vstv %s2110
  %v2128 = vmul.f32 %v1877, %v2127
  %v2129 = vmul.f32 %v1878, %v2127
  %s2130 = smul.f32 %s2126, %s2110
  %v2131 = vstv %s2130
  %v2132 = vadd.f32 %v2128, %v2131
  %v2133 = vadd.f32 %v2129, %v2131
  %vm2134 = vcmp.gt.f32.partialorder %v2132, 0.0
  %vm2135 = vcmp.gt.f32.partialorder %v2133, 0.0
  %p2136 = scmp.gt.f32.partialorder %s2110, 0.0
  %s2137 = scalar_select %p2136, 1, 0
  %v2138 = vstv %s2137
  %vm2139 = vcmp.eq.s32.totalorder %v2138, 1
  %vm2140 = vmand %vm2134, %vm2139
  %vm2141 = vmand %vm2135, %vm2139
  %v2142 = vsel %vm2140, 1.0, 0.0
  %v2143 = vsel %vm2141, 1.0, 0.0
  %vm2144 = vcmp.gt.f32.partialorder %v1877, 0.0
  %vm2145 = vcmp.gt.f32.partialorder %v1878, 0.0
  %v2146 = vsel %vm2144, 1.0, 0.0
  %v2147 = vsel %vm2145, 1.0, 0.0
  %v2148 = vmul.f32 %v2146, %v2112
  %v2149 = vmul.f32 %v2147, %v2112
  %v2150 = vmax.f32 %v2148, %v2142
  %v2151 = vmax.f32 %v2149, %v2143
  %s2152 = sld [smem:[#allocation3 + $0x6]]
  %s2153 = scvt.s32.f32 %s2152
  %s2154 = smul.f32 %s2110, 0.9
  %s2155 = smax.f32 %s2154, %s2153
  %v2156 = vmul.f32 %v2114, 0.9
  %v2157 = vstv %s2153
  %v2158 = vmul.f32 %v2157, %v1577
  %v2159 = vadd.f32 %v2156, %v2158
  %v2160 = vmul.f32 %v2159, %v1577
  %v2161 = vsel %vm1890, %v2160, 0.0
  %2162 = vadd.xlane.f32.xlu0 %v2161
  %v2163 = vpop.xlane.xlu0 %2162
  %v2164 = vrot.slane %v2163, 4
  %v2165 = vadd.f32 %v2163, %v2164
  %v2166 = vrot.slane %v2165, 2
  %v2167 = vadd.f32 %v2165, %v2166
  %v2168 = vrot.slane %v2167, 1
  %v2169 = vadd.f32 %v2167, %v2168
  %s2170 = vtos %v2169
  %s2171 = smul.f32 %s2170, 0.0078125
  %v2172 = vstv %s2155
  %v2173 = vmul.f32 %v1879, %v2172
  %v2174 = vmul.f32 %v1880, %v2172
  %s2175 = smul.f32 %s2171, %s2155
  %v2176 = vstv %s2175
  %v2177 = vadd.f32 %v2173, %v2176
  %v2178 = vadd.f32 %v2174, %v2176
  %vm2179 = vcmp.gt.f32.partialorder %v2177, 0.0
  %vm2180 = vcmp.gt.f32.partialorder %v2178, 0.0
  %p2181 = scmp.gt.f32.partialorder %s2155, 0.0
  %s2182 = scalar_select %p2181, 1, 0
  %v2183 = vstv %s2182
  %vm2184 = vcmp.eq.s32.totalorder %v2183, 1
  %vm2185 = vmand %vm2179, %vm2184
  %vm2186 = vmand %vm2180, %vm2184
  %v2187 = vsel %vm2185, 1.0, 0.0
  %v2188 = vsel %vm2186, 1.0, 0.0
  %vm2189 = vcmp.gt.f32.partialorder %v1879, 0.0
  %vm2190 = vcmp.gt.f32.partialorder %v1880, 0.0
  %v2191 = vsel %vm2189, 1.0, 0.0
  %v2192 = vsel %vm2190, 1.0, 0.0
  %v2193 = vmul.f32 %v2191, %v2157
  %v2194 = vmul.f32 %v2192, %v2157
  %v2195 = vmax.f32 %v2193, %v2187
  %v2196 = vmax.f32 %v2194, %v2188
  %s2197 = sld [smem:[#allocation3 + $0x7]]
  %s2198 = scvt.s32.f32 %s2197
  %s2199 = smul.f32 %s2155, 0.9
  %s2200 = smax.f32 %s2199, %s2198
  %v2201 = vmul.f32 %v2159, 0.9
  %v2202 = vstv %s2198
  %v2203 = vmul.f32 %v2202, %v1584
  %v2204 = vadd.f32 %v2201, %v2203
  %v2205 = vmul.f32 %v2204, %v1584
  %v2206 = vsel %vm1890, %v2205, 0.0
  %2207 = vadd.xlane.f32.xlu0 %v2206
  %v2208 = vpop.xlane.xlu0 %2207
  %v2209 = vrot.slane %v2208, 4
  %v2210 = vadd.f32 %v2208, %v2209
  %v2211 = vrot.slane %v2210, 2
  %v2212 = vadd.f32 %v2210, %v2211
  %v2213 = vrot.slane %v2212, 1
  %v2214 = vadd.f32 %v2212, %v2213
  %s2215 = vtos %v2214
  %s2216 = smul.f32 %s2215, 0.0078125
  %v2217 = vstv %s2200
  %v2218 = vmul.f32 %v1881, %v2217
  %v2219 = vmul.f32 %v1882, %v2217
  %s2220 = smul.f32 %s2216, %s2200
  %v2221 = vstv %s2220
  %v2222 = vadd.f32 %v2218, %v2221
  %v2223 = vadd.f32 %v2219, %v2221
  %vm2224 = vcmp.gt.f32.partialorder %v2222, 0.0
  %vm2225 = vcmp.gt.f32.partialorder %v2223, 0.0
  %p2226 = scmp.gt.f32.partialorder %s2200, 0.0
  %s2227 = scalar_select %p2226, 1, 0
  %v2228 = vstv %s2227
  %vm2229 = vcmp.eq.s32.totalorder %v2228, 1
  %vm2230 = vmand %vm2224, %vm2229
  %vm2231 = vmand %vm2225, %vm2229
  %v2232 = vsel %vm2230, 1.0, 0.0
  %v2233 = vsel %vm2231, 1.0, 0.0
  %vm2234 = vcmp.gt.f32.partialorder %v1881, 0.0
  %vm2235 = vcmp.gt.f32.partialorder %v1882, 0.0
  %v2236 = vsel %vm2234, 1.0, 0.0
  %v2237 = vsel %vm2235, 1.0, 0.0
  %v2238 = vmul.f32 %v2236, %v2202
  %v2239 = vmul.f32 %v2237, %v2202
  %v2240 = vmax.f32 %v2238, %v2232
  %v2241 = vmax.f32 %v2239, %v2233
  %s2242 = smax.f32 %s2198, 0.0
  %v2243 = vadd.f32 %v2203, 0.0
  %v2244 = vmul.f32 %v2243, %v1584
  %v2245 = vsel %vm1890, %v2244, 0.0
  %2246 = vadd.xlane.f32.xlu0 %v2245
  %v2247 = vpop.xlane.xlu0 %2246
  %v2248 = vrot.slane %v2247, 4
  %v2249 = vadd.f32 %v2247, %v2248
  %v2250 = vrot.slane %v2249, 2
  %v2251 = vadd.f32 %v2249, %v2250
  %v2252 = vrot.slane %v2251, 1
  %v2253 = vadd.f32 %v2251, %v2252
  %s2254 = vtos %v2253
  %s2255 = smul.f32 %s2254, 0.0078125
  %v2256 = vstv %s2242
  %v2257 = vmul.f32 %v1881, %v2256
  %v2258 = vmul.f32 %v1882, %v2256
  %s2259 = smul.f32 %s2255, %s2242
  %v2260 = vstv %s2259
  %v2261 = vadd.f32 %v2257, %v2260
  %v2262 = vadd.f32 %v2258, %v2260
  %vm2263 = vcmp.gt.f32.partialorder %v2261, 0.0
  %vm2264 = vcmp.gt.f32.partialorder %v2262, 0.0
  %p2265 = scmp.gt.f32.partialorder %s2242, 0.0
  %s2266 = scalar_select %p2265, 1, 0
  %v2267 = vstv %s2266
  %vm2268 = vcmp.eq.s32.totalorder %v2267, 1
  %vm2269 = vmand %vm2263, %vm2268
  %vm2270 = vmand %vm2264, %vm2268
  %v2271 = vsel %vm2269, 1.0, 0.0
  %v2272 = vsel %vm2270, 1.0, 0.0
  %v2273 = vmax.f32 %v2240, %v2271
  %v2274 = vmax.f32 %v2241, %v2272
  %v2277 = vcombine.low %v2273, %v2274
  %v2279 = vunpack.c.l.s4 1966171168
  %v2280 = vunpack.c.0.s8 %v2279
  %v2281 = vlaneseq
  %v2282 = vshrl.u32 %v2281, 7
  %v2283 = vsub.s32 %v2280, %v2282
  %v2284 = vrot.slane %v2277, %v2283
  %v2286 = vunpack.c.l.s4 1966171168
  %v2287 = vunpack.c.0.s8 %v2286
  %v2288 = vlaneseq
  %v2289 = vshrl.u32 %v2288, 7
  %v2290 = vsub.s32 %v2287, %v2289
  %v2291 = vrot.slane %v2284, %v2290
  %v2293 = vlaneseq
  %vm2294 = vcmp.ge.s32.totalorder %v2293, 0
  %vm2295 = vcmp.lt.s32.totalorder %v2293, 256
  %vm2296 = vmand %vm2294, %vm2295
  %s2297 = scalar_lea.vmem %s6, 7
  %2298 = vst.msk [vmem:[%s2297] ss:$8 sm:$0x3] %vm2296, %v2291
  %2299 = vst.msk [vmem:[%s2297] ss:$8 sm:$0x0] %vm2296, %v2291
  %s2300 = sld [smem:[#allocation3 + $0x6]]
  %s2301 = scvt.s32.f32 %s2300
  %s2302 = smul.f32 %s2242, 0.9
  %s2303 = smax.f32 %s2302, %s2301
  %v2304 = vmul.f32 %v2243, 0.9
  %v2305 = vstv %s2301
  %v2306 = vmul.f32 %v2305, %v1577
  %v2307 = vadd.f32 %v2304, %v2306
  %v2308 = vmul.f32 %v2307, %v1577
  %v2309 = vsel %vm1890, %v2308, 0.0
  %2310 = vadd.xlane.f32.xlu0 %v2309
  %v2311 = vpop.xlane.xlu0 %2310
  %v2312 = vrot.slane %v2311, 4
  %v2313 = vadd.f32 %v2311, %v2312
  %v2314 = vrot.slane %v2313, 2
  %v2315 = vadd.f32 %v2313, %v2314
  %v2316 = vrot.slane %v2315, 1
  %v2317 = vadd.f32 %v2315, %v2316
  %s2318 = vtos %v2317
  %s2319 = smul.f32 %s2318, 0.0078125
  %v2320 = vstv %s2303
  %v2321 = vmul.f32 %v1879, %v2320
  %v2322 = vmul.f32 %v1880, %v2320
  %s2323 = smul.f32 %s2319, %s2303
  %v2324 = vstv %s2323
  %v2325 = vadd.f32 %v2321, %v2324
  %v2326 = vadd.f32 %v2322, %v2324
  %vm2327 = vcmp.gt.f32.partialorder %v2325, 0.0
  %vm2328 = vcmp.gt.f32.partialorder %v2326, 0.0
  %p2329 = scmp.gt.f32.partialorder %s2303, 0.0
  %s2330 = scalar_select %p2329, 1, 0
  %v2331 = vstv %s2330
  %vm2332 = vcmp.eq.s32.totalorder %v2331, 1
  %vm2333 = vmand %vm2327, %vm2332
  %vm2334 = vmand %vm2328, %vm2332
  %v2335 = vsel %vm2333, 1.0, 0.0
  %v2336 = vsel %vm2334, 1.0, 0.0
  %v2337 = vmax.f32 %v2195, %v2335
  %v2338 = vmax.f32 %v2196, %v2336
  %v2341 = vcombine.low %v2337, %v2338
  %v2343 = vunpack.c.l.s4 1966171168
  %v2344 = vunpack.c.0.s8 %v2343
  %v2345 = vlaneseq
  %v2346 = vshrl.u32 %v2345, 7
  %v2347 = vsub.s32 %v2344, %v2346
  %v2348 = vrot.slane %v2341, %v2347
  %v2350 = vunpack.c.l.s4 1966171168
  %v2351 = vunpack.c.0.s8 %v2350
  %v2352 = vlaneseq
  %v2353 = vshrl.u32 %v2352, 7
  %v2354 = vsub.s32 %v2351, %v2353
  %v2355 = vrot.slane %v2348, %v2354
  %s2357 = scalar_lea.vmem %s6, 6
  %2358 = vst.msk [vmem:[%s2357] ss:$8 sm:$0x3] %vm2296, %v2355
  %2359 = vst.msk [vmem:[%s2357] ss:$8 sm:$0x0] %vm2296, %v2355
  %s2360 = sld [smem:[#allocation3 + $0x5]]
  %s2361 = scvt.s32.f32 %s2360
  %s2362 = smul.f32 %s2303, 0.9
  %s2363 = smax.f32 %s2362, %s2361
  %v2364 = vmul.f32 %v2307, 0.9
  %v2365 = vstv %s2361
  %v2366 = vmul.f32 %v2365, %v1570
  %v2367 = vadd.f32 %v2364, %v2366
  %v2368 = vmul.f32 %v2367, %v1570
  %v2369 = vsel %vm1890, %v2368, 0.0
  %2370 = vadd.xlane.f32.xlu0 %v2369
  %v2371 = vpop.xlane.xlu0 %2370
  %v2372 = vrot.slane %v2371, 4
  %v2373 = vadd.f32 %v2371, %v2372
  %v2374 = vrot.slane %v2373, 2
  %v2375 = vadd.f32 %v2373, %v2374
  %v2376 = vrot.slane %v2375, 1
  %v2377 = vadd.f32 %v2375, %v2376
  %s2378 = vtos %v2377
  %s2379 = smul.f32 %s2378, 0.0078125
  %v2380 = vstv %s2363
  %v2381 = vmul.f32 %v1877, %v2380
  %v2382 = vmul.f32 %v1878, %v2380
  %s2383 = smul.f32 %s2379, %s2363
  %v2384 = vstv %s2383
  %v2385 = vadd.f32 %v2381, %v2384
  %v2386 = vadd.f32 %v2382, %v2384
  %vm2387 = vcmp.gt.f32.partialorder %v2385, 0.0
  %vm2388 = vcmp.gt.f32.partialorder %v2386, 0.0
  %p2389 = scmp.gt.f32.partialorder %s2363, 0.0
  %s2390 = scalar_select %p2389, 1, 0
  %v2391 = vstv %s2390
  %vm2392 = vcmp.eq.s32.totalorder %v2391, 1
  %vm2393 = vmand %vm2387, %vm2392
  %vm2394 = vmand %vm2388, %vm2392
  %v2395 = vsel %vm2393, 1.0, 0.0
  %v2396 = vsel %vm2394, 1.0, 0.0
  %v2397 = vmax.f32 %v2150, %v2395
  %v2398 = vmax.f32 %v2151, %v2396
  %v2401 = vcombine.low %v2397, %v2398
  %v2403 = vunpack.c.l.s4 1966171168
  %v2404 = vunpack.c.0.s8 %v2403
  %v2405 = vlaneseq
  %v2406 = vshrl.u32 %v2405, 7
  %v2407 = vsub.s32 %v2404, %v2406
  %v2408 = vrot.slane %v2401, %v2407
  %v2410 = vunpack.c.l.s4 1966171168
  %v2411 = vunpack.c.0.s8 %v2410
  %v2412 = vlaneseq
  %v2413 = vshrl.u32 %v2412, 7
  %v2414 = vsub.s32 %v2411, %v2413
  %v2415 = vrot.slane %v2408, %v2414
  %s2417 = scalar_lea.vmem %s6, 5
  %2418 = vst.msk [vmem:[%s2417] ss:$8 sm:$0x3] %vm2296, %v2415
  %2419 = vst.msk [vmem:[%s2417] ss:$8 sm:$0x0] %vm2296, %v2415
  %s2420 = sld [smem:[#allocation3 + $0x4]]
  %s2421 = scvt.s32.f32 %s2420
  %s2422 = smul.f32 %s2363, 0.9
  %s2423 = smax.f32 %s2422, %s2421
  %v2424 = vmul.f32 %v2367, 0.9
  %v2425 = vstv %s2421
  %v2426 = vmul.f32 %v2425, %v1563
  %v2427 = vadd.f32 %v2424, %v2426
  %v2428 = vmul.f32 %v2427, %v1563
  %v2429 = vsel %vm1890, %v2428, 0.0
  %2430 = vadd.xlane.f32.xlu0 %v2429
  %v2431 = vpop.xlane.xlu0 %2430
  %v2432 = vrot.slane %v2431, 4
  %v2433 = vadd.f32 %v2431, %v2432
  %v2434 = vrot.slane %v2433, 2
  %v2435 = vadd.f32 %v2433, %v2434
  %v2436 = vrot.slane %v2435, 1
  %v2437 = vadd.f32 %v2435, %v2436
  %s2438 = vtos %v2437
  %s2439 = smul.f32 %s2438, 0.0078125
  %v2440 = vstv %s2423
  %v2441 = vmul.f32 %v1875, %v2440
  %v2442 = vmul.f32 %v1876, %v2440
  %s2443 = smul.f32 %s2439, %s2423
  %v2444 = vstv %s2443
  %v2445 = vadd.f32 %v2441, %v2444
  %v2446 = vadd.f32 %v2442, %v2444
  %vm2447 = vcmp.gt.f32.partialorder %v2445, 0.0
  %vm2448 = vcmp.gt.f32.partialorder %v2446, 0.0
  %p2449 = scmp.gt.f32.partialorder %s2423, 0.0
  %s2450 = scalar_select %p2449, 1, 0
  %v2451 = vstv %s2450
  %vm2452 = vcmp.eq.s32.totalorder %v2451, 1
  %vm2453 = vmand %vm2447, %vm2452
  %vm2454 = vmand %vm2448, %vm2452
  %v2455 = vsel %vm2453, 1.0, 0.0
  %v2456 = vsel %vm2454, 1.0, 0.0
  %v2457 = vmax.f32 %v2105, %v2455
  %v2458 = vmax.f32 %v2106, %v2456
  %v2461 = vcombine.low %v2457, %v2458
  %v2463 = vunpack.c.l.s4 1966171168
  %v2464 = vunpack.c.0.s8 %v2463
  %v2465 = vlaneseq
  %v2466 = vshrl.u32 %v2465, 7
  %v2467 = vsub.s32 %v2464, %v2466
  %v2468 = vrot.slane %v2461, %v2467
  %v2470 = vunpack.c.l.s4 1966171168
  %v2471 = vunpack.c.0.s8 %v2470
  %v2472 = vlaneseq
  %v2473 = vshrl.u32 %v2472, 7
  %v2474 = vsub.s32 %v2471, %v2473
  %v2475 = vrot.slane %v2468, %v2474
  %s2477 = scalar_lea.vmem %s6, 4
  %2478 = vst.msk [vmem:[%s2477] ss:$8 sm:$0x3] %vm2296, %v2475
  %2479 = vst.msk [vmem:[%s2477] ss:$8 sm:$0x0] %vm2296, %v2475
  %s2480 = sld [smem:[#allocation3 + $0x3]]
  %s2481 = scvt.s32.f32 %s2480
  %s2482 = smul.f32 %s2423, 0.9
  %s2483 = smax.f32 %s2482, %s2481
  %v2484 = vmul.f32 %v2427, 0.9
  %v2485 = vstv %s2481
  %v2486 = vmul.f32 %v2485, %v1556
  %v2487 = vadd.f32 %v2484, %v2486
  %v2488 = vmul.f32 %v2487, %v1556
  %v2489 = vsel %vm1890, %v2488, 0.0
  %2490 = vadd.xlane.f32.xlu0 %v2489
  %v2491 = vpop.xlane.xlu0 %2490
  %v2492 = vrot.slane %v2491, 4
  %v2493 = vadd.f32 %v2491, %v2492
  %v2494 = vrot.slane %v2493, 2
  %v2495 = vadd.f32 %v2493, %v2494
  %v2496 = vrot.slane %v2495, 1
  %v2497 = vadd.f32 %v2495, %v2496
  %s2498 = vtos %v2497
  %s2499 = smul.f32 %s2498, 0.0078125
  %v2500 = vstv %s2483
  %v2501 = vmul.f32 %v1873, %v2500
  %v2502 = vmul.f32 %v1874, %v2500
  %s2503 = smul.f32 %s2499, %s2483
  %v2504 = vstv %s2503
  %v2505 = vadd.f32 %v2501, %v2504
  %v2506 = vadd.f32 %v2502, %v2504
  %vm2507 = vcmp.gt.f32.partialorder %v2505, 0.0
  %vm2508 = vcmp.gt.f32.partialorder %v2506, 0.0
  %p2509 = scmp.gt.f32.partialorder %s2483, 0.0
  %s2510 = scalar_select %p2509, 1, 0
  %v2511 = vstv %s2510
  %vm2512 = vcmp.eq.s32.totalorder %v2511, 1
  %vm2513 = vmand %vm2507, %vm2512
  %vm2514 = vmand %vm2508, %vm2512
  %v2515 = vsel %vm2513, 1.0, 0.0
  %v2516 = vsel %vm2514, 1.0, 0.0
  %v2517 = vmax.f32 %v2060, %v2515
  %v2518 = vmax.f32 %v2061, %v2516
  %v2521 = vcombine.low %v2517, %v2518
  %v2523 = vunpack.c.l.s4 1966171168
  %v2524 = vunpack.c.0.s8 %v2523
  %v2525 = vlaneseq
  %v2526 = vshrl.u32 %v2525, 7
  %v2527 = vsub.s32 %v2524, %v2526
  %v2528 = vrot.slane %v2521, %v2527
  %v2530 = vunpack.c.l.s4 1966171168
  %v2531 = vunpack.c.0.s8 %v2530
  %v2532 = vlaneseq
  %v2533 = vshrl.u32 %v2532, 7
  %v2534 = vsub.s32 %v2531, %v2533
  %v2535 = vrot.slane %v2528, %v2534
  %s2537 = scalar_lea.vmem %s6, 3
  %2538 = vst.msk [vmem:[%s2537] ss:$8 sm:$0x3] %vm2296, %v2535
  %2539 = vst.msk [vmem:[%s2537] ss:$8 sm:$0x0] %vm2296, %v2535
  %s2540 = sld [smem:[#allocation3 + $0x2]]
  %s2541 = scvt.s32.f32 %s2540
  %s2542 = smul.f32 %s2483, 0.9
  %s2543 = smax.f32 %s2542, %s2541
  %v2544 = vmul.f32 %v2487, 0.9
  %v2545 = vstv %s2541
  %v2546 = vmul.f32 %v2545, %v1549
  %v2547 = vadd.f32 %v2544, %v2546
  %v2548 = vmul.f32 %v2547, %v1549
  %v2549 = vsel %vm1890, %v2548, 0.0
  %2550 = vadd.xlane.f32.xlu0 %v2549
  %v2551 = vpop.xlane.xlu0 %2550
  %v2552 = vrot.slane %v2551, 4
  %v2553 = vadd.f32 %v2551, %v2552
  %v2554 = vrot.slane %v2553, 2
  %v2555 = vadd.f32 %v2553, %v2554
  %v2556 = vrot.slane %v2555, 1
  %v2557 = vadd.f32 %v2555, %v2556
  %s2558 = vtos %v2557
  %s2559 = smul.f32 %s2558, 0.0078125
  %v2560 = vstv %s2543
  %v2561 = vmul.f32 %v1871, %v2560
  %v2562 = vmul.f32 %v1872, %v2560
  %s2563 = smul.f32 %s2559, %s2543
  %v2564 = vstv %s2563
  %v2565 = vadd.f32 %v2561, %v2564
  %v2566 = vadd.f32 %v2562, %v2564
  %vm2567 = vcmp.gt.f32.partialorder %v2565, 0.0
  %vm2568 = vcmp.gt.f32.partialorder %v2566, 0.0
  %p2569 = scmp.gt.f32.partialorder %s2543, 0.0
  %s2570 = scalar_select %p2569, 1, 0
  %v2571 = vstv %s2570
  %vm2572 = vcmp.eq.s32.totalorder %v2571, 1
  %vm2573 = vmand %vm2567, %vm2572
  %vm2574 = vmand %vm2568, %vm2572
  %v2575 = vsel %vm2573, 1.0, 0.0
  %v2576 = vsel %vm2574, 1.0, 0.0
  %v2577 = vmax.f32 %v2015, %v2575
  %v2578 = vmax.f32 %v2016, %v2576
  %v2581 = vcombine.low %v2577, %v2578
  %v2583 = vunpack.c.l.s4 1966171168
  %v2584 = vunpack.c.0.s8 %v2583
  %v2585 = vlaneseq
  %v2586 = vshrl.u32 %v2585, 7
  %v2587 = vsub.s32 %v2584, %v2586
  %v2588 = vrot.slane %v2581, %v2587
  %v2590 = vunpack.c.l.s4 1966171168
  %v2591 = vunpack.c.0.s8 %v2590
  %v2592 = vlaneseq
  %v2593 = vshrl.u32 %v2592, 7
  %v2594 = vsub.s32 %v2591, %v2593
  %v2595 = vrot.slane %v2588, %v2594
  %s2597 = scalar_lea.vmem %s6, 2
  %2598 = vst.msk [vmem:[%s2597] ss:$8 sm:$0x3] %vm2296, %v2595
  %2599 = vst.msk [vmem:[%s2597] ss:$8 sm:$0x0] %vm2296, %v2595
  %s2600 = sld [smem:[#allocation3 + $0x1]]
  %s2601 = scvt.s32.f32 %s2600
  %s2602 = smul.f32 %s2543, 0.9
  %s2603 = smax.f32 %s2602, %s2601
  %v2604 = vmul.f32 %v2547, 0.9
  %v2605 = vstv %s2601
  %v2606 = vmul.f32 %v2605, %v1542
  %v2607 = vadd.f32 %v2604, %v2606
  %v2608 = vmul.f32 %v2607, %v1542
  %v2609 = vsel %vm1890, %v2608, 0.0
  %2610 = vadd.xlane.f32.xlu0 %v2609
  %v2611 = vpop.xlane.xlu0 %2610
  %v2612 = vrot.slane %v2611, 4
  %v2613 = vadd.f32 %v2611, %v2612
  %v2614 = vrot.slane %v2613, 2
  %v2615 = vadd.f32 %v2613, %v2614
  %v2616 = vrot.slane %v2615, 1
  %v2617 = vadd.f32 %v2615, %v2616
  %s2618 = vtos %v2617
  %s2619 = smul.f32 %s2618, 0.0078125
  %v2620 = vstv %s2603
  %v2621 = vmul.f32 %v1869, %v2620
  %v2622 = vmul.f32 %v1870, %v2620
  %s2623 = smul.f32 %s2619, %s2603
  %v2624 = vstv %s2623
  %v2625 = vadd.f32 %v2621, %v2624
  %v2626 = vadd.f32 %v2622, %v2624
  %vm2627 = vcmp.gt.f32.partialorder %v2625, 0.0
  %vm2628 = vcmp.gt.f32.partialorder %v2626, 0.0
  %p2629 = scmp.gt.f32.partialorder %s2603, 0.0
  %s2630 = scalar_select %p2629, 1, 0
  %v2631 = vstv %s2630
  %vm2632 = vcmp.eq.s32.totalorder %v2631, 1
  %vm2633 = vmand %vm2627, %vm2632
  %vm2634 = vmand %vm2628, %vm2632
  %v2635 = vsel %vm2633, 1.0, 0.0
  %v2636 = vsel %vm2634, 1.0, 0.0
  %v2637 = vmax.f32 %v1970, %v2635
  %v2638 = vmax.f32 %v1971, %v2636
  %v2641 = vcombine.low %v2637, %v2638
  %v2643 = vunpack.c.l.s4 1966171168
  %v2644 = vunpack.c.0.s8 %v2643
  %v2645 = vlaneseq
  %v2646 = vshrl.u32 %v2645, 7
  %v2647 = vsub.s32 %v2644, %v2646
  %v2648 = vrot.slane %v2641, %v2647
  %v2650 = vunpack.c.l.s4 1966171168
  %v2651 = vunpack.c.0.s8 %v2650
  %v2652 = vlaneseq
  %v2653 = vshrl.u32 %v2652, 7
  %v2654 = vsub.s32 %v2651, %v2653
  %v2655 = vrot.slane %v2648, %v2654
  %s2657 = scalar_lea.vmem %s6, 1
  %2658 = vst.msk [vmem:[%s2657] ss:$8 sm:$0x3] %vm2296, %v2655
  %2659 = vst.msk [vmem:[%s2657] ss:$8 sm:$0x0] %vm2296, %v2655
  %s2660 = sld [smem:[#allocation3]]
  %s2661 = scvt.s32.f32 %s2660
  %s2662 = smul.f32 %s2603, 0.9
  %s2663 = smax.f32 %s2662, %s2661
  %v2664 = vmul.f32 %v2607, 0.9
  %v2665 = vstv %s2661
  %v2666 = vmul.f32 %v2665, %v1535
  %v2667 = vadd.f32 %v2664, %v2666
  %v2668 = vmul.f32 %v2667, %v1535
  %v2669 = vsel %vm1890, %v2668, 0.0
  %2670 = vadd.xlane.f32.xlu0 %v2669
  %v2671 = vpop.xlane.xlu0 %2670
  %v2672 = vrot.slane %v2671, 4
  %v2673 = vadd.f32 %v2671, %v2672
  %v2674 = vrot.slane %v2673, 2
  %v2675 = vadd.f32 %v2673, %v2674
  %v2676 = vrot.slane %v2675, 1
  %v2677 = vadd.f32 %v2675, %v2676
  %s2678 = vtos %v2677
  %s2679 = smul.f32 %s2678, 0.0078125
  %v2680 = vstv %s2663
  %v2681 = vmul.f32 %v1867, %v2680
  %v2682 = vmul.f32 %v1868, %v2680
  %s2683 = smul.f32 %s2679, %s2663
  %v2684 = vstv %s2683
  %v2685 = vadd.f32 %v2681, %v2684
  %v2686 = vadd.f32 %v2682, %v2684
  %vm2687 = vcmp.gt.f32.partialorder %v2685, 0.0
  %vm2688 = vcmp.gt.f32.partialorder %v2686, 0.0
  %p2689 = scmp.gt.f32.partialorder %s2663, 0.0
  %s2690 = scalar_select %p2689, 1, 0
  %v2691 = vstv %s2690
  %vm2692 = vcmp.eq.s32.totalorder %v2691, 1
  %vm2693 = vmand %vm2687, %vm2692
  %vm2694 = vmand %vm2688, %vm2692
  %v2695 = vsel %vm2693, 1.0, 0.0
  %v2696 = vsel %vm2694, 1.0, 0.0
  %v2697 = vmax.f32 %v1925, %v2695
  %v2698 = vmax.f32 %v1926, %v2696
  %v2701 = vcombine.low %v2697, %v2698
  %v2703 = vunpack.c.l.s4 1966171168
  %v2704 = vunpack.c.0.s8 %v2703
  %v2705 = vlaneseq
  %v2706 = vshrl.u32 %v2705, 7
  %v2707 = vsub.s32 %v2704, %v2706
  %v2708 = vrot.slane %v2701, %v2707
  %v2710 = vunpack.c.l.s4 1966171168
  %v2711 = vunpack.c.0.s8 %v2710
  %v2712 = vlaneseq
  %v2713 = vshrl.u32 %v2712, 7
  %v2714 = vsub.s32 %v2711, %v2713
  %v2715 = vrot.slane %v2708, %v2714
  %2717 = vst.msk [vmem:[%s6] ss:$8 sm:$0x3] %vm2296, %v2715
  %2718 = vst.msk [vmem:[%s6] ss:$8 sm:$0x0] %vm2296, %v2715
  // Predicated region
  $region22: #{_run_volume.1} parent=0 // pred_check
    _
  $region23: #{_run_volume.1} parent=0 // pred_check_branch
    %2720 = sbr.rel (0) target = $region25
  $region24: #{_run_volume.1} parent=0 // pred_region
    _
  $region25: #{_run_volume.1} parent=0 // pred_fallthru
    _
  // Predicated region
  $region26: #{_run_volume.1} parent=0 // pred_check
    _
  $region27: #{_run_volume.1} parent=0 // pred_check_branch
    %2722 = sbr.rel (0) target = $region29
  $region28: #{_run_volume.1} parent=0 // pred_region
    _
  $region29: #{_run_volume.1} parent=0 // pred_fallthru
    _

</llo_original>
